<compile_context>
chip_gen: v6e
topology: v6e:2x2x1
jax: 0.10.0
libtpu: 0.0.40
codegen_flags: <defaults>
</compile_context>

<pallas_src>
from functools import partial

import jax
import jax.numpy as jnp
from jax import lax
from jax.experimental import pallas as pl
from jax.experimental.pallas import tpu as pltpu

BN_EPS = 1e-5


# --------------------------------------------------------------------- fused kernel


def _fused_ir_kernel(H, W, Cin, Chid, Cout, stride, So, Wo, Krows, Wp,
                     has_expand, use_res):
    """One grid step = one (image, row-strip): expand -> depthwise -> project."""

    def kernel(*refs):
        if has_expand:
            (x_ref, w1_ref, b1_ref, wdw_ref, bdw_ref, w2_ref, b2_ref,
             o_ref, hp_ref) = refs
        else:
            x_ref, wdw_ref, bdw_ref, w2_ref, b2_ref, o_ref, hp_ref = refs

        s = pl.program_id(1)
        # first padded-H row this strip needs (strip offset in the padded input)
        row0 = pl.multiple_of(s * (So * stride), So * stride)

        # ---- expand: 1x1 conv on the MXU (bf16 in, f32 acc) + bias + ReLU6,
        #      computed for the strip rows *including* the 1-row halo.
        xs = x_ref[pl.ds(row0, Krows), :, :]                      # (Krows, W, Cin) bf16
        if has_expand:
            h = jnp.dot(xs.reshape(Krows * W, Cin), w1_ref[...],
                        preferred_element_type=jnp.float32)
            h = jnp.clip(h + b1_ref[...], 0.0, 6.0).reshape(Krows, W, Chid)
        else:
            h = xs                                                # Chid == Cin

        # ---- zero the hidden halo rows at the TRUE image boundary (mask, not
        #      a scratch memset; never gated on program_id -> megacore-safe).
        ph = row0 + lax.broadcasted_iota(jnp.int32, (Krows, 1, 1), 0)
        valid = jnp.logical_and(ph >= 1, ph <= H)
        h = jnp.where(valid, h, 0.0).astype(jnp.bfloat16)

        # ---- W halo built in-register -> one aligned full-width scratch store.
        parts = [jnp.zeros((Krows, 1, Chid), jnp.bfloat16), h]
        wr = Wp - 1 - W
        if wr > 0:
            parts.append(jnp.zeros((Krows, wr, Chid), jnp.bfloat16))
        hp_ref[...] = jnp.concatenate(parts, axis=1)              # (Krows, Wp, Chid) bf16

        # ---- depthwise 3x3: 9 shift taps on the VPU, stride folded into reads.
        wdw = wdw_ref[...]                                        # (9, Chid) f32, hoisted
        bdw = bdw_ref[...]                                        # (1, Chid)
        acc = jnp.zeros((So, Wo, Chid), jnp.float32)
        for dy in range(3):
            for dx in range(3):
                if stride == 1:
                    patch = hp_ref[dy:dy + So, dx:dx + Wo, :]
                else:
                    patch = hp_ref[pl.ds(dy, So, stride=stride),
                                   pl.ds(dx, Wo, stride=stride), :]
                acc = acc + patch * wdw[3 * dy + dx]              # bf16 * f32 -> f32
        y = jnp.clip(acc + bdw, 0.0, 6.0)

        # ---- project: 1x1 conv on the MXU (bf16 in, f32 acc) + bias [+ residual]
        out = jnp.dot(y.reshape(So * Wo, Chid).astype(jnp.bfloat16), w2_ref[...],
                      preferred_element_type=jnp.float32)
        out = out + b2_ref[...]
        if use_res:                                               # stride==1, Cin==Cout
            xr = x_ref[pl.ds(row0 + 1, So), :, :]                 # load at point of use
            out = out + xr.astype(jnp.float32).reshape(So * Wo, Cin)
        o_ref[...] = out.reshape(So, Wo, Cout).astype(o_ref.dtype)

    return kernel


def inverted_residual_forward(x_nchw, kparams, strip_rows=8):
    """Matches PyTorch InvertedResidual.forward (inference-mode BatchNorm)."""
    stride = kparams['stride']
    has_expand = kparams['has_expand']
    use_res = kparams['use_res']

    # TODO(synk): keep the whole backbone NHWC so these transposes leave the hot path.
    x = jnp.transpose(x_nchw, (0, 2, 3, 1)).astype(jnp.bfloat16)   # NCHW -> NHWC, bf16
    N, H, W, Cin = x.shape
    Chid = kparams['wdw'].shape[1]
    Cout = kparams['w2'].shape[1]
    Ho = (H - 1) // stride + 1
    Wo = (W - 1) // stride + 1

    So = min(strip_rows, Ho)               # output rows per strip (tune up for big W)
    S = -(-Ho // So)                       # number of row strips
    Krows = (So - 1) * stride + 3          # padded-hidden rows one strip needs
    Wp = (Wo - 1) * stride + 3             # padded-hidden width
    Hp = (S - 1) * So * stride + Krows     # padded input height (all strip slices in-bounds)

    # Zero-pad along H only (halo room for the small Cin input; the hidden-domain
    # boundary zeros are enforced in-kernel by the row mask). W halo is in-kernel.
    x_pad = jnp.pad(x, ((0, 0), (1, Hp - H - 1), (0, 0), (0, 0)))

    inputs = [x_pad]
    in_specs = [pl.BlockSpec((None, Hp, W, Cin), lambda n, s: (n, 0, 0, 0))]
    if has_expand:
        inputs += [kparams['w1'], kparams['b1']]
        in_specs += [pl.BlockSpec((Cin, Chid), lambda n, s: (0, 0)),
                     pl.BlockSpec((1, Chid), lambda n, s: (0, 0))]
    inputs += [kparams['wdw'], kparams['bdw'], kparams['w2'], kparams['b2']]
    in_specs += [pl.BlockSpec((9, Chid), lambda n, s: (0, 0)),
                 pl.BlockSpec((1, Chid), lambda n, s: (0, 0)),
                 pl.BlockSpec((Chid, Cout), lambda n, s: (0, 0)),
                 pl.BlockSpec((1, Cout), lambda n, s: (0, 0))]

    flops = N * ((2 * H * W * Cin * Chid if has_expand else 0)
                 + 18 * Ho * Wo * Chid
                 + 2 * Ho * Wo * Chid * Cout
                 + (Ho * Wo * Cout if use_res else 0))
    weight_bytes = sum(int(v.size) * v.dtype.itemsize
                       for v in kparams.values() if hasattr(v, 'dtype'))
    bytes_accessed = int(x_pad.size) * 2 + N * Ho * Wo * Cout * 4 + weight_bytes

    out = pl.pallas_call(
        _fused_ir_kernel(H, W, Cin, Chid, Cout, stride, So, Wo, Krows, Wp,
                         has_expand, use_res),
        out_shape=jax.ShapeDtypeStruct((N, Ho, Wo, Cout), jnp.float32),
        grid=(N, S),
        in_specs=in_specs,
        out_specs=pl.BlockSpec((None, So, Wo, Cout), lambda n, s: (n, s, 0, 0)),
        scratch_shapes=[pltpu.VMEM((Krows, Wp, Chid), jnp.bfloat16)],
        compiler_params=pltpu.CompilerParams(
            dimension_semantics=("parallel", "arbitrary"),
            vmem_limit_bytes=32 * 1024 * 1024),   # explicit budget, portable to v7x
        cost_estimate=pl.CostEstimate(flops=flops, transcendentals=0,
                                      bytes_accessed=bytes_accessed),
    )(*inputs)
    return jnp.transpose(out, (0, 3, 1, 2))                        # NHWC -> NCHW


# --------------------------------------------------------------- params & reference


def init_inverted_residual(key, inp, oup, stride, expand_ratio):
    """Raw PyTorch-style parameters: conv weights + BatchNorm affine/running stats."""
    assert stride in (1, 2)
    hidden = int(round(inp * expand_ratio))
    keys = iter(jax.random.split(key, 16))

    def conv_w(shape, fan):
        return jax.random.normal(next(keys), shape, jnp.float32) * (2.0 / fan) ** 0.5

    def bn(c):
        return {
            'gamma': jax.random.uniform(next(keys), (c,), jnp.float32, 0.8, 1.2),
            'beta':  jax.random.normal(next(keys), (c,), jnp.float32) * 0.01,
            'mean':  jax.random.normal(next(keys), (c,), jnp.float32) * 0.01,
            'var':   jax.random.uniform(next(keys), (c,), jnp.float32, 0.5, 1.5),
        }

    raw = {'inp': inp, 'oup': oup, 'stride': stride,
           'expand_ratio': expand_ratio, 'hidden': hidden}
    if expand_ratio != 1:
        raw['w1'] = conv_w((inp, hidden), hidden)          # 1x1 expand  (Cin, Chid)
        raw['bn1'] = bn(hidden)
    raw['wdw'] = conv_w((3, 3, hidden), 9 * hidden)        # 3x3 depthwise (3,3,C)
    raw['bndw'] = bn(hidden)
    raw['w2'] = conv_w((hidden, oup), oup)                 # 1x1 project (Chid, Cout)
    raw['bn2'] = bn(oup)
    return raw


def fold_for_kernel(raw):
    """Fold BN scale into conv weights (exact) and pre-cast MXU operands to bf16."""
    def fold(p):
        scale = p['gamma'] / jnp.sqrt(p['var'] + BN_EPS)
        return scale, p['beta'] - p['mean'] * scale

    inp, oup = raw['inp'], raw['oup']
    stride, t, hidden = raw['stride'], raw['expand_ratio'], raw['hidden']
    kp = {'stride': stride, 'has_expand': t != 1,
          'use_res': stride == 1 and inp == oup}
    if t != 1:
        s1, b1 = fold(raw['bn1'])
        kp['w1'] = (raw['w1'] * s1[None, :]).astype(jnp.bfloat16)
        kp['b1'] = b1.reshape(1, hidden)
    sdw, bdw = fold(raw['bndw'])
    kp['wdw'] = (raw['wdw'] * sdw[None, None, :]).reshape(9, hidden)   # f32 (VPU path)
    kp['bdw'] = bdw.reshape(1, hidden)
    s2, b2 = fold(raw['bn2'])
    kp['w2'] = (raw['w2'] * s2[None, :]).astype(jnp.bfloat16)
    kp['b2'] = b2.reshape(1, oup)
    return kp


def inverted_residual_reference(x_nchw, raw):
    """Pure-XLA reference with the exact PyTorch semantics (for correctness check)."""
    dn = ('NHWC', 'HWIO', 'NHWC')
    stride, t = raw['stride'], raw['expand_ratio']
    inp, oup, hidden = raw['inp'], raw['oup'], raw['hidden']

    def bn(y, p):
        return (y - p['mean']) / jnp.sqrt(p['var'] + BN_EPS) * p['gamma'] + p['beta']

    x = jnp.transpose(x_nchw, (0, 2, 3, 1)).astype(jnp.float32)
    h = x
    if t != 1:
        h = lax.conv_general_dilated(h, raw['w1'].reshape(1, 1, inp, hidden),
                                     (1, 1), 'VALID', dimension_numbers=dn)
        h = jnp.clip(bn(h, raw['bn1']), 0.0, 6.0)
    h = lax.conv_general_dilated(h, raw['wdw'].reshape(3, 3, 1, hidden),
                                 (stride, stride), ((1, 1), (1, 1)),
                                 dimension_numbers=dn, feature_group_count=hidden)
    h = jnp.clip(bn(h, raw['bndw']), 0.0, 6.0)
    h = lax.conv_general_dilated(h, raw['w2'].reshape(1, 1, hidden, oup),
                                 (1, 1), 'VALID', dimension_numbers=dn)
    h = bn(h, raw['bn2'])
    if stride == 1 and inp == oup:
        h = h + x
    return jnp.transpose(h, (0, 3, 1, 2))


# ------------------------------------------------------------------------------ main

if __name__ == "__main__":
    key = jax.random.PRNGKey(0)
    kx, k1, k2, k3 = jax.random.split(key, 4)

    N, C, H, W = 2, 32, 16, 16
    x = jax.random.normal(kx, (N, C, H, W), jnp.float32)       # NCHW like PyTorch

    # (inp, oup, stride, expand_ratio): residual path, stride-2 path, expand==1 path.
    cases = [(32, 32, 1, 6), (32, 64, 2, 6), (32, 16, 1, 1)]

    for case_key, (inp, oup, stride, t) in zip((k1, k2, k3), cases):
        raw = init_inverted_residual(case_key, inp, oup, stride, t)
        kparams = fold_for_kernel(raw)

        fwd = jax.jit(partial(inverted_residual_forward, kparams=kparams))
        out = jax.block_until_ready(fwd(x))

        Ho = (H - 1) // stride + 1
        assert out.shape == (N, oup, Ho, Ho), out.shape
        assert bool(jnp.all(jnp.isfinite(out)))

        ref = inverted_residual_reference(x, raw)
        err = float(jnp.max(jnp.abs(out - ref)))
        scale = float(jnp.max(jnp.abs(ref))) + 1e-6
        assert err / scale < 5e-2, (err, scale)                # bf16 MXU/activation tol

    print("KERNEL_OK")
</pallas_src>

<mosaic_0001>
module attributes {stable_mosaic.version = 11 : i64} {
  func.func @kernel(%arg0: i32, %arg1: i32, %arg2: memref<1x18x16x32xbf16, #tpu.memory_space<vmem>>, %arg3: memref<32x192xbf16, #tpu.memory_space<vmem>>, %arg4: memref<1x192xf32, #tpu.memory_space<vmem>>, %arg5: memref<9x192xf32, #tpu.memory_space<vmem>>, %arg6: memref<1x192xf32, #tpu.memory_space<vmem>>, %arg7: memref<192x32xbf16, #tpu.memory_space<vmem>>, %arg8: memref<1x32xf32, #tpu.memory_space<vmem>>, %arg9: memref<1x8x16x32xf32, #tpu.memory_space<vmem>>, %arg10: memref<10x18x192xbf16, #tpu.memory_space<vmem>>) attributes {dimension_semantics = [#tpu.dimension_semantics<parallel>, #tpu.dimension_semantics<arbitrary>], iteration_bounds = array<i64: 2, 2>, scalar_prefetch = 0 : i64, scratch_operands = 1 : i64, tpu.core_type = #tpu.core_type<tc>, window_params = [{transform_indices = @transform_0, window_bounds = array<i64: 1, 18, 16, 32>}, {pipeline_mode = #tpu.pipeline_mode<synchronous>, transform_indices = @transform_1, window_bounds = array<i64: 32, 192>}, {pipeline_mode = #tpu.pipeline_mode<synchronous>, transform_indices = @transform_2, window_bounds = array<i64: 1, 192>}, {pipeline_mode = #tpu.pipeline_mode<synchronous>, transform_indices = @transform_3, window_bounds = array<i64: 9, 192>}, {pipeline_mode = #tpu.pipeline_mode<synchronous>, transform_indices = @transform_4, window_bounds = array<i64: 1, 192>}, {pipeline_mode = #tpu.pipeline_mode<synchronous>, transform_indices = @transform_5, window_bounds = array<i64: 192, 32>}, {pipeline_mode = #tpu.pipeline_mode<synchronous>, transform_indices = @transform_6, window_bounds = array<i64: 1, 32>}, {transform_indices = @transform_7, window_bounds = array<i64: 1, 8, 16, 32>}]} {
    %c8_i32 = arith.constant 8 : i32
    %0 = arith.muli %arg1, %c8_i32 : i32
    %1 = tpu.assume_multiple %0, 8 : i32
    %c0 = arith.constant 0 : index
    %2 = arith.index_cast %1 : i32 to index
    %c0_0 = arith.constant 0 : index
    %c0_1 = arith.constant 0 : index
    %3 = vector.load %arg2[%c0, %2, %c0_0, %c0_1] : memref<1x18x16x32xbf16, #tpu.memory_space<vmem>>, vector<1x10x16x32xbf16>
    %4 = vector.shape_cast %3 : vector<1x10x16x32xbf16> to vector<10x16x32xbf16>
    %5 = vector.shape_cast %4 : vector<10x16x32xbf16> to vector<160x32xbf16>
    %c0_2 = arith.constant 0 : index
    %c0_3 = arith.constant 0 : index
    %6 = vector.load %arg3[%c0_2, %c0_3] : memref<32x192xbf16, #tpu.memory_space<vmem>>, vector<32x192xbf16>
    %cst = arith.constant dense<0.000000e+00> : vector<160x192xf32>
    %7 = tpu.matmul %5, %6, %cst {dimension_numbers = #tpu.dot_dimension_numbers<[1], [0], [0], [1], [0, 0, 1, 1], [], []>} : vector<160x32xbf16>, vector<32x192xbf16>, vector<160x192xf32> -> vector<160x192xf32>
    %c0_4 = arith.constant 0 : index
    %c0_5 = arith.constant 0 : index
    %8 = vector.load %arg4[%c0_4, %c0_5] : memref<1x192xf32, #tpu.memory_space<vmem>>, vector<1x192xf32>
    %9 = vector.broadcast %8 : vector<1x192xf32> to vector<160x192xf32>
    %10 = arith.addf %7, %9 : vector<160x192xf32>
    %cst_6 = arith.constant 0.000000e+00 : f32
    %cst_7 = arith.constant 6.000000e+00 : f32
    %11 = vector.broadcast %cst_6 : f32 to vector<160x192xf32>
    %12 = arith.maximumf %11, %10 : vector<160x192xf32>
    %13 = vector.broadcast %cst_7 : f32 to vector<160x192xf32>
    %14 = arith.minimumf %13, %12 : vector<160x192xf32>
    %15 = vector.shape_cast %14 : vector<160x192xf32> to vector<10x16x192xf32>
    %16 = tpu.iota {dimensions = array<i32: 0>} : vector<10x1x1xi32>
    %17 = vector.broadcast %1 : i32 to vector<10x1x1xi32>
    %18 = arith.addi %17, %16 : vector<10x1x1xi32>
    %c1_i32 = arith.constant 1 : i32
    %19 = vector.broadcast %c1_i32 : i32 to vector<10x1x1xi32>
    %20 = arith.cmpi sge, %18, %19 : vector<10x1x1xi32>
    %c16_i32 = arith.constant 16 : i32
    %21 = vector.broadcast %c16_i32 : i32 to vector<10x1x1xi32>
    %22 = arith.cmpi sle, %18, %21 : vector<10x1x1xi32>
    %23 = arith.andi %20, %22 : vector<10x1x1xi1>
    %cst_8 = arith.constant 0.000000e+00 : f32
    %24 = vector.shape_cast %23 : vector<10x1x1xi1> to vector<10x1x1xi1>
    %25 = vector.broadcast %24 : vector<10x1x1xi1> to vector<10x16x192xi1>
    %26 = vector.broadcast %cst_8 : f32 to vector<10x16x192xf32>
    %27 = arith.select %25, %15, %26 : vector<10x16x192xi1>, vector<10x16x192xf32>
    %28 = arith.truncf %27 : vector<10x16x192xf32> to vector<10x16x192xbf16>
    %cst_9 = arith.constant 0.000000e+00 : bf16
    %29 = vector.broadcast %cst_9 : bf16 to vector<10x1x192xbf16>
    %cst_10 = arith.constant 0.000000e+00 : bf16
    %30 = vector.broadcast %cst_10 : bf16 to vector<10x1x192xbf16>
    %31 = tpu.concatenate %29, %28, %30 in 1 : vector<10x1x192xbf16>, vector<10x16x192xbf16>, vector<10x1x192xbf16> -> vector<10x18x192xbf16>
    %c0_11 = arith.constant 0 : index
    %c0_12 = arith.constant 0 : index
    %c0_13 = arith.constant 0 : index
    %32 = vector.load %arg10[%c0_11, %c0_12, %c0_13] : memref<10x18x192xbf16, #tpu.memory_space<vmem>>, vector<10x18x192xbf16>
    tpu.vector_store %arg10[%c0_11, %c0_12, %c0_13], %31 {strides = array<i32>} : memref<10x18x192xbf16, #tpu.memory_space<vmem>>, vector<10x18x192xbf16>,
    %c0_14 = arith.constant 0 : index
    %c0_15 = arith.constant 0 : index
    %33 = vector.load %arg5[%c0_14, %c0_15] : memref<9x192xf32, #tpu.memory_space<vmem>>, vector<9x192xf32>
    %c0_16 = arith.constant 0 : index
    %c0_17 = arith.constant 0 : index
    %34 = vector.load %arg6[%c0_16, %c0_17] : memref<1x192xf32, #tpu.memory_space<vmem>>, vector<1x192xf32>
    %cst_18 = arith.constant 0.000000e+00 : f32
    %35 = vector.broadcast %cst_18 : f32 to vector<8x16x192xf32>
    %c0_19 = arith.constant 0 : index
    %c0_20 = arith.constant 0 : index
    %c0_21 = arith.constant 0 : index
    %36 = vector.load %arg10[%c0_19, %c0_20, %c0_21] : memref<10x18x192xbf16, #tpu.memory_space<vmem>>, vector<8x16x192xbf16>
    %37 = vector.extract_strided_slice %33 {offsets = [0, 0], sizes = [1, 192], strides = [1, 1]} : vector<9x192xf32> to vector<1x192xf32>
    %38 = vector.shape_cast %37 : vector<1x192xf32> to vector<192xf32>
    %39 = arith.extf %36 : vector<8x16x192xbf16> to vector<8x16x192xf32>
    %40 = vector.shape_cast %38 : vector<192xf32> to vector<1x1x192xf32>
    %41 = vector.broadcast %40 : vector<1x1x192xf32> to vector<8x16x192xf32>
    %42 = arith.mulf %39, %41 : vector<8x16x192xf32>
    %43 = arith.addf %35, %42 : vector<8x16x192xf32>
    %c0_22 = arith.constant 0 : index
    %c1 = arith.constant 1 : index
    %c0_23 = arith.constant 0 : index
    %44 = vector.load %arg10[%c0_22, %c1, %c0_23] : memref<10x18x192xbf16, #tpu.memory_space<vmem>>, vector<8x16x192xbf16>
    %45 = vector.extract_strided_slice %33 {offsets = [1, 0], sizes = [1, 192], strides = [1, 1]} : vector<9x192xf32> to vector<1x192xf32>
    %46 = vector.shape_cast %45 : vector<1x192xf32> to vector<192xf32>
    %47 = arith.extf %44 : vector<8x16x192xbf16> to vector<8x16x192xf32>
    %48 = vector.shape_cast %46 : vector<192xf32> to vector<1x1x192xf32>
    %49 = vector.broadcast %48 : vector<1x1x192xf32> to vector<8x16x192xf32>
    %50 = arith.mulf %47, %49 : vector<8x16x192xf32>
    %51 = arith.addf %43, %50 : vector<8x16x192xf32>
    %c0_24 = arith.constant 0 : index
    %c2 = arith.constant 2 : index
    %c0_25 = arith.constant 0 : index
    %52 = vector.load %arg10[%c0_24, %c2, %c0_25] : memref<10x18x192xbf16, #tpu.memory_space<vmem>>, vector<8x16x192xbf16>
    %53 = vector.extract_strided_slice %33 {offsets = [2, 0], sizes = [1, 192], strides = [1, 1]} : vector<9x192xf32> to vector<1x192xf32>
    %54 = vector.shape_cast %53 : vector<1x192xf32> to vector<192xf32>
    %55 = arith.extf %52 : vector<8x16x192xbf16> to vector<8x16x192xf32>
    %56 = vector.shape_cast %54 : vector<192xf32> to vector<1x1x192xf32>
    %57 = vector.broadcast %56 : vector<1x1x192xf32> to vector<8x16x192xf32>
    %58 = arith.mulf %55, %57 : vector<8x16x192xf32>
    %59 = arith.addf %51, %58 : vector<8x16x192xf32>
    %c1_26 = arith.constant 1 : index
    %c0_27 = arith.constant 0 : index
    %c0_28 = arith.constant 0 : index
    %60 = vector.load %arg10[%c1_26, %c0_27, %c0_28] : memref<10x18x192xbf16, #tpu.memory_space<vmem>>, vector<8x16x192xbf16>
    %61 = vector.extract_strided_slice %33 {offsets = [3, 0], sizes = [1, 192], strides = [1, 1]} : vector<9x192xf32> to vector<1x192xf32>
    %62 = vector.shape_cast %61 : vector<1x192xf32> to vector<192xf32>
    %63 = arith.extf %60 : vector<8x16x192xbf16> to vector<8x16x192xf32>
    %64 = vector.shape_cast %62 : vector<192xf32> to vector<1x1x192xf32>
    %65 = vector.broadcast %64 : vector<1x1x192xf32> to vector<8x16x192xf32>
    %66 = arith.mulf %63, %65 : vector<8x16x192xf32>
    %67 = arith.addf %59, %66 : vector<8x16x192xf32>
    %c1_29 = arith.constant 1 : index
    %c1_30 = arith.constant 1 : index
    %c0_31 = arith.constant 0 : index
    %68 = vector.load %arg10[%c1_29, %c1_30, %c0_31] : memref<10x18x192xbf16, #tpu.memory_space<vmem>>, vector<8x16x192xbf16>
    %69 = vector.extract_strided_slice %33 {offsets = [4, 0], sizes = [1, 192], strides = [1, 1]} : vector<9x192xf32> to vector<1x192xf32>
    %70 = vector.shape_cast %69 : vector<1x192xf32> to vector<192xf32>
    %71 = arith.extf %68 : vector<8x16x192xbf16> to vector<8x16x192xf32>
    %72 = vector.shape_cast %70 : vector<192xf32> to vector<1x1x192xf32>
    %73 = vector.broadcast %72 : vector<1x1x192xf32> to vector<8x16x192xf32>
    %74 = arith.mulf %71, %73 : vector<8x16x192xf32>
    %75 = arith.addf %67, %74 : vector<8x16x192xf32>
    %c1_32 = arith.constant 1 : index
    %c2_33 = arith.constant 2 : index
    %c0_34 = arith.constant 0 : index
    %76 = vector.load %arg10[%c1_32, %c2_33, %c0_34] : memref<10x18x192xbf16, #tpu.memory_space<vmem>>, vector<8x16x192xbf16>
    %77 = vector.extract_strided_slice %33 {offsets = [5, 0], sizes = [1, 192], strides = [1, 1]} : vector<9x192xf32> to vector<1x192xf32>
    %78 = vector.shape_cast %77 : vector<1x192xf32> to vector<192xf32>
    %79 = arith.extf %76 : vector<8x16x192xbf16> to vector<8x16x192xf32>
    %80 = vector.shape_cast %78 : vector<192xf32> to vector<1x1x192xf32>
    %81 = vector.broadcast %80 : vector<1x1x192xf32> to vector<8x16x192xf32>
    %82 = arith.mulf %79, %81 : vector<8x16x192xf32>
    %83 = arith.addf %75, %82 : vector<8x16x192xf32>
    %c2_35 = arith.constant 2 : index
    %c0_36 = arith.constant 0 : index
    %c0_37 = arith.constant 0 : index
    %84 = vector.load %arg10[%c2_35, %c0_36, %c0_37] : memref<10x18x192xbf16, #tpu.memory_space<vmem>>, vector<8x16x192xbf16>
    %85 = vector.extract_strided_slice %33 {offsets = [6, 0], sizes = [1, 192], strides = [1, 1]} : vector<9x192xf32> to vector<1x192xf32>
    %86 = vector.shape_cast %85 : vector<1x192xf32> to vector<192xf32>
    %87 = arith.extf %84 : vector<8x16x192xbf16> to vector<8x16x192xf32>
    %88 = vector.shape_cast %86 : vector<192xf32> to vector<1x1x192xf32>
    %89 = vector.broadcast %88 : vector<1x1x192xf32> to vector<8x16x192xf32>
    %90 = arith.mulf %87, %89 : vector<8x16x192xf32>
    %91 = arith.addf %83, %90 : vector<8x16x192xf32>
    %c2_38 = arith.constant 2 : index
    %c1_39 = arith.constant 1 : index
    %c0_40 = arith.constant 0 : index
    %92 = vector.load %arg10[%c2_38, %c1_39, %c0_40] : memref<10x18x192xbf16, #tpu.memory_space<vmem>>, vector<8x16x192xbf16>
    %93 = vector.extract_strided_slice %33 {offsets = [7, 0], sizes = [1, 192], strides = [1, 1]} : vector<9x192xf32> to vector<1x192xf32>
    %94 = vector.shape_cast %93 : vector<1x192xf32> to vector<192xf32>
    %95 = arith.extf %92 : vector<8x16x192xbf16> to vector<8x16x192xf32>
    %96 = vector.shape_cast %94 : vector<192xf32> to vector<1x1x192xf32>
    %97 = vector.broadcast %96 : vector<1x1x192xf32> to vector<8x16x192xf32>
    %98 = arith.mulf %95, %97 : vector<8x16x192xf32>
    %99 = arith.addf %91, %98 : vector<8x16x192xf32>
    %c2_41 = arith.constant 2 : index
    %c2_42 = arith.constant 2 : index
    %c0_43 = arith.constant 0 : index
    %100 = vector.load %arg10[%c2_41, %c2_42, %c0_43] : memref<10x18x192xbf16, #tpu.memory_space<vmem>>, vector<8x16x192xbf16>
    %101 = vector.extract_strided_slice %33 {offsets = [8, 0], sizes = [1, 192], strides = [1, 1]} : vector<9x192xf32> to vector<1x192xf32>
    %102 = vector.shape_cast %101 : vector<1x192xf32> to vector<192xf32>
    %103 = arith.extf %100 : vector<8x16x192xbf16> to vector<8x16x192xf32>
    %104 = vector.shape_cast %102 : vector<192xf32> to vector<1x1x192xf32>
    %105 = vector.broadcast %104 : vector<1x1x192xf32> to vector<8x16x192xf32>
    %106 = arith.mulf %103, %105 : vector<8x16x192xf32>
    %107 = arith.addf %99, %106 : vector<8x16x192xf32>
    %108 = vector.shape_cast %34 : vector<1x192xf32> to vector<1x1x192xf32>
    %109 = vector.broadcast %108 : vector<1x1x192xf32> to vector<8x16x192xf32>
    %110 = arith.addf %107, %109 : vector<8x16x192xf32>
    %cst_44 = arith.constant 0.000000e+00 : f32
    %cst_45 = arith.constant 6.000000e+00 : f32
    %111 = vector.broadcast %cst_44 : f32 to vector<8x16x192xf32>
    %112 = arith.maximumf %111, %110 : vector<8x16x192xf32>
    %113 = vector.broadcast %cst_45 : f32 to vector<8x16x192xf32>
    %114 = arith.minimumf %113, %112 : vector<8x16x192xf32>
    %115 = vector.shape_cast %114 : vector<8x16x192xf32> to vector<128x192xf32>
    %116 = arith.truncf %115 : vector<128x192xf32> to vector<128x192xbf16>
    %c0_46 = arith.constant 0 : index
    %c0_47 = arith.constant 0 : index
    %117 = vector.load %arg7[%c0_46, %c0_47] : memref<192x32xbf16, #tpu.memory_space<vmem>>, vector<192x32xbf16>
    %cst_48 = arith.constant dense<0.000000e+00> : vector<128x32xf32>
    %118 = tpu.matmul %116, %117, %cst_48 {dimension_numbers = #tpu.dot_dimension_numbers<[1], [0], [0], [1], [0, 0, 1, 1], [], []>} : vector<128x192xbf16>, vector<192x32xbf16>, vector<128x32xf32> -> vector<128x32xf32>
    %c0_49 = arith.constant 0 : index
    %c0_50 = arith.constant 0 : index
    %119 = vector.load %arg8[%c0_49, %c0_50] : memref<1x32xf32, #tpu.memory_space<vmem>>, vector<1x32xf32>
    %120 = vector.broadcast %119 : vector<1x32xf32> to vector<128x32xf32>
    %121 = arith.addf %118, %120 : vector<128x32xf32>
    %c1_i32_51 = arith.constant 1 : i32
    %122 = arith.addi %1, %c1_i32_51 : i32
    %c0_52 = arith.constant 0 : index
    %123 = arith.index_cast %122 : i32 to index
    %c0_53 = arith.constant 0 : index
    %c0_54 = arith.constant 0 : index
    %124 = vector.load %arg2[%c0_52, %123, %c0_53, %c0_54] : memref<1x18x16x32xbf16, #tpu.memory_space<vmem>>, vector<1x8x16x32xbf16>
    %125 = vector.shape_cast %124 : vector<1x8x16x32xbf16> to vector<8x16x32xbf16>
    %126 = arith.extf %125 : vector<8x16x32xbf16> to vector<8x16x32xf32>
    %127 = vector.shape_cast %126 : vector<8x16x32xf32> to vector<128x32xf32>
    %128 = arith.addf %121, %127 : vector<128x32xf32>
    %129 = vector.shape_cast %128 : vector<128x32xf32> to vector<8x16x32xf32>
    %c0_55 = arith.constant 0 : index
    %c0_56 = arith.constant 0 : index
    %c0_57 = arith.constant 0 : index
    %c0_58 = arith.constant 0 : index
    %130 = vector.load %arg9[%c0_55, %c0_56, %c0_57, %c0_58] : memref<1x8x16x32xf32, #tpu.memory_space<vmem>>, vector<1x8x16x32xf32>
    %131 = vector.shape_cast %130 : vector<1x8x16x32xf32> to vector<8x16x32xf32>
    %132 = vector.shape_cast %129 : vector<8x16x32xf32> to vector<1x8x16x32xf32>
    tpu.vector_store %arg9[%c0_55, %c0_56, %c0_57, %c0_58], %132 {strides = array<i32>} : memref<1x8x16x32xf32, #tpu.memory_space<vmem>>, vector<1x8x16x32xf32>,
    return
  }
  func.func @transform_0(%arg0: i32, %arg1: i32) -> (i32, i32, i32, i32) {
    %c0_i32 = arith.constant 0 : i32
    %c0_i32_0 = arith.constant 0 : i32
    %c0_i32_1 = arith.constant 0 : i32
    %c0_i32_2 = arith.constant 0 : i32
    return %arg0, %c0_i32, %c0_i32_0, %c0_i32_1 : i32, i32, i32, i32
  }
  func.func @transform_1(%arg0: i32, %arg1: i32) -> (i32, i32) {
    %c0_i32 = arith.constant 0 : i32
    %c0_i32_0 = arith.constant 0 : i32
    %c0_i32_1 = arith.constant 0 : i32
    return %c0_i32, %c0_i32_0 : i32, i32
  }
  func.func @transform_2(%arg0: i32, %arg1: i32) -> (i32, i32) {
    %c0_i32 = arith.constant 0 : i32
    %c0_i32_0 = arith.constant 0 : i32
    %c0_i32_1 = arith.constant 0 : i32
    return %c0_i32, %c0_i32_0 : i32, i32
  }
  func.func @transform_3(%arg0: i32, %arg1: i32) -> (i32, i32) {
    %c0_i32 = arith.constant 0 : i32
    %c0_i32_0 = arith.constant 0 : i32
    %c0_i32_1 = arith.constant 0 : i32
    return %c0_i32, %c0_i32_0 : i32, i32
  }
  func.func @transform_4(%arg0: i32, %arg1: i32) -> (i32, i32) {
    %c0_i32 = arith.constant 0 : i32
    %c0_i32_0 = arith.constant 0 : i32
    %c0_i32_1 = arith.constant 0 : i32
    return %c0_i32, %c0_i32_0 : i32, i32
  }
  func.func @transform_5(%arg0: i32, %arg1: i32) -> (i32, i32) {
    %c0_i32 = arith.constant 0 : i32
    %c0_i32_0 = arith.constant 0 : i32
    %c0_i32_1 = arith.constant 0 : i32
    return %c0_i32, %c0_i32_0 : i32, i32
  }
  func.func @transform_6(%arg0: i32, %arg1: i32) -> (i32, i32) {
    %c0_i32 = arith.constant 0 : i32
    %c0_i32_0 = arith.constant 0 : i32
    %c0_i32_1 = arith.constant 0 : i32
    return %c0_i32, %c0_i32_0 : i32, i32
  }
  func.func @transform_7(%arg0: i32, %arg1: i32) -> (i32, i32, i32, i32) {
    %c0_i32 = arith.constant 0 : i32
    %c0_i32_0 = arith.constant 0 : i32
    %c0_i32_1 = arith.constant 0 : i32
    return %arg0, %arg1, %c0_i32, %c0_i32_0 : i32, i32, i32, i32
  }
}

</mosaic_0001>

<llo_original>
// kernel: inverted_residual_forward.1
$region0: #{inverted_residual_forward.1}
  #allocation0 [shape = 'u32[]', space=smem, size = 0x4, offset = 0x4, fixed_abs, tag = 'smem constant byte address 0x4 - core index']
  #allocation1 [shape = 'u32[144,128]{1,0:T(1,128)}', space=vmem, size = 0x12000, scoped, tag = 'internal scratch']
  #allocation2 [shape = 'bf16[10,18,192]{2,1,0:T(8,128)(2,1)}', space=vmem, size = 0x1e000, scoped, tag = 'scratch operand']
  %s0 = inlined_call_operand.vmem [shape: bf16[2,18,16,32], index: 0, kind: input, shape index: {}]
  %s1 = inlined_call_operand.vmem [shape: bf16[32,192], index: 1, kind: input, shape index: {}]
  %s2 = inlined_call_operand.vmem [shape: f32[1,192], index: 2, kind: input, shape index: {}]
  %s3 = inlined_call_operand.vmem [shape: f32[9,192], index: 3, kind: input, shape index: {}]
  %s4 = inlined_call_operand.vmem [shape: f32[1,192], index: 4, kind: input, shape index: {}]
  %s5 = inlined_call_operand.vmem [shape: bf16[192,32], index: 5, kind: input, shape index: {}]
  %s6 = inlined_call_operand.vmem [shape: f32[1,32], index: 6, kind: input, shape index: {}]
  %s7 = inlined_call_operand.hbm [shape: f32[2,16,16,32], index: 7, kind: output, shape index: {}]
  %s8 = sld [smem:[#allocation0]]
  $region61: #{inverted_residual_forward.1} parent=0
    _
  %s10 = ssub.s32 1, %s8
  %s11 = scalar_select 0, %s10, %s8
  $region1: #{inverted_residual_forward.1} parent=0
    #allocation3 [shape = 'u8[131072]{0}', space=vmem, size = 0x20000, scoped, tag = 'output window, operand 0']
    #allocation4 [shape = 's32[2]{0}', space=sflag, size = 0x8, scoped, tag = 'scoped memory for inverted_residual_forward.1']
    %12 = vsyncpa [#allocation4], 0
    %s13 = scalar_lea.sflag [#allocation4], 1
    %14 = vsyncpa %s13, 0
    loop: start=0, step=1, limit=6
    $region2: #{inverted_residual_forward.1} parent=1 // loop_pre_header
      _
    $region3: #{inverted_residual_forward.1} parent=1 // loop_header
      %s16 = sphi 0, %s20
      %p17 = scmp.ge.s32.totalorder %s16, 6
      %s23 = sphi 0, %s35
      %s24 = sphi 0, %s31
      %s25 = sphi 0, %s23
      %s26 = sphi 0, %s24
      %s27 = sphi 0, %s25
      %s28 = sphi 0, %s26
      %s38 = sphi 0, %s40
      %s41 = sphi 0, %s38
      %s42 = sphi 0, %s41
      %s58 = sphi 0, %s42
      %s62 = sphi 0, %s62
      %s64 = sphi 0, %s62
      %s65 = sphi 0, %s64
      %s79 = sphi 0, %s65
      %s83 = sphi 0, %s83
      %s85 = sphi 0, %s83
      %s86 = sphi 0, %s85
      %s100 = sphi 0, %s86
      %s104 = sphi 0, %s104
      %s106 = sphi 0, %s104
      %s107 = sphi 0, %s106
      %s121 = sphi 0, %s107
      %s125 = sphi 0, %s125
      %s127 = sphi 0, %s125
      %s128 = sphi 0, %s127
      %s142 = sphi 0, %s128
      %s146 = sphi 0, %s146
      %s148 = sphi 0, %s146
      %s149 = sphi 0, %s148
      %s163 = sphi 0, %s149
      %s167 = sphi 0, %s167
      %s169 = sphi 0, %s167
      %s170 = sphi 0, %s169
      %s184 = sphi 0, %s170
      %s192 = sphi 0, %s194
      %s195 = sphi 0, %s192
      %s196 = sphi 0, %s195
      %s212 = sphi 0, %s196
    $region4: #{inverted_residual_forward.1} parent=1 // loop_header_branch
      %19 = sbr.rel (%p17) target = $region8
    $region5: #{inverted_residual_forward.1} parent=1 // loop_body
      %s21 = ssub.s32 %s16, 1
      %s22 = ssub.s32 %s16, 2
      %s29 = sadd.s32 1, %s24
      %p30 = scmp.ge.s32.totalorder %s29, 2
      %s31 = scalar_select %p30, 0, %s29
      %s32 = sadd.s32 1, %s23
      %s33 = scalar_select %p30, %s32, %s23
      %p34 = scmp.ge.s32.totalorder %s33, 2
      %s35 = scalar_select %p34, 0, %s33
      %s36 = ssub.s32 %s23, %s35
      %p37 = scmp.eq.s32.totalorder %s36, 0
      %s39 = sadd.s32 %s38, 1
      %s40 = scalar_select %p37, %s38, %s39
      %p43 = pneg %p37
      %p44 = scmp.eq.s32.totalorder %s16, 3
      %p45 = por %p43, %p44
      %p46 = scmp.ne.s32.totalorder %s38, %s41
      %p47 = scmp.eq.s32.totalorder %s16, 0
      %p48 = por %p46, %p47
      %p49 = scmp.ne.s32.totalorder %s38, %s41
      %p50 = scmp.eq.s32.totalorder %s21, 3
      %p51 = por %p49, %p50
      %p52 = scmp.ne.s32.totalorder %s41, %s42
      %p53 = scmp.eq.s32.totalorder %s21, 0
      %p54 = por %p52, %p53
      %p55 = scmp.ne.s32.totalorder %s41, %s42
      %p56 = scmp.eq.s32.totalorder %s22, 3
      %p57 = por %p55, %p56
      %p59 = scmp.ne.s32.totalorder %s42, %s58
      %p60 = scmp.eq.s32.totalorder %s22, 0
      %p61 = por %p59, %p60
      %s63 = sadd.s32 %s62, 1
      %p66 = scmp.eq.s32.totalorder %s16, 3
      %p67 = scmp.ne.s32.totalorder %s62, %s64
      %p68 = scmp.eq.s32.totalorder %s16, 0
      %p69 = por %p67, %p68
      %p70 = scmp.ne.s32.totalorder %s62, %s64
      %p71 = scmp.eq.s32.totalorder %s21, 3
      %p72 = por %p70, %p71
      %p73 = scmp.ne.s32.totalorder %s64, %s65
      %p74 = scmp.eq.s32.totalorder %s21, 0
      %p75 = por %p73, %p74
      %p76 = scmp.ne.s32.totalorder %s64, %s65
      %p77 = scmp.eq.s32.totalorder %s22, 3
      %p78 = por %p76, %p77
      %p80 = scmp.ne.s32.totalorder %s65, %s79
      %p81 = scmp.eq.s32.totalorder %s22, 0
      %p82 = por %p80, %p81
      %s84 = sadd.s32 %s83, 1
      %p87 = scmp.eq.s32.totalorder %s16, 3
      %p88 = scmp.ne.s32.totalorder %s83, %s85
      %p89 = scmp.eq.s32.totalorder %s16, 0
      %p90 = por %p88, %p89
      %p91 = scmp.ne.s32.totalorder %s83, %s85
      %p92 = scmp.eq.s32.totalorder %s21, 3
      %p93 = por %p91, %p92
      %p94 = scmp.ne.s32.totalorder %s85, %s86
      %p95 = scmp.eq.s32.totalorder %s21, 0
      %p96 = por %p94, %p95
      %p97 = scmp.ne.s32.totalorder %s85, %s86
      %p98 = scmp.eq.s32.totalorder %s22, 3
      %p99 = por %p97, %p98
      %p101 = scmp.ne.s32.totalorder %s86, %s100
      %p102 = scmp.eq.s32.totalorder %s22, 0
      %p103 = por %p101, %p102
      %s105 = sadd.s32 %s104, 1
      %p108 = scmp.eq.s32.totalorder %s16, 3
      %p109 = scmp.ne.s32.totalorder %s104, %s106
      %p110 = scmp.eq.s32.totalorder %s16, 0
      %p111 = por %p109, %p110
      %p112 = scmp.ne.s32.totalorder %s104, %s106
      %p113 = scmp.eq.s32.totalorder %s21, 3
      %p114 = por %p112, %p113
      %p115 = scmp.ne.s32.totalorder %s106, %s107
      %p116 = scmp.eq.s32.totalorder %s21, 0
      %p117 = por %p115, %p116
      %p118 = scmp.ne.s32.totalorder %s106, %s107
      %p119 = scmp.eq.s32.totalorder %s22, 3
      %p120 = por %p118, %p119
      %p122 = scmp.ne.s32.totalorder %s107, %s121
      %p123 = scmp.eq.s32.totalorder %s22, 0
      %p124 = por %p122, %p123
      %s126 = sadd.s32 %s125, 1
      %p129 = scmp.eq.s32.totalorder %s16, 3
      %p130 = scmp.ne.s32.totalorder %s125, %s127
      %p131 = scmp.eq.s32.totalorder %s16, 0
      %p132 = por %p130, %p131
      %p133 = scmp.ne.s32.totalorder %s125, %s127
      %p134 = scmp.eq.s32.totalorder %s21, 3
      %p135 = por %p133, %p134
      %p136 = scmp.ne.s32.totalorder %s127, %s128
      %p137 = scmp.eq.s32.totalorder %s21, 0
      %p138 = por %p136, %p137
      %p139 = scmp.ne.s32.totalorder %s127, %s128
      %p140 = scmp.eq.s32.totalorder %s22, 3
      %p141 = por %p139, %p140
      %p143 = scmp.ne.s32.totalorder %s128, %s142
      %p144 = scmp.eq.s32.totalorder %s22, 0
      %p145 = por %p143, %p144
      %s147 = sadd.s32 %s146, 1
      %p150 = scmp.eq.s32.totalorder %s16, 3
      %p151 = scmp.ne.s32.totalorder %s146, %s148
      %p152 = scmp.eq.s32.totalorder %s16, 0
      %p153 = por %p151, %p152
      %p154 = scmp.ne.s32.totalorder %s146, %s148
      %p155 = scmp.eq.s32.totalorder %s21, 3
      %p156 = por %p154, %p155
      %p157 = scmp.ne.s32.totalorder %s148, %s149
      %p158 = scmp.eq.s32.totalorder %s21, 0
      %p159 = por %p157, %p158
      %p160 = scmp.ne.s32.totalorder %s148, %s149
      %p161 = scmp.eq.s32.totalorder %s22, 3
      %p162 = por %p160, %p161
      %p164 = scmp.ne.s32.totalorder %s149, %s163
      %p165 = scmp.eq.s32.totalorder %s22, 0
      %p166 = por %p164, %p165
      %s168 = sadd.s32 %s167, 1
      %p171 = scmp.eq.s32.totalorder %s16, 3
      %p172 = scmp.ne.s32.totalorder %s167, %s169
      %p173 = scmp.eq.s32.totalorder %s16, 0
      %p174 = por %p172, %p173
      %p175 = scmp.ne.s32.totalorder %s167, %s169
      %p176 = scmp.eq.s32.totalorder %s21, 3
      %p177 = por %p175, %p176
      %p178 = scmp.ne.s32.totalorder %s169, %s170
      %p179 = scmp.eq.s32.totalorder %s21, 0
      %p180 = por %p178, %p179
      %p181 = scmp.ne.s32.totalorder %s169, %s170
      %p182 = scmp.eq.s32.totalorder %s22, 3
      %p183 = por %p181, %p182
      %p185 = scmp.ne.s32.totalorder %s170, %s184
      %p186 = scmp.eq.s32.totalorder %s22, 0
      %p187 = por %p185, %p186
      %s188 = ssub.s32 %s23, %s35
      %s189 = ssub.s32 %s24, %s31
      %s190 = sor.u32 %s188, %s189
      %p191 = scmp.eq.s32.totalorder %s190, 0
      %s193 = sadd.s32 %s192, 1
      %s194 = scalar_select %p191, %s192, %s193
      %p197 = pneg %p191
      %p198 = scmp.eq.s32.totalorder %s16, 3
      %p199 = por %p197, %p198
      %p200 = scmp.ne.s32.totalorder %s192, %s195
      %p201 = scmp.eq.s32.totalorder %s16, 0
      %p202 = por %p200, %p201
      %p203 = scmp.ne.s32.totalorder %s192, %s195
      %p204 = scmp.eq.s32.totalorder %s21, 3
      %p205 = por %p203, %p204
      %p206 = scmp.ne.s32.totalorder %s195, %s196
      %p207 = scmp.eq.s32.totalorder %s21, 0
      %p208 = por %p206, %p207
      %p209 = scmp.ne.s32.totalorder %s195, %s196
      %p210 = scmp.eq.s32.totalorder %s22, 3
      %p211 = por %p209, %p210
      %p213 = scmp.ne.s32.totalorder %s196, %s212
      %p214 = scmp.eq.s32.totalorder %s22, 0
      %p215 = por %p213, %p214
      %p216 = scmp.le.s32.totalorder 1, %s16
      %p217 = scmp.lt.s32.totalorder %s16, 5
      %p218 = pnand %p216, %p217
      %p219 = pneg %p218
      // Predicated region
      $region9: #{inverted_residual_forward.1} parent=5 // pred_check
        _
      $region10: #{inverted_residual_forward.1} parent=5 // pred_check_branch
        %221 = sbr.rel (%p218) target = $region12
      $region11: #{inverted_residual_forward.1} parent=5 // pred_region
        %s222 = ssub.s32 %s16, 1
        // Predicated region
        $region13: #{inverted_residual_forward.1} parent=11 // pred_check
          %p223 = pneg %p75
        $region14: #{inverted_residual_forward.1} parent=11 // pred_check_branch
          %225 = sbr.rel (%p223) target = $region16
        $region15: #{inverted_residual_forward.1} parent=11 // pred_region
          _
        $region16: #{inverted_residual_forward.1} parent=11 // pred_fallthru
          _
        // Predicated region
        $region17: #{inverted_residual_forward.1} parent=11 // pred_check
          %p226 = pneg %p96
        $region18: #{inverted_residual_forward.1} parent=11 // pred_check_branch
          %228 = sbr.rel (%p226) target = $region20
        $region19: #{inverted_residual_forward.1} parent=11 // pred_region
          _
        $region20: #{inverted_residual_forward.1} parent=11 // pred_fallthru
          _
        // Predicated region
        $region21: #{inverted_residual_forward.1} parent=11 // pred_check
          %p229 = pneg %p117
        $region22: #{inverted_residual_forward.1} parent=11 // pred_check_branch
          %231 = sbr.rel (%p229) target = $region24
        $region23: #{inverted_residual_forward.1} parent=11 // pred_region
          _
        $region24: #{inverted_residual_forward.1} parent=11 // pred_fallthru
          _
        // Predicated region
        $region25: #{inverted_residual_forward.1} parent=11 // pred_check
          %p232 = pneg %p138
        $region26: #{inverted_residual_forward.1} parent=11 // pred_check_branch
          %234 = sbr.rel (%p232) target = $region28
        $region27: #{inverted_residual_forward.1} parent=11 // pred_region
          _
        $region28: #{inverted_residual_forward.1} parent=11 // pred_fallthru
          _
        // Predicated region
        $region29: #{inverted_residual_forward.1} parent=11 // pred_check
          %p235 = pneg %p159
        $region30: #{inverted_residual_forward.1} parent=11 // pred_check_branch
          %237 = sbr.rel (%p235) target = $region32
        $region31: #{inverted_residual_forward.1} parent=11 // pred_region
          _
        $region32: #{inverted_residual_forward.1} parent=11 // pred_fallthru
          _
        // Predicated region
        $region33: #{inverted_residual_forward.1} parent=11 // pred_check
          %p238 = pneg %p180
        $region34: #{inverted_residual_forward.1} parent=11 // pred_check_branch
          %240 = sbr.rel (%p238) target = $region36
        $region35: #{inverted_residual_forward.1} parent=11 // pred_region
          _
        $region36: #{inverted_residual_forward.1} parent=11 // pred_fallthru
          _
      $region12: #{inverted_residual_forward.1} parent=5 // pred_fallthru
        _
      %p241 = scmp.lt.s32.totalorder %s16, 4
      // Predicated region
      $region37: #{inverted_residual_forward.1} parent=5 // pred_check
        %p242 = pneg %p241
      $region38: #{inverted_residual_forward.1} parent=5 // pred_check_branch
        %244 = sbr.rel (%p242) target = $region40
      $region39: #{inverted_residual_forward.1} parent=5 // pred_region
        // Predicated region
        $region41: #{inverted_residual_forward.1} parent=39 // pred_check
          %p245 = pneg %p48
        $region42: #{inverted_residual_forward.1} parent=39 // pred_check_branch
          %247 = sbr.rel (%p245) target = $region44
        $region43: #{inverted_residual_forward.1} parent=39 // pred_region
          %p248 = scmp.lt.s32.totalorder %s23, 1
          %s249 = scalar_select %p248, %s23, 1
          %s250 = smul.addr %s249, 36
          %s251 = smul.addr %s250, 4
          %s252 = scalar_lea.vmem %s0, %s251
        $region44: #{inverted_residual_forward.1} parent=39 // pred_fallthru
          _
      $region40: #{inverted_residual_forward.1} parent=5 // pred_fallthru
        _
      %p253 = scmp.le.s32.totalorder 1, %s16
      %p254 = scmp.lt.s32.totalorder %s16, 5
      %p255 = pnand %p253, %p254
      %p256 = pneg %p255
      // Predicated region
      $region45: #{inverted_residual_forward.1} parent=5 // pred_check
        _
      $region46: #{inverted_residual_forward.1} parent=5 // pred_check_branch
        %258 = sbr.rel (%p255) target = $region48
      $region47: #{inverted_residual_forward.1} parent=5 // pred_region
        %s259 = ssub.s32 %s16, 1
        %p260 = scmp.lt.s32.totalorder %s25, 1
        %s261 = scalar_select %p260, %s25, 1
        %s262 = smul.addr %s261, 36
        %s263 = smul.addr %s262, 4
        %s264 = scalar_lea.vmem %s0, %s263
        %p265 = pneg %p54
        %p266 = pneg %p51
        %p267 = pneg %p75
        %p268 = pneg %p72
        %p269 = pneg %p96
        %p270 = pneg %p93
        %p271 = pneg %p117
        %p272 = pneg %p114
        %p273 = pneg %p138
        %p274 = pneg %p135
        %p275 = pneg %p159
        %p276 = pneg %p156
        %p277 = pneg %p180
        %p278 = pneg %p177
        %p279 = pneg %p208
        %p280 = pneg %p205
        %s281 = sand.u32 %s195, 1
        %s282 = scalar_lea.sflag [#allocation4], %s281
        %s283 = sand.u32 %s195, 1
        %s284 = smul.addr %s283, 128
        %s285 = scalar_lea.vmem [#allocation3], %s284
        %p286 = scmp.lt.s32.totalorder %s25, 1
        %s287 = scalar_select %p286, %s25, 1
        %s288 = smul.addr %s287, 36
        %s289 = smul.addr %s288, 4
        %s290 = scalar_lea.vmem %s0, %s289
        %s291 = smul.u32 8, %s26
        %s293 = smul.u32 %s26, 8
        %s294 = smul.u32 %s293, 2
        %s295 = smul.addr %s294, 4
        %s296 = scalar_lea.vmem %s290, %s295
        %v297 = vld [vmem:[%s296] sm:$0xf]
        %v298 = vld [vmem:[%s296 + $0x4] sm:$0xf]
        %v299 = vld [vmem:[%s296 + $0x8] sm:$0xf]
        %v300 = vld [vmem:[%s296 + $0xc] sm:$0xf]
        %v301 = vld [vmem:[%s296 + $0x10] sm:$0xf]
        %v302 = vld [vmem:[%s296 + $0x14] sm:$0xf]
        %v303 = vld [vmem:[%s296 + $0x18] sm:$0xf]
        %v304 = vld [vmem:[%s296 + $0x1c] sm:$0xf]
        %v305 = vld [vmem:[%s296 + $0x20] sm:$0xf]
        %v306 = vld [vmem:[%s296 + $0x24] sm:$0xf]
        %v307 = vld [vmem:[%s296 + $0x28] sm:$0xf]
        %v308 = vld [vmem:[%s296 + $0x2c] sm:$0xf]
        %v309 = vld [vmem:[%s296 + $0x30] sm:$0xf]
        %v310 = vld [vmem:[%s296 + $0x34] sm:$0xf]
        %v311 = vld [vmem:[%s296 + $0x38] sm:$0xf]
        %v312 = vld [vmem:[%s296 + $0x3c] sm:$0xf]
        %v313 = vld [vmem:[%s296 + $0x40] sm:$0xf]
        %v314 = vld [vmem:[%s296 + $0x44] sm:$0xf]
        %v315 = vld [vmem:[%s296 + $0x48] sm:$0xf]
        %v316 = vld [vmem:[%s296 + $0x4c] sm:$0xf]
        %v317 = vld [vmem:[%s1] sm:$0xff]
        %v318 = vld [vmem:[%s1 + $0x8] sm:$0xff]
        %v319 = vld [vmem:[%s1 + $0x10] sm:$0xff]
        %v320 = vld [vmem:[%s1 + $0x18] sm:$0xff]
        %v321 = vld [vmem:[%s2] sm:$0x3]
        %v323 = vlaneseq
        %v324 = vshrl.u32 %v323, 7
        %v325 = vsub.s32 0, %v324
        %v326 = vrot.slane %v321, %v325
        %v327 = vlaneseq
        %v328 = vshrl.u32 %v327, 7
        %v329 = vsub.s32 1, %v328
        %v330 = vrot.slane %v321, %v329
        %v353 = vunpack.c.l.b16 %v297
        %v354 = vunpack.c.l.b16 %v298
        %v355 = vunpack.c.l.b16 %v299
        %v356 = vunpack.c.l.b16 %v300
        %v357 = vunpack.c.l.b16 %v301
        %v358 = vunpack.c.l.b16 %v302
        %v359 = vunpack.c.l.b16 %v303
        %v360 = vunpack.c.l.b16 %v304
        %v361 = vunpack.c.l.b16 %v305
        %v362 = vunpack.c.l.b16 %v306
        %v363 = vunpack.c.l.b16 %v307
        %v364 = vunpack.c.l.b16 %v308
        %v365 = vunpack.c.l.b16 %v309
        %v366 = vunpack.c.l.b16 %v310
        %v367 = vunpack.c.l.b16 %v311
        %v368 = vunpack.c.l.b16 %v312
        %v369 = vunpack.c.l.b16 %v313
        %v370 = vunpack.c.l.b16 %v314
        %v371 = vunpack.c.l.b16 %v315
        %v372 = vunpack.c.l.b16 %v316
        %v373 = vpack.c.b16 %v354, %v353
        %v374 = vpack.c.b16 %v356, %v355
        %v375 = vpack.c.b16 %v358, %v357
        %v376 = vpack.c.b16 %v360, %v359
        %v377 = vpack.c.b16 %v362, %v361
        %v378 = vpack.c.b16 %v364, %v363
        %v379 = vpack.c.b16 %v366, %v365
        %v380 = vpack.c.b16 %v368, %v367
        %v381 = vpack.c.b16 %v370, %v369
        %v382 = vpack.c.b16 %v372, %v371
        %v387 = vunpack.c.l.b16 %v317
        %v388 = vunpack.c.h.b16 %v317
        %v389 = vunpack.c.l.b16 %v318
        %v390 = vunpack.c.h.b16 %v318
        %v391 = vunpack.c.l.b16 %v319
        %v392 = vunpack.c.h.b16 %v319
        %v393 = vunpack.c.l.b16 %v320
        %v394 = vunpack.c.h.b16 %v320
        %v395 = vpack.c.b16 %v389, %v387
        %v396 = vpack.c.b16 %v390, %v388
        %v397 = vpack.c.b16 %v393, %v391
        %v398 = vpack.c.b16 %v394, %v392
        %vm403 = vcmask 261120
        %v405 = vsel %vm403, %v373, 0
        %v408 = vsel %vm403, %v374, 0
        %v411 = vsel %vm403, %v375, 0
        %v414 = vsel %vm403, %v376, 0
        %v417 = vsel %vm403, %v377, 0
        %v420 = vsel %vm403, %v378, 0
        %v423 = vsel %vm403, %v379, 0
        %v426 = vsel %vm403, %v380, 0
        %v429 = vsel %vm403, %v381, 0
        %v432 = vsel %vm403, %v382, 0
        %434 = vmatprep.subr.bf16.mxu0 0
        %435 = vmatpush1.bf16.msra.mxu0 0
        %436 = vmatprep.subr.bf16.mxu0 0
        %437 = vmatpush1.bf16.msra.mxu0 0
        %438 = vmatprep.subr.bf16.mxu0 0
        %439 = vmatpush1.bf16.msra.mxu0 0
        %440 = vmatprep.subr.bf16.mxu0 0
        %441 = vmatpush1.bf16.msra.mxu0 0
        %442 = vmatprep.subr.bf16.mxu0 0
        %443 = vmatpush1.bf16.msra.mxu0 0
        %444 = vmatprep.subr.bf16.mxu0 0
        %445 = vmatpush1.bf16.msra.mxu0 0
        %446 = vmatprep.subr.bf16.mxu0 %v398
        %447 = vmatpush1.bf16.msra.mxu0 %v397
        %448 = vmatprep.subr.bf16.mxu0 %v396
        %449 = vmatpush1.bf16.msra.mxu0 %v395
        %450 = vmatprep.subr.bf16.mxu0 0
        %451 = vmatpush2.bf16.msra.mxu0 0
        %452 = vmatprep.subr.bf16.mxu0 0
        %453 = vmatpush2.bf16.msra.mxu0 0
        %454 = vmatprep.subr.bf16.mxu0 0
        %455 = vmatpush2.bf16.msra.mxu0 0
        %456 = vmatprep.subr.bf16.mxu0 0
        %457 = vmatpush2.bf16.msra.mxu0 0
        %458 = vmatprep.subr.bf16.mxu0 0
        %459 = vmatpush2.bf16.msra.mxu0 0
        %460 = vmatprep.subr.bf16.mxu0 0
        %461 = vmatpush2.bf16.msra.mxu0 0
        %462 = vmatprep.subr.bf16.mxu0 0
        %463 = vmatpush2.bf16.msra.mxu0 0
        %464 = vmatprep.subr.bf16.mxu0 0
        %465 = vmatpush2.bf16.msra.mxu0 0
        %466 = vmatprep.mubr.bf16.mxu0 0
        %467 = vmatmul.mubr.bf16.gmra.mxu0 %v405
        %v468 = vpop.f32.mrf.mxu0
        %v469 = vadd.f32 %v326, %v468
        %v470 = vpop.f32.mrf.mxu0
        %v471 = vadd.f32 %v330, %v470
        %v472 = vpop.f32.mrf.mxu0
        %v473 = vadd.f32 %v326, %v472
        %v474 = vpop.f32.mrf.mxu0
        %v475 = vadd.f32 %v330, %v474
        %476 = vmatprep.mubr.bf16.mxu0 0
        %477 = vmatmul.mubr.bf16.gmra.mxu0 %v408
        %v478 = vpop.f32.mrf.mxu0
        %v479 = vadd.f32 %v326, %v478
        %v480 = vpop.f32.mrf.mxu0
        %v481 = vadd.f32 %v330, %v480
        %v482 = vpop.f32.mrf.mxu0
        %v483 = vadd.f32 %v326, %v482
        %v484 = vpop.f32.mrf.mxu0
        %v485 = vadd.f32 %v330, %v484
        %486 = vmatprep.mubr.bf16.mxu0 0
        %487 = vmatmul.mubr.bf16.gmra.mxu0 %v411
        %v488 = vpop.f32.mrf.mxu0
        %v489 = vadd.f32 %v326, %v488
        %v490 = vpop.f32.mrf.mxu0
        %v491 = vadd.f32 %v330, %v490
        %v492 = vpop.f32.mrf.mxu0
        %v493 = vadd.f32 %v326, %v492
        %v494 = vpop.f32.mrf.mxu0
        %v495 = vadd.f32 %v330, %v494
        %496 = vmatprep.mubr.bf16.mxu0 0
        %497 = vmatmul.mubr.bf16.gmra.mxu0 %v414
        %v498 = vpop.f32.mrf.mxu0
        %v499 = vadd.f32 %v326, %v498
        %v500 = vpop.f32.mrf.mxu0
        %v501 = vadd.f32 %v330, %v500
        %v502 = vpop.f32.mrf.mxu0
        %v503 = vadd.f32 %v326, %v502
        %v504 = vpop.f32.mrf.mxu0
        %v505 = vadd.f32 %v330, %v504
        %506 = vmatprep.mubr.bf16.mxu0 0
        %507 = vmatmul.mubr.bf16.gmra.mxu0 %v417
        %v508 = vpop.f32.mrf.mxu0
        %v509 = vadd.f32 %v326, %v508
        %v510 = vpop.f32.mrf.mxu0
        %v511 = vadd.f32 %v330, %v510
        %v512 = vpop.f32.mrf.mxu0
        %v513 = vadd.f32 %v326, %v512
        %v514 = vpop.f32.mrf.mxu0
        %v515 = vadd.f32 %v330, %v514
        %516 = vmatprep.mubr.bf16.mxu0 0
        %517 = vmatmul.mubr.bf16.gmra.mxu0 %v420
        %v518 = vpop.f32.mrf.mxu0
        %v519 = vadd.f32 %v326, %v518
        %v520 = vpop.f32.mrf.mxu0
        %v521 = vadd.f32 %v330, %v520
        %v522 = vpop.f32.mrf.mxu0
        %v523 = vadd.f32 %v326, %v522
        %v524 = vpop.f32.mrf.mxu0
        %v525 = vadd.f32 %v330, %v524
        %526 = vmatprep.mubr.bf16.mxu0 0
        %527 = vmatmul.mubr.bf16.gmra.mxu0 %v423
        %v528 = vpop.f32.mrf.mxu0
        %v529 = vadd.f32 %v326, %v528
        %v530 = vpop.f32.mrf.mxu0
        %v531 = vadd.f32 %v330, %v530
        %v532 = vpop.f32.mrf.mxu0
        %v533 = vadd.f32 %v326, %v532
        %v534 = vpop.f32.mrf.mxu0
        %v535 = vadd.f32 %v330, %v534
        %536 = vmatprep.mubr.bf16.mxu0 0
        %537 = vmatmul.mubr.bf16.gmra.mxu0 %v426
        %v538 = vpop.f32.mrf.mxu0
        %v539 = vadd.f32 %v326, %v538
        %v540 = vpop.f32.mrf.mxu0
        %v541 = vadd.f32 %v330, %v540
        %v542 = vpop.f32.mrf.mxu0
        %v543 = vadd.f32 %v326, %v542
        %v544 = vpop.f32.mrf.mxu0
        %v545 = vadd.f32 %v330, %v544
        %546 = vmatprep.mubr.bf16.mxu0 0
        %547 = vmatmul.mubr.bf16.gmra.mxu0 %v429
        %v548 = vpop.f32.mrf.mxu0
        %v549 = vadd.f32 %v326, %v548
        %v550 = vpop.f32.mrf.mxu0
        %v551 = vadd.f32 %v330, %v550
        %v552 = vpop.f32.mrf.mxu0
        %v553 = vadd.f32 %v326, %v552
        %v554 = vpop.f32.mrf.mxu0
        %v555 = vadd.f32 %v330, %v554
        %556 = vmatprep.mubr.bf16.mxu0 0
        %557 = vmatmul.mubr.bf16.gmra.mxu0 %v432
        %v558 = vpop.f32.mrf.mxu0
        %v559 = vadd.f32 %v326, %v558
        %v560 = vpop.f32.mrf.mxu0
        %v561 = vadd.f32 %v330, %v560
        %v562 = vpop.f32.mrf.mxu0
        %v563 = vadd.f32 %v326, %v562
        %v564 = vpop.f32.mrf.mxu0
        %v565 = vadd.f32 %v330, %v564
        %566 = vdwg.mxu0
        %v567 = vmax.f32 %v469, 0.0
        %v568 = vmax.f32 %v471, 0.0
        %v569 = vmax.f32 %v473, 0.0
        %v570 = vmax.f32 %v475, 0.0
        %v571 = vmax.f32 %v479, 0.0
        %v572 = vmax.f32 %v481, 0.0
        %v573 = vmax.f32 %v483, 0.0
        %v574 = vmax.f32 %v485, 0.0
        %v575 = vmax.f32 %v489, 0.0
        %v576 = vmax.f32 %v491, 0.0
        %v577 = vmax.f32 %v493, 0.0
        %v578 = vmax.f32 %v495, 0.0
        %v579 = vmax.f32 %v499, 0.0
        %v580 = vmax.f32 %v501, 0.0
        %v581 = vmax.f32 %v503, 0.0
        %v582 = vmax.f32 %v505, 0.0
        %v583 = vmax.f32 %v509, 0.0
        %v584 = vmax.f32 %v511, 0.0
        %v585 = vmax.f32 %v513, 0.0
        %v586 = vmax.f32 %v515, 0.0
        %v587 = vmax.f32 %v519, 0.0
        %v588 = vmax.f32 %v521, 0.0
        %v589 = vmax.f32 %v523, 0.0
        %v590 = vmax.f32 %v525, 0.0
        %v591 = vmax.f32 %v529, 0.0
        %v592 = vmax.f32 %v531, 0.0
        %v593 = vmax.f32 %v533, 0.0
        %v594 = vmax.f32 %v535, 0.0
        %v595 = vmax.f32 %v539, 0.0
        %v596 = vmax.f32 %v541, 0.0
        %v597 = vmax.f32 %v543, 0.0
        %v598 = vmax.f32 %v545, 0.0
        %v599 = vmax.f32 %v549, 0.0
        %v600 = vmax.f32 %v551, 0.0
        %v601 = vmax.f32 %v553, 0.0
        %v602 = vmax.f32 %v555, 0.0
        %v603 = vmax.f32 %v559, 0.0
        %v604 = vmax.f32 %v561, 0.0
        %v605 = vmax.f32 %v563, 0.0
        %v606 = vmax.f32 %v565, 0.0
        %v607 = vmin.f32 %v567, 6.0
        %v608 = vmin.f32 %v568, 6.0
        %v609 = vmin.f32 %v569, 6.0
        %v610 = vmin.f32 %v570, 6.0
        %v611 = vmin.f32 %v571, 6.0
        %v612 = vmin.f32 %v572, 6.0
        %v613 = vmin.f32 %v573, 6.0
        %v614 = vmin.f32 %v574, 6.0
        %v615 = vmin.f32 %v575, 6.0
        %v616 = vmin.f32 %v576, 6.0
        %v617 = vmin.f32 %v577, 6.0
        %v618 = vmin.f32 %v578, 6.0
        %v619 = vmin.f32 %v579, 6.0
        %v620 = vmin.f32 %v580, 6.0
        %v621 = vmin.f32 %v581, 6.0
        %v622 = vmin.f32 %v582, 6.0
        %v623 = vmin.f32 %v583, 6.0
        %v624 = vmin.f32 %v584, 6.0
        %v625 = vmin.f32 %v585, 6.0
        %v626 = vmin.f32 %v586, 6.0
        %v627 = vmin.f32 %v587, 6.0
        %v628 = vmin.f32 %v588, 6.0
        %v629 = vmin.f32 %v589, 6.0
        %v630 = vmin.f32 %v590, 6.0
        %v631 = vmin.f32 %v591, 6.0
        %v632 = vmin.f32 %v592, 6.0
        %v633 = vmin.f32 %v593, 6.0
        %v634 = vmin.f32 %v594, 6.0
        %v635 = vmin.f32 %v595, 6.0
        %v636 = vmin.f32 %v596, 6.0
        %v637 = vmin.f32 %v597, 6.0
        %v638 = vmin.f32 %v598, 6.0
        %v639 = vmin.f32 %v599, 6.0
        %v640 = vmin.f32 %v600, 6.0
        %v641 = vmin.f32 %v601, 6.0
        %v642 = vmin.f32 %v602, 6.0
        %v643 = vmin.f32 %v603, 6.0
        %v644 = vmin.f32 %v604, 6.0
        %v645 = vmin.f32 %v605, 6.0
        %v646 = vmin.f32 %v606, 6.0
        %v647 = vstv %s293
        %v648 = vadd.s32 %v647, 1
        %v649 = vadd.s32 %v647, 2
        %v650 = vadd.s32 %v647, 3
        %v651 = vadd.s32 %v647, 4
        %v652 = vadd.s32 %v647, 5
        %v653 = vadd.s32 %v647, 6
        %v654 = vadd.s32 %v647, 7
        %v655 = vadd.s32 %v647, 8
        %v656 = vadd.s32 %v647, 9
        %vm657 = vcmp.ge.s32.totalorder %v647, 1
        %vm658 = vcmp.ge.s32.totalorder %v648, 1
        %vm659 = vcmp.ge.s32.totalorder %v649, 1
        %vm660 = vcmp.ge.s32.totalorder %v650, 1
        %vm661 = vcmp.ge.s32.totalorder %v651, 1
        %vm662 = vcmp.ge.s32.totalorder %v652, 1
        %vm663 = vcmp.ge.s32.totalorder %v653, 1
        %vm664 = vcmp.ge.s32.totalorder %v654, 1
        %vm665 = vcmp.ge.s32.totalorder %v655, 1
        %vm666 = vcmp.ge.s32.totalorder %v656, 1
        %vm667 = vcmp.le.s32.totalorder %v647, 16
        %vm668 = vcmp.le.s32.totalorder %v648, 16
        %vm669 = vcmp.le.s32.totalorder %v649, 16
        %vm670 = vcmp.le.s32.totalorder %v650, 16
        %vm671 = vcmp.le.s32.totalorder %v651, 16
        %vm672 = vcmp.le.s32.totalorder %v652, 16
        %vm673 = vcmp.le.s32.totalorder %v653, 16
        %vm674 = vcmp.le.s32.totalorder %v654, 16
        %vm675 = vcmp.le.s32.totalorder %v655, 16
        %vm676 = vcmp.le.s32.totalorder %v656, 16
        %vm677 = vmand %vm657, %vm667
        %vm678 = vmand %vm658, %vm668
        %vm679 = vmand %vm659, %vm669
        %vm680 = vmand %vm660, %vm670
        %vm681 = vmand %vm661, %vm671
        %vm682 = vmand %vm662, %vm672
        %vm683 = vmand %vm663, %vm673
        %vm684 = vmand %vm664, %vm674
        %vm685 = vmand %vm665, %vm675
        %vm686 = vmand %vm666, %vm676
        %v687 = vsel %vm677, 1, 0
        %v688 = vsel %vm678, 1, 0
        %v689 = vsel %vm679, 1, 0
        %v690 = vsel %vm680, 1, 0
        %v691 = vsel %vm681, 1, 0
        %v692 = vsel %vm682, 1, 0
        %v693 = vsel %vm683, 1, 0
        %v694 = vsel %vm684, 1, 0
        %v695 = vsel %vm685, 1, 0
        %v696 = vsel %vm686, 1, 0
        %vm697 = vcmp.eq.s32.totalorder %v687, 1
        %vm698 = vcmp.eq.s32.totalorder %v688, 1
        %vm699 = vcmp.eq.s32.totalorder %v689, 1
        %vm700 = vcmp.eq.s32.totalorder %v690, 1
        %vm701 = vcmp.eq.s32.totalorder %v691, 1
        %vm702 = vcmp.eq.s32.totalorder %v692, 1
        %vm703 = vcmp.eq.s32.totalorder %v693, 1
        %vm704 = vcmp.eq.s32.totalorder %v694, 1
        %vm705 = vcmp.eq.s32.totalorder %v695, 1
        %vm706 = vcmp.eq.s32.totalorder %v696, 1
        %v707 = vsel %vm697, %v607, 0.0
        %v708 = vsel %vm697, %v608, 0.0
        %v709 = vsel %vm697, %v609, 0.0
        %v710 = vsel %vm697, %v610, 0.0
        %v711 = vsel %vm698, %v611, 0.0
        %v712 = vsel %vm698, %v612, 0.0
        %v713 = vsel %vm698, %v613, 0.0
        %v714 = vsel %vm698, %v614, 0.0
        %v715 = vsel %vm699, %v615, 0.0
        %v716 = vsel %vm699, %v616, 0.0
        %v717 = vsel %vm699, %v617, 0.0
        %v718 = vsel %vm699, %v618, 0.0
        %v719 = vsel %vm700, %v619, 0.0
        %v720 = vsel %vm700, %v620, 0.0
        %v721 = vsel %vm700, %v621, 0.0
        %v722 = vsel %vm700, %v622, 0.0
        %v723 = vsel %vm701, %v623, 0.0
        %v724 = vsel %vm701, %v624, 0.0
        %v725 = vsel %vm701, %v625, 0.0
        %v726 = vsel %vm701, %v626, 0.0
        %v727 = vsel %vm702, %v627, 0.0
        %v728 = vsel %vm702, %v628, 0.0
        %v729 = vsel %vm702, %v629, 0.0
        %v730 = vsel %vm702, %v630, 0.0
        %v731 = vsel %vm703, %v631, 0.0
        %v732 = vsel %vm703, %v632, 0.0
        %v733 = vsel %vm703, %v633, 0.0
        %v734 = vsel %vm703, %v634, 0.0
        %v735 = vsel %vm704, %v635, 0.0
        %v736 = vsel %vm704, %v636, 0.0
        %v737 = vsel %vm704, %v637, 0.0
        %v738 = vsel %vm704, %v638, 0.0
        %v739 = vsel %vm705, %v639, 0.0
        %v740 = vsel %vm705, %v640, 0.0
        %v741 = vsel %vm705, %v641, 0.0
        %v742 = vsel %vm705, %v642, 0.0
        %v743 = vsel %vm706, %v643, 0.0
        %v744 = vsel %vm706, %v644, 0.0
        %v745 = vsel %vm706, %v645, 0.0
        %v746 = vsel %vm706, %v646, 0.0
        %v747 = vpack.c.bf16 %v709, %v707
        %v748 = vpack.c.bf16 %v710, %v708
        %v749 = vpack.c.bf16 %v713, %v711
        %v750 = vpack.c.bf16 %v714, %v712
        %v751 = vpack.c.bf16 %v717, %v715
        %v752 = vpack.c.bf16 %v718, %v716
        %v753 = vpack.c.bf16 %v721, %v719
        %v754 = vpack.c.bf16 %v722, %v720
        %v755 = vpack.c.bf16 %v725, %v723
        %v756 = vpack.c.bf16 %v726, %v724
        %v757 = vpack.c.bf16 %v729, %v727
        %v758 = vpack.c.bf16 %v730, %v728
        %v759 = vpack.c.bf16 %v733, %v731
        %v760 = vpack.c.bf16 %v734, %v732
        %v761 = vpack.c.bf16 %v737, %v735
        %v762 = vpack.c.bf16 %v738, %v736
        %v763 = vpack.c.bf16 %v741, %v739
        %v764 = vpack.c.bf16 %v742, %v740
        %v765 = vpack.c.bf16 %v745, %v743
        %v766 = vpack.c.bf16 %v746, %v744
        %v768 = vshrl.u32 %v747, 16
        %v770 = vrot.slane %v768, 7
        %v771 = vshll.u32 %v747, 16
        %v773 = vor.u32 %v770, %v771
        %v775 = vshrl.u32 %v748, 16
        %v777 = vrot.slane %v775, 7
        %v778 = vshll.u32 %v748, 16
        %v780 = vor.u32 %v777, %v778
        %v782 = vshrl.u32 %v749, 16
        %v784 = vrot.slane %v782, 7
        %v785 = vshll.u32 %v749, 16
        %v787 = vor.u32 %v784, %v785
        %v789 = vshrl.u32 %v750, 16
        %v791 = vrot.slane %v789, 7
        %v792 = vshll.u32 %v750, 16
        %v794 = vor.u32 %v791, %v792
        %v796 = vshrl.u32 %v751, 16
        %v798 = vrot.slane %v796, 7
        %v799 = vshll.u32 %v751, 16
        %v801 = vor.u32 %v798, %v799
        %v803 = vshrl.u32 %v752, 16
        %v805 = vrot.slane %v803, 7
        %v806 = vshll.u32 %v752, 16
        %v808 = vor.u32 %v805, %v806
        %v810 = vshrl.u32 %v753, 16
        %v812 = vrot.slane %v810, 7
        %v813 = vshll.u32 %v753, 16
        %v815 = vor.u32 %v812, %v813
        %v817 = vshrl.u32 %v754, 16
        %v819 = vrot.slane %v817, 7
        %v820 = vshll.u32 %v754, 16
        %v822 = vor.u32 %v819, %v820
        %v824 = vshrl.u32 %v755, 16
        %v826 = vrot.slane %v824, 7
        %v827 = vshll.u32 %v755, 16
        %v829 = vor.u32 %v826, %v827
        %v831 = vshrl.u32 %v756, 16
        %v833 = vrot.slane %v831, 7
        %v834 = vshll.u32 %v756, 16
        %v836 = vor.u32 %v833, %v834
        %v838 = vshrl.u32 %v757, 16
        %v840 = vrot.slane %v838, 7
        %v841 = vshll.u32 %v757, 16
        %v843 = vor.u32 %v840, %v841
        %v845 = vshrl.u32 %v758, 16
        %v847 = vrot.slane %v845, 7
        %v848 = vshll.u32 %v758, 16
        %v850 = vor.u32 %v847, %v848
        %v852 = vshrl.u32 %v759, 16
        %v854 = vrot.slane %v852, 7
        %v855 = vshll.u32 %v759, 16
        %v857 = vor.u32 %v854, %v855
        %v859 = vshrl.u32 %v760, 16
        %v861 = vrot.slane %v859, 7
        %v862 = vshll.u32 %v760, 16
        %v864 = vor.u32 %v861, %v862
        %v866 = vshrl.u32 %v761, 16
        %v868 = vrot.slane %v866, 7
        %v869 = vshll.u32 %v761, 16
        %v871 = vor.u32 %v868, %v869
        %v873 = vshrl.u32 %v762, 16
        %v875 = vrot.slane %v873, 7
        %v876 = vshll.u32 %v762, 16
        %v878 = vor.u32 %v875, %v876
        %v880 = vshrl.u32 %v763, 16
        %v882 = vrot.slane %v880, 7
        %v883 = vshll.u32 %v763, 16
        %v885 = vor.u32 %v882, %v883
        %v887 = vshrl.u32 %v764, 16
        %v889 = vrot.slane %v887, 7
        %v890 = vshll.u32 %v764, 16
        %v892 = vor.u32 %v889, %v890
        %v894 = vshrl.u32 %v765, 16
        %v896 = vrot.slane %v894, 7
        %v897 = vshll.u32 %v765, 16
        %v899 = vor.u32 %v896, %v897
        %v901 = vshrl.u32 %v766, 16
        %v903 = vrot.slane %v901, 7
        %v904 = vshll.u32 %v766, 16
        %v906 = vor.u32 %v903, %v904
        %vm947 = vcmask 1040384
        %vm948 = vsmask.f32 256
        %vm949 = vmand %vm947, %vm948
        %v950 = vsel %vm949, 0, %v773
        %v951 = vsel %vm949, 0, %v780
        %v952 = vsel %vm949, 0, %v787
        %v953 = vsel %vm949, 0, %v794
        %v954 = vsel %vm949, 0, %v801
        %v955 = vsel %vm949, 0, %v808
        %v956 = vsel %vm949, 0, %v815
        %v957 = vsel %vm949, 0, %v822
        %v958 = vsel %vm949, 0, %v829
        %v959 = vsel %vm949, 0, %v836
        %v960 = vsel %vm949, 0, %v843
        %v961 = vsel %vm949, 0, %v850
        %v962 = vsel %vm949, 0, %v857
        %v963 = vsel %vm949, 0, %v864
        %v964 = vsel %vm949, 0, %v871
        %v965 = vsel %vm949, 0, %v878
        %v966 = vsel %vm949, 0, %v885
        %v967 = vsel %vm949, 0, %v892
        %v968 = vsel %vm949, 0, %v899
        %v969 = vsel %vm949, 0, %v906
        %v970 = vsel %vm949, %v770, 0
        %v971 = vsel %vm949, %v777, 0
        %v972 = vsel %vm949, %v784, 0
        %v973 = vsel %vm949, %v791, 0
        %v974 = vsel %vm949, %v798, 0
        %v975 = vsel %vm949, %v805, 0
        %v976 = vsel %vm949, %v812, 0
        %v977 = vsel %vm949, %v819, 0
        %v978 = vsel %vm949, %v826, 0
        %v979 = vsel %vm949, %v833, 0
        %v980 = vsel %vm949, %v840, 0
        %v981 = vsel %vm949, %v847, 0
        %v982 = vsel %vm949, %v854, 0
        %v983 = vsel %vm949, %v861, 0
        %v984 = vsel %vm949, %v868, 0
        %v985 = vsel %vm949, %v875, 0
        %v986 = vsel %vm949, %v882, 0
        %v987 = vsel %vm949, %v889, 0
        %v988 = vsel %vm949, %v896, 0
        %v989 = vsel %vm949, %v903, 0
        %v1030 = vunpack.c.l.b16 %v950
        %v1031 = vunpack.c.l.b16 %v951
        %v1032 = vunpack.c.h.b16 %v950
        %v1033 = vunpack.c.h.b16 %v951
        %v1034 = vunpack.c.l.b16 %v970
        %v1035 = vunpack.c.l.b16 %v971
        %v1036 = vunpack.c.l.b16 %v952
        %v1037 = vunpack.c.l.b16 %v953
        %v1038 = vunpack.c.h.b16 %v952
        %v1039 = vunpack.c.h.b16 %v953
        %v1040 = vunpack.c.l.b16 %v972
        %v1041 = vunpack.c.l.b16 %v973
        %v1042 = vunpack.c.l.b16 %v954
        %v1043 = vunpack.c.l.b16 %v955
        %v1044 = vunpack.c.h.b16 %v954
        %v1045 = vunpack.c.h.b16 %v955
        %v1046 = vunpack.c.l.b16 %v974
        %v1047 = vunpack.c.l.b16 %v975
        %v1048 = vunpack.c.l.b16 %v956
        %v1049 = vunpack.c.l.b16 %v957
        %v1050 = vunpack.c.h.b16 %v956
        %v1051 = vunpack.c.h.b16 %v957
        %v1052 = vunpack.c.l.b16 %v976
        %v1053 = vunpack.c.l.b16 %v977
        %v1054 = vunpack.c.l.b16 %v958
        %v1055 = vunpack.c.l.b16 %v959
        %v1056 = vunpack.c.h.b16 %v958
        %v1057 = vunpack.c.h.b16 %v959
        %v1058 = vunpack.c.l.b16 %v978
        %v1059 = vunpack.c.l.b16 %v979
        %v1060 = vunpack.c.l.b16 %v960
        %v1061 = vunpack.c.l.b16 %v961
        %v1062 = vunpack.c.h.b16 %v960
        %v1063 = vunpack.c.h.b16 %v961
        %v1064 = vunpack.c.l.b16 %v980
        %v1065 = vunpack.c.l.b16 %v981
        %v1066 = vunpack.c.l.b16 %v962
        %v1067 = vunpack.c.l.b16 %v963
        %v1068 = vunpack.c.h.b16 %v962
        %v1069 = vunpack.c.h.b16 %v963
        %v1070 = vunpack.c.l.b16 %v982
        %v1071 = vunpack.c.l.b16 %v983
        %v1072 = vunpack.c.l.b16 %v964
        %v1073 = vunpack.c.l.b16 %v965
        %v1074 = vunpack.c.h.b16 %v964
        %v1075 = vunpack.c.h.b16 %v965
        %v1076 = vunpack.c.l.b16 %v984
        %v1077 = vunpack.c.l.b16 %v985
        %v1078 = vunpack.c.l.b16 %v966
        %v1079 = vunpack.c.l.b16 %v967
        %v1080 = vunpack.c.h.b16 %v966
        %v1081 = vunpack.c.h.b16 %v967
        %v1082 = vunpack.c.l.b16 %v986
        %v1083 = vunpack.c.l.b16 %v987
        %v1084 = vunpack.c.l.b16 %v968
        %v1085 = vunpack.c.l.b16 %v969
        %v1086 = vunpack.c.h.b16 %v968
        %v1087 = vunpack.c.h.b16 %v969
        %v1088 = vunpack.c.l.b16 %v988
        %v1089 = vunpack.c.l.b16 %v989
        %v1090 = vpack.c.b16 %v1031, %v1030
        %v1091 = vpack.c.b16 %v1033, %v1032
        %v1092 = vpack.c.b16 %v1035, %v1034
        %v1093 = vpack.c.b16 %v1037, %v1036
        %v1094 = vpack.c.b16 %v1039, %v1038
        %v1095 = vpack.c.b16 %v1041, %v1040
        %v1096 = vpack.c.b16 %v1043, %v1042
        %v1097 = vpack.c.b16 %v1045, %v1044
        %v1098 = vpack.c.b16 %v1047, %v1046
        %v1099 = vpack.c.b16 %v1049, %v1048
        %v1100 = vpack.c.b16 %v1051, %v1050
        %v1101 = vpack.c.b16 %v1053, %v1052
        %v1102 = vpack.c.b16 %v1055, %v1054
        %v1103 = vpack.c.b16 %v1057, %v1056
        %v1104 = vpack.c.b16 %v1059, %v1058
        %v1105 = vpack.c.b16 %v1061, %v1060
        %v1106 = vpack.c.b16 %v1063, %v1062
        %v1107 = vpack.c.b16 %v1065, %v1064
        %v1108 = vpack.c.b16 %v1067, %v1066
        %v1109 = vpack.c.b16 %v1069, %v1068
        %v1110 = vpack.c.b16 %v1071, %v1070
        %v1111 = vpack.c.b16 %v1073, %v1072
        %v1112 = vpack.c.b16 %v1075, %v1074
        %v1113 = vpack.c.b16 %v1077, %v1076
        %v1114 = vpack.c.b16 %v1079, %v1078
        %v1115 = vpack.c.b16 %v1081, %v1080
        %v1116 = vpack.c.b16 %v1083, %v1082
        %v1117 = vpack.c.b16 %v1085, %v1084
        %v1118 = vpack.c.b16 %v1087, %v1086
        %v1119 = vpack.c.b16 %v1089, %v1088
        %vm1150 = vcmask 1043456
        %vm1151 = vcmask 523268
        %vm1152 = vmor %vm1151, %vm1150
        %1153 = vst.msk [vmem:[#allocation2] sm:$0xff] %vm1152, %v1090
        %1154 = vst.msk [vmem:[#allocation2 + $0x8] sm:$0xff] %vm1152, %v1091
        %vm1155 = vcmask 1040384
        %vm1156 = vcmask 520196
        %vm1157 = vmor %vm1156, %vm1155
        %1158 = vst.msk [vmem:[#allocation2 + $0x10] sm:$0x11] %vm1157, %v1092
        %1159 = vst.msk [vmem:[#allocation2 + $0x18] sm:$0xff] %vm1152, %v1093
        %1160 = vst.msk [vmem:[#allocation2 + $0x20] sm:$0xff] %vm1152, %v1094
        %1161 = vst.msk [vmem:[#allocation2 + $0x28] sm:$0x11] %vm1157, %v1095
        %1162 = vst.msk [vmem:[#allocation2 + $0x30] sm:$0xff] %vm1152, %v1096
        %1163 = vst.msk [vmem:[#allocation2 + $0x38] sm:$0xff] %vm1152, %v1097
        %1164 = vst.msk [vmem:[#allocation2 + $0x40] sm:$0x11] %vm1157, %v1098
        %1165 = vst.msk [vmem:[#allocation2 + $0x48] sm:$0xff] %vm1152, %v1099
        %1166 = vst.msk [vmem:[#allocation2 + $0x50] sm:$0xff] %vm1152, %v1100
        %1167 = vst.msk [vmem:[#allocation2 + $0x58] sm:$0x11] %vm1157, %v1101
        %1168 = vst.msk [vmem:[#allocation2 + $0x60] sm:$0xff] %vm1152, %v1102
        %1169 = vst.msk [vmem:[#allocation2 + $0x68] sm:$0xff] %vm1152, %v1103
        %1170 = vst.msk [vmem:[#allocation2 + $0x70] sm:$0x11] %vm1157, %v1104
        %1171 = vst.msk [vmem:[#allocation2 + $0x78] sm:$0xff] %vm1152, %v1105
        %1172 = vst.msk [vmem:[#allocation2 + $0x80] sm:$0xff] %vm1152, %v1106
        %1173 = vst.msk [vmem:[#allocation2 + $0x88] sm:$0x11] %vm1157, %v1107
        %1174 = vst.msk [vmem:[#allocation2 + $0x90] sm:$0xff] %vm1152, %v1108
        %1175 = vst.msk [vmem:[#allocation2 + $0x98] sm:$0xff] %vm1152, %v1109
        %1176 = vst.msk [vmem:[#allocation2 + $0xa0] sm:$0x11] %vm1157, %v1110
        %1177 = vst.msk [vmem:[#allocation2 + $0xa8] sm:$0xff] %vm1152, %v1111
        %1178 = vst.msk [vmem:[#allocation2 + $0xb0] sm:$0xff] %vm1152, %v1112
        %1179 = vst.msk [vmem:[#allocation2 + $0xb8] sm:$0x11] %vm1157, %v1113
        %1180 = vst.msk [vmem:[#allocation2 + $0xc0] sm:$0xff] %vm1152, %v1114
        %1181 = vst.msk [vmem:[#allocation2 + $0xc8] sm:$0xff] %vm1152, %v1115
        %1182 = vst.msk [vmem:[#allocation2 + $0xd0] sm:$0x11] %vm1157, %v1116
        %1183 = vst.msk [vmem:[#allocation2 + $0xd8] sm:$0xff] %vm1152, %v1117
        %1184 = vst.msk [vmem:[#allocation2 + $0xe0] sm:$0xff] %vm1152, %v1118
        %1185 = vst.msk [vmem:[#allocation2 + $0xe8] sm:$0x11] %vm1157, %v1119
        %v1186 = vld [vmem:[%s3] sm:$0xff]
        %v1187 = vld [vmem:[%s3 + $0x8] sm:$0xff]
        %v1188 = vld [vmem:[%s3 + $0x10] sm:$0x1]
        %v1189 = vld [vmem:[%s3 + $0x18] sm:$0x1]
        %v1190 = vld [vmem:[%s4] sm:$0x3]
        %v1191 = vld [vmem:[#allocation2] sm:$0xff]
        %v1192 = vld [vmem:[#allocation2 + $0x8] sm:$0xff]
        %v1193 = vld [vmem:[#allocation2 + $0x18] sm:$0xff]
        %v1194 = vld [vmem:[#allocation2 + $0x20] sm:$0xff]
        %v1195 = vld [vmem:[#allocation2 + $0x30] sm:$0xff]
        %v1196 = vld [vmem:[#allocation2 + $0x38] sm:$0xff]
        %v1197 = vld [vmem:[#allocation2 + $0x48] sm:$0xff]
        %v1198 = vld [vmem:[#allocation2 + $0x50] sm:$0xff]
        %v1199 = vld [vmem:[#allocation2 + $0x60] sm:$0xff]
        %v1200 = vld [vmem:[#allocation2 + $0x68] sm:$0xff]
        %v1201 = vld [vmem:[#allocation2 + $0x78] sm:$0xff]
        %v1202 = vld [vmem:[#allocation2 + $0x80] sm:$0xff]
        %v1203 = vld [vmem:[#allocation2 + $0x90] sm:$0xff]
        %v1204 = vld [vmem:[#allocation2 + $0x98] sm:$0xff]
        %v1205 = vld [vmem:[#allocation2 + $0xa8] sm:$0xff]
        %v1206 = vld [vmem:[#allocation2 + $0xb0] sm:$0xff]
        %v1207 = vunpack.c.l.bf16 %v1191
        %v1208 = vunpack.c.h.bf16 %v1191
        %v1209 = vunpack.c.l.bf16 %v1192
        %v1210 = vunpack.c.h.bf16 %v1192
        %v1211 = vunpack.c.l.bf16 %v1193
        %v1212 = vunpack.c.h.bf16 %v1193
        %v1213 = vunpack.c.l.bf16 %v1194
        %v1214 = vunpack.c.h.bf16 %v1194
        %v1215 = vunpack.c.l.bf16 %v1195
        %v1216 = vunpack.c.h.bf16 %v1195
        %v1217 = vunpack.c.l.bf16 %v1196
        %v1218 = vunpack.c.h.bf16 %v1196
        %v1219 = vunpack.c.l.bf16 %v1197
        %v1220 = vunpack.c.h.bf16 %v1197
        %v1221 = vunpack.c.l.bf16 %v1198
        %v1222 = vunpack.c.h.bf16 %v1198
        %v1223 = vunpack.c.l.bf16 %v1199
        %v1224 = vunpack.c.h.bf16 %v1199
        %v1225 = vunpack.c.l.bf16 %v1200
        %v1226 = vunpack.c.h.bf16 %v1200
        %v1227 = vunpack.c.l.bf16 %v1201
        %v1228 = vunpack.c.h.bf16 %v1201
        %v1229 = vunpack.c.l.bf16 %v1202
        %v1230 = vunpack.c.h.bf16 %v1202
        %v1231 = vunpack.c.l.bf16 %v1203
        %v1232 = vunpack.c.h.bf16 %v1203
        %v1233 = vunpack.c.l.bf16 %v1204
        %v1234 = vunpack.c.h.bf16 %v1204
        %v1235 = vunpack.c.l.bf16 %v1205
        %v1236 = vunpack.c.h.bf16 %v1205
        %v1237 = vunpack.c.l.bf16 %v1206
        %v1238 = vunpack.c.h.bf16 %v1206
        %v1239 = vlaneseq
        %v1240 = vshrl.u32 %v1239, 7
        %v1241 = vsub.s32 0, %v1240
        %v1242 = vrot.slane %v1186, %v1241
        %v1243 = vlaneseq
        %v1244 = vshrl.u32 %v1243, 7
        %v1245 = vsub.s32 0, %v1244
        %v1246 = vrot.slane %v1187, %v1245
        %v1247 = vmul.f32 %v1207, %v1242
        %v1248 = vmul.f32 %v1208, %v1246
        %v1249 = vmul.f32 %v1209, %v1242
        %v1250 = vmul.f32 %v1210, %v1246
        %v1251 = vmul.f32 %v1211, %v1242
        %v1252 = vmul.f32 %v1212, %v1246
        %v1253 = vmul.f32 %v1213, %v1242
        %v1254 = vmul.f32 %v1214, %v1246
        %v1255 = vmul.f32 %v1215, %v1242
        %v1256 = vmul.f32 %v1216, %v1246
        %v1257 = vmul.f32 %v1217, %v1242
        %v1258 = vmul.f32 %v1218, %v1246
        %v1259 = vmul.f32 %v1219, %v1242
        %v1260 = vmul.f32 %v1220, %v1246
        %v1261 = vmul.f32 %v1221, %v1242
        %v1262 = vmul.f32 %v1222, %v1246
        %v1263 = vmul.f32 %v1223, %v1242
        %v1264 = vmul.f32 %v1224, %v1246
        %v1265 = vmul.f32 %v1225, %v1242
        %v1266 = vmul.f32 %v1226, %v1246
        %v1267 = vmul.f32 %v1227, %v1242
        %v1268 = vmul.f32 %v1228, %v1246
        %v1269 = vmul.f32 %v1229, %v1242
        %v1270 = vmul.f32 %v1230, %v1246
        %v1271 = vmul.f32 %v1231, %v1242
        %v1272 = vmul.f32 %v1232, %v1246
        %v1273 = vmul.f32 %v1233, %v1242
        %v1274 = vmul.f32 %v1234, %v1246
        %v1275 = vmul.f32 %v1235, %v1242
        %v1276 = vmul.f32 %v1236, %v1246
        %v1277 = vmul.f32 %v1237, %v1242
        %v1278 = vmul.f32 %v1238, %v1246
        %v1279 = vadd.f32 %v1247, 0.0
        %v1280 = vadd.f32 %v1248, 0.0
        %v1281 = vadd.f32 %v1249, 0.0
        %v1282 = vadd.f32 %v1250, 0.0
        %v1283 = vadd.f32 %v1251, 0.0
        %v1284 = vadd.f32 %v1252, 0.0
        %v1285 = vadd.f32 %v1253, 0.0
        %v1286 = vadd.f32 %v1254, 0.0
        %v1287 = vadd.f32 %v1255, 0.0
        %v1288 = vadd.f32 %v1256, 0.0
        %v1289 = vadd.f32 %v1257, 0.0
        %v1290 = vadd.f32 %v1258, 0.0
        %v1291 = vadd.f32 %v1259, 0.0
        %v1292 = vadd.f32 %v1260, 0.0
        %v1293 = vadd.f32 %v1261, 0.0
        %v1294 = vadd.f32 %v1262, 0.0
        %v1295 = vadd.f32 %v1263, 0.0
        %v1296 = vadd.f32 %v1264, 0.0
        %v1297 = vadd.f32 %v1265, 0.0
        %v1298 = vadd.f32 %v1266, 0.0
        %v1299 = vadd.f32 %v1267, 0.0
        %v1300 = vadd.f32 %v1268, 0.0
        %v1301 = vadd.f32 %v1269, 0.0
        %v1302 = vadd.f32 %v1270, 0.0
        %v1303 = vadd.f32 %v1271, 0.0
        %v1304 = vadd.f32 %v1272, 0.0
        %v1305 = vadd.f32 %v1273, 0.0
        %v1306 = vadd.f32 %v1274, 0.0
        %v1307 = vadd.f32 %v1275, 0.0
        %v1308 = vadd.f32 %v1276, 0.0
        %v1309 = vadd.f32 %v1277, 0.0
        %v1310 = vadd.f32 %v1278, 0.0
        %v1311 = vld [vmem:[#allocation2 + $0x10] sm:$0x11]
        %v1312 = vld [vmem:[#allocation2 + $0x28] sm:$0x11]
        %v1313 = vld [vmem:[#allocation2 + $0x40] sm:$0x11]
        %v1314 = vld [vmem:[#allocation2 + $0x58] sm:$0x11]
        %v1315 = vld [vmem:[#allocation2 + $0x70] sm:$0x11]
        %v1316 = vld [vmem:[#allocation2 + $0x88] sm:$0x11]
        %v1317 = vld [vmem:[#allocation2 + $0xa0] sm:$0x11]
        %v1318 = vld [vmem:[#allocation2 + $0xb8] sm:$0x11]
        %v1319 = vunpack.c.l.bf16 %v1311
        %v1320 = vunpack.c.h.bf16 %v1311
        %v1321 = vunpack.c.l.bf16 %v1312
        %v1322 = vunpack.c.h.bf16 %v1312
        %v1323 = vunpack.c.l.bf16 %v1313
        %v1324 = vunpack.c.h.bf16 %v1313
        %v1325 = vunpack.c.l.bf16 %v1314
        %v1326 = vunpack.c.h.bf16 %v1314
        %v1327 = vunpack.c.l.bf16 %v1315
        %v1328 = vunpack.c.h.bf16 %v1315
        %v1329 = vunpack.c.l.bf16 %v1316
        %v1330 = vunpack.c.h.bf16 %v1316
        %v1331 = vunpack.c.l.bf16 %v1317
        %v1332 = vunpack.c.h.bf16 %v1317
        %v1333 = vunpack.c.l.bf16 %v1318
        %v1334 = vunpack.c.h.bf16 %v1318
        %v1335 = vlaneseq
        %v1336 = vshrl.u32 %v1335, 7
        %v1337 = vsub.s32 1, %v1336
        %v1338 = vrot.slane %v1186, %v1337
        %v1339 = vlaneseq
        %v1340 = vshrl.u32 %v1339, 7
        %v1341 = vsub.s32 1, %v1340
        %v1342 = vrot.slane %v1187, %v1341
        %v1343 = vmul.f32 %v1207, %v1338
        %v1344 = vmul.f32 %v1208, %v1342
        %v1345 = vmul.f32 %v1209, %v1338
        %v1346 = vmul.f32 %v1210, %v1342
        %v1347 = vmul.f32 %v1319, %v1338
        %v1348 = vmul.f32 %v1320, %v1342
        %v1349 = vmul.f32 %v1211, %v1338
        %v1350 = vmul.f32 %v1212, %v1342
        %v1351 = vmul.f32 %v1213, %v1338
        %v1352 = vmul.f32 %v1214, %v1342
        %v1353 = vmul.f32 %v1321, %v1338
        %v1354 = vmul.f32 %v1322, %v1342
        %v1355 = vmul.f32 %v1215, %v1338
        %v1356 = vmul.f32 %v1216, %v1342
        %v1357 = vmul.f32 %v1217, %v1338
        %v1358 = vmul.f32 %v1218, %v1342
        %v1359 = vmul.f32 %v1323, %v1338
        %v1360 = vmul.f32 %v1324, %v1342
        %v1361 = vmul.f32 %v1219, %v1338
        %v1362 = vmul.f32 %v1220, %v1342
        %v1363 = vmul.f32 %v1221, %v1338
        %v1364 = vmul.f32 %v1222, %v1342
        %v1365 = vmul.f32 %v1325, %v1338
        %v1366 = vmul.f32 %v1326, %v1342
        %v1367 = vmul.f32 %v1223, %v1338
        %v1368 = vmul.f32 %v1224, %v1342
        %v1369 = vmul.f32 %v1225, %v1338
        %v1370 = vmul.f32 %v1226, %v1342
        %v1371 = vmul.f32 %v1327, %v1338
        %v1372 = vmul.f32 %v1328, %v1342
        %v1373 = vmul.f32 %v1227, %v1338
        %v1374 = vmul.f32 %v1228, %v1342
        %v1375 = vmul.f32 %v1229, %v1338
        %v1376 = vmul.f32 %v1230, %v1342
        %v1377 = vmul.f32 %v1329, %v1338
        %v1378 = vmul.f32 %v1330, %v1342
        %v1379 = vmul.f32 %v1231, %v1338
        %v1380 = vmul.f32 %v1232, %v1342
        %v1381 = vmul.f32 %v1233, %v1338
        %v1382 = vmul.f32 %v1234, %v1342
        %v1383 = vmul.f32 %v1331, %v1338
        %v1384 = vmul.f32 %v1332, %v1342
        %v1385 = vmul.f32 %v1235, %v1338
        %v1386 = vmul.f32 %v1236, %v1342
        %v1387 = vmul.f32 %v1237, %v1338
        %v1388 = vmul.f32 %v1238, %v1342
        %v1389 = vmul.f32 %v1333, %v1338
        %v1390 = vmul.f32 %v1334, %v1342
        %vm1439 = vcmask 1046528
        %v1440 = vrot.slane %v1343, 1
        %v1441 = vrot.slane %v1345, 1
        %v1442 = vsel %vm1439, %v1440, %v1441
        %v1443 = vrot.slane %v1344, 1
        %v1444 = vrot.slane %v1346, 1
        %v1445 = vsel %vm1439, %v1443, %v1444
        %v1446 = vrot.slane %v1347, 1
        %v1447 = vsel %vm1439, %v1441, %v1446
        %v1448 = vrot.slane %v1348, 1
        %v1449 = vsel %vm1439, %v1444, %v1448
        %v1450 = vrot.slane %v1349, 1
        %v1451 = vrot.slane %v1351, 1
        %v1452 = vsel %vm1439, %v1450, %v1451
        %v1453 = vrot.slane %v1350, 1
        %v1454 = vrot.slane %v1352, 1
        %v1455 = vsel %vm1439, %v1453, %v1454
        %v1456 = vrot.slane %v1353, 1
        %v1457 = vsel %vm1439, %v1451, %v1456
        %v1458 = vrot.slane %v1354, 1
        %v1459 = vsel %vm1439, %v1454, %v1458
        %v1460 = vrot.slane %v1355, 1
        %v1461 = vrot.slane %v1357, 1
        %v1462 = vsel %vm1439, %v1460, %v1461
        %v1463 = vrot.slane %v1356, 1
        %v1464 = vrot.slane %v1358, 1
        %v1465 = vsel %vm1439, %v1463, %v1464
        %v1466 = vrot.slane %v1359, 1
        %v1467 = vsel %vm1439, %v1461, %v1466
        %v1468 = vrot.slane %v1360, 1
        %v1469 = vsel %vm1439, %v1464, %v1468
        %v1470 = vrot.slane %v1361, 1
        %v1471 = vrot.slane %v1363, 1
        %v1472 = vsel %vm1439, %v1470, %v1471
        %v1473 = vrot.slane %v1362, 1
        %v1474 = vrot.slane %v1364, 1
        %v1475 = vsel %vm1439, %v1473, %v1474
        %v1476 = vrot.slane %v1365, 1
        %v1477 = vsel %vm1439, %v1471, %v1476
        %v1478 = vrot.slane %v1366, 1
        %v1479 = vsel %vm1439, %v1474, %v1478
        %v1480 = vrot.slane %v1367, 1
        %v1481 = vrot.slane %v1369, 1
        %v1482 = vsel %vm1439, %v1480, %v1481
        %v1483 = vrot.slane %v1368, 1
        %v1484 = vrot.slane %v1370, 1
        %v1485 = vsel %vm1439, %v1483, %v1484
        %v1486 = vrot.slane %v1371, 1
        %v1487 = vsel %vm1439, %v1481, %v1486
        %v1488 = vrot.slane %v1372, 1
        %v1489 = vsel %vm1439, %v1484, %v1488
        %v1490 = vrot.slane %v1373, 1
        %v1491 = vrot.slane %v1375, 1
        %v1492 = vsel %vm1439, %v1490, %v1491
        %v1493 = vrot.slane %v1374, 1
        %v1494 = vrot.slane %v1376, 1
        %v1495 = vsel %vm1439, %v1493, %v1494
        %v1496 = vrot.slane %v1377, 1
        %v1497 = vsel %vm1439, %v1491, %v1496
        %v1498 = vrot.slane %v1378, 1
        %v1499 = vsel %vm1439, %v1494, %v1498
        %v1500 = vrot.slane %v1379, 1
        %v1501 = vrot.slane %v1381, 1
        %v1502 = vsel %vm1439, %v1500, %v1501
        %v1503 = vrot.slane %v1380, 1
        %v1504 = vrot.slane %v1382, 1
        %v1505 = vsel %vm1439, %v1503, %v1504
        %v1506 = vrot.slane %v1383, 1
        %v1507 = vsel %vm1439, %v1501, %v1506
        %v1508 = vrot.slane %v1384, 1
        %v1509 = vsel %vm1439, %v1504, %v1508
        %v1510 = vrot.slane %v1385, 1
        %v1511 = vrot.slane %v1387, 1
        %v1512 = vsel %vm1439, %v1510, %v1511
        %v1513 = vrot.slane %v1386, 1
        %v1514 = vrot.slane %v1388, 1
        %v1515 = vsel %vm1439, %v1513, %v1514
        %v1516 = vrot.slane %v1389, 1
        %v1517 = vsel %vm1439, %v1511, %v1516
        %v1518 = vrot.slane %v1390, 1
        %v1519 = vsel %vm1439, %v1514, %v1518
        %v1552 = vadd.f32 %v1279, %v1442
        %v1553 = vadd.f32 %v1280, %v1445
        %v1554 = vadd.f32 %v1281, %v1447
        %v1555 = vadd.f32 %v1282, %v1449
        %v1556 = vadd.f32 %v1283, %v1452
        %v1557 = vadd.f32 %v1284, %v1455
        %v1558 = vadd.f32 %v1285, %v1457
        %v1559 = vadd.f32 %v1286, %v1459
        %v1560 = vadd.f32 %v1287, %v1462
        %v1561 = vadd.f32 %v1288, %v1465
        %v1562 = vadd.f32 %v1289, %v1467
        %v1563 = vadd.f32 %v1290, %v1469
        %v1564 = vadd.f32 %v1291, %v1472
        %v1565 = vadd.f32 %v1292, %v1475
        %v1566 = vadd.f32 %v1293, %v1477
        %v1567 = vadd.f32 %v1294, %v1479
        %v1568 = vadd.f32 %v1295, %v1482
        %v1569 = vadd.f32 %v1296, %v1485
        %v1570 = vadd.f32 %v1297, %v1487
        %v1571 = vadd.f32 %v1298, %v1489
        %v1572 = vadd.f32 %v1299, %v1492
        %v1573 = vadd.f32 %v1300, %v1495
        %v1574 = vadd.f32 %v1301, %v1497
        %v1575 = vadd.f32 %v1302, %v1499
        %v1576 = vadd.f32 %v1303, %v1502
        %v1577 = vadd.f32 %v1304, %v1505
        %v1578 = vadd.f32 %v1305, %v1507
        %v1579 = vadd.f32 %v1306, %v1509
        %v1580 = vadd.f32 %v1307, %v1512
        %v1581 = vadd.f32 %v1308, %v1515
        %v1582 = vadd.f32 %v1309, %v1517
        %v1583 = vadd.f32 %v1310, %v1519
        %v1584 = vld [vmem:[#allocation2] sm:$0xee]
        %v1585 = vld [vmem:[#allocation2 + $0x18] sm:$0xee]
        %v1586 = vld [vmem:[#allocation2 + $0x30] sm:$0xee]
        %v1587 = vld [vmem:[#allocation2 + $0x48] sm:$0xee]
        %v1588 = vld [vmem:[#allocation2 + $0x60] sm:$0xee]
        %v1589 = vld [vmem:[#allocation2 + $0x78] sm:$0xee]
        %v1590 = vld [vmem:[#allocation2 + $0x90] sm:$0xee]
        %v1591 = vld [vmem:[#allocation2 + $0xa8] sm:$0xee]
        %v1592 = vunpack.c.l.bf16 %v1584
        %v1593 = vunpack.c.h.bf16 %v1584
        %v1594 = vunpack.c.l.bf16 %v1585
        %v1595 = vunpack.c.h.bf16 %v1585
        %v1596 = vunpack.c.l.bf16 %v1586
        %v1597 = vunpack.c.h.bf16 %v1586
        %v1598 = vunpack.c.l.bf16 %v1587
        %v1599 = vunpack.c.h.bf16 %v1587
        %v1600 = vunpack.c.l.bf16 %v1588
        %v1601 = vunpack.c.h.bf16 %v1588
        %v1602 = vunpack.c.l.bf16 %v1589
        %v1603 = vunpack.c.h.bf16 %v1589
        %v1604 = vunpack.c.l.bf16 %v1590
        %v1605 = vunpack.c.h.bf16 %v1590
        %v1606 = vunpack.c.l.bf16 %v1591
        %v1607 = vunpack.c.h.bf16 %v1591
        %v1608 = vlaneseq
        %v1609 = vshrl.u32 %v1608, 7
        %v1610 = vsub.s32 2, %v1609
        %v1611 = vrot.slane %v1186, %v1610
        %v1612 = vlaneseq
        %v1613 = vshrl.u32 %v1612, 7
        %v1614 = vsub.s32 2, %v1613
        %v1615 = vrot.slane %v1187, %v1614
        %v1616 = vmul.f32 %v1592, %v1611
        %v1617 = vmul.f32 %v1593, %v1615
        %v1618 = vmul.f32 %v1209, %v1611
        %v1619 = vmul.f32 %v1210, %v1615
        %v1620 = vmul.f32 %v1319, %v1611
        %v1621 = vmul.f32 %v1320, %v1615
        %v1622 = vmul.f32 %v1594, %v1611
        %v1623 = vmul.f32 %v1595, %v1615
        %v1624 = vmul.f32 %v1213, %v1611
        %v1625 = vmul.f32 %v1214, %v1615
        %v1626 = vmul.f32 %v1321, %v1611
        %v1627 = vmul.f32 %v1322, %v1615
        %v1628 = vmul.f32 %v1596, %v1611
        %v1629 = vmul.f32 %v1597, %v1615
        %v1630 = vmul.f32 %v1217, %v1611
        %v1631 = vmul.f32 %v1218, %v1615
        %v1632 = vmul.f32 %v1323, %v1611
        %v1633 = vmul.f32 %v1324, %v1615
        %v1634 = vmul.f32 %v1598, %v1611
        %v1635 = vmul.f32 %v1599, %v1615
        %v1636 = vmul.f32 %v1221, %v1611
        %v1637 = vmul.f32 %v1222, %v1615
        %v1638 = vmul.f32 %v1325, %v1611
        %v1639 = vmul.f32 %v1326, %v1615
        %v1640 = vmul.f32 %v1600, %v1611
        %v1641 = vmul.f32 %v1601, %v1615
        %v1642 = vmul.f32 %v1225, %v1611
        %v1643 = vmul.f32 %v1226, %v1615
        %v1644 = vmul.f32 %v1327, %v1611
        %v1645 = vmul.f32 %v1328, %v1615
        %v1646 = vmul.f32 %v1602, %v1611
        %v1647 = vmul.f32 %v1603, %v1615
        %v1648 = vmul.f32 %v1229, %v1611
        %v1649 = vmul.f32 %v1230, %v1615
        %v1650 = vmul.f32 %v1329, %v1611
        %v1651 = vmul.f32 %v1330, %v1615
        %v1652 = vmul.f32 %v1604, %v1611
        %v1653 = vmul.f32 %v1605, %v1615
        %v1654 = vmul.f32 %v1233, %v1611
        %v1655 = vmul.f32 %v1234, %v1615
        %v1656 = vmul.f32 %v1331, %v1611
        %v1657 = vmul.f32 %v1332, %v1615
        %v1658 = vmul.f32 %v1606, %v1611
        %v1659 = vmul.f32 %v1607, %v1615
        %v1660 = vmul.f32 %v1237, %v1611
        %v1661 = vmul.f32 %v1238, %v1615
        %v1662 = vmul.f32 %v1333, %v1611
        %v1663 = vmul.f32 %v1334, %v1615
        %vm1712 = vcmask 1045504
        %v1713 = vrot.slane %v1616, 2
        %v1714 = vrot.slane %v1618, 2
        %v1715 = vsel %vm1712, %v1713, %v1714
        %v1716 = vrot.slane %v1617, 2
        %v1717 = vrot.slane %v1619, 2
        %v1718 = vsel %vm1712, %v1716, %v1717
        %v1719 = vrot.slane %v1620, 2
        %v1720 = vsel %vm1712, %v1714, %v1719
        %v1721 = vrot.slane %v1621, 2
        %v1722 = vsel %vm1712, %v1717, %v1721
        %v1723 = vrot.slane %v1622, 2
        %v1724 = vrot.slane %v1624, 2
        %v1725 = vsel %vm1712, %v1723, %v1724
        %v1726 = vrot.slane %v1623, 2
        %v1727 = vrot.slane %v1625, 2
        %v1728 = vsel %vm1712, %v1726, %v1727
        %v1729 = vrot.slane %v1626, 2
        %v1730 = vsel %vm1712, %v1724, %v1729
        %v1731 = vrot.slane %v1627, 2
        %v1732 = vsel %vm1712, %v1727, %v1731
        %v1733 = vrot.slane %v1628, 2
        %v1734 = vrot.slane %v1630, 2
        %v1735 = vsel %vm1712, %v1733, %v1734
        %v1736 = vrot.slane %v1629, 2
        %v1737 = vrot.slane %v1631, 2
        %v1738 = vsel %vm1712, %v1736, %v1737
        %v1739 = vrot.slane %v1632, 2
        %v1740 = vsel %vm1712, %v1734, %v1739
        %v1741 = vrot.slane %v1633, 2
        %v1742 = vsel %vm1712, %v1737, %v1741
        %v1743 = vrot.slane %v1634, 2
        %v1744 = vrot.slane %v1636, 2
        %v1745 = vsel %vm1712, %v1743, %v1744
        %v1746 = vrot.slane %v1635, 2
        %v1747 = vrot.slane %v1637, 2
        %v1748 = vsel %vm1712, %v1746, %v1747
        %v1749 = vrot.slane %v1638, 2
        %v1750 = vsel %vm1712, %v1744, %v1749
        %v1751 = vrot.slane %v1639, 2
        %v1752 = vsel %vm1712, %v1747, %v1751
        %v1753 = vrot.slane %v1640, 2
        %v1754 = vrot.slane %v1642, 2
        %v1755 = vsel %vm1712, %v1753, %v1754
        %v1756 = vrot.slane %v1641, 2
        %v1757 = vrot.slane %v1643, 2
        %v1758 = vsel %vm1712, %v1756, %v1757
        %v1759 = vrot.slane %v1644, 2
        %v1760 = vsel %vm1712, %v1754, %v1759
        %v1761 = vrot.slane %v1645, 2
        %v1762 = vsel %vm1712, %v1757, %v1761
        %v1763 = vrot.slane %v1646, 2
        %v1764 = vrot.slane %v1648, 2
        %v1765 = vsel %vm1712, %v1763, %v1764
        %v1766 = vrot.slane %v1647, 2
        %v1767 = vrot.slane %v1649, 2
        %v1768 = vsel %vm1712, %v1766, %v1767
        %v1769 = vrot.slane %v1650, 2
        %v1770 = vsel %vm1712, %v1764, %v1769
        %v1771 = vrot.slane %v1651, 2
        %v1772 = vsel %vm1712, %v1767, %v1771
        %v1773 = vrot.slane %v1652, 2
        %v1774 = vrot.slane %v1654, 2
        %v1775 = vsel %vm1712, %v1773, %v1774
        %v1776 = vrot.slane %v1653, 2
        %v1777 = vrot.slane %v1655, 2
        %v1778 = vsel %vm1712, %v1776, %v1777
        %v1779 = vrot.slane %v1656, 2
        %v1780 = vsel %vm1712, %v1774, %v1779
        %v1781 = vrot.slane %v1657, 2
        %v1782 = vsel %vm1712, %v1777, %v1781
        %v1783 = vrot.slane %v1658, 2
        %v1784 = vrot.slane %v1660, 2
        %v1785 = vsel %vm1712, %v1783, %v1784
        %v1786 = vrot.slane %v1659, 2
        %v1787 = vrot.slane %v1661, 2
        %v1788 = vsel %vm1712, %v1786, %v1787
        %v1789 = vrot.slane %v1662, 2
        %v1790 = vsel %vm1712, %v1784, %v1789
        %v1791 = vrot.slane %v1663, 2
        %v1792 = vsel %vm1712, %v1787, %v1791
        %v1825 = vadd.f32 %v1552, %v1715
        %v1826 = vadd.f32 %v1553, %v1718
        %v1827 = vadd.f32 %v1554, %v1720
        %v1828 = vadd.f32 %v1555, %v1722
        %v1829 = vadd.f32 %v1556, %v1725
        %v1830 = vadd.f32 %v1557, %v1728
        %v1831 = vadd.f32 %v1558, %v1730
        %v1832 = vadd.f32 %v1559, %v1732
        %v1833 = vadd.f32 %v1560, %v1735
        %v1834 = vadd.f32 %v1561, %v1738
        %v1835 = vadd.f32 %v1562, %v1740
        %v1836 = vadd.f32 %v1563, %v1742
        %v1837 = vadd.f32 %v1564, %v1745
        %v1838 = vadd.f32 %v1565, %v1748
        %v1839 = vadd.f32 %v1566, %v1750
        %v1840 = vadd.f32 %v1567, %v1752
        %v1841 = vadd.f32 %v1568, %v1755
        %v1842 = vadd.f32 %v1569, %v1758
        %v1843 = vadd.f32 %v1570, %v1760
        %v1844 = vadd.f32 %v1571, %v1762
        %v1845 = vadd.f32 %v1572, %v1765
        %v1846 = vadd.f32 %v1573, %v1768
        %v1847 = vadd.f32 %v1574, %v1770
        %v1848 = vadd.f32 %v1575, %v1772
        %v1849 = vadd.f32 %v1576, %v1775
        %v1850 = vadd.f32 %v1577, %v1778
        %v1851 = vadd.f32 %v1578, %v1780
        %v1852 = vadd.f32 %v1579, %v1782
        %v1853 = vadd.f32 %v1580, %v1785
        %v1854 = vadd.f32 %v1581, %v1788
        %v1855 = vadd.f32 %v1582, %v1790
        %v1856 = vadd.f32 %v1583, %v1792
        %s1857 = scalar_lea.vmem [#allocation2], 24
        %v1858 = vld [vmem:[%s1857] sm:$0xff]
        %v1859 = vld [vmem:[%s1857 + $0x8] sm:$0xff]
        %v1860 = vld [vmem:[%s1857 + $0x18] sm:$0xff]
        %v1861 = vld [vmem:[%s1857 + $0x20] sm:$0xff]
        %v1862 = vld [vmem:[%s1857 + $0x30] sm:$0xff]
        %v1863 = vld [vmem:[%s1857 + $0x38] sm:$0xff]
        %v1864 = vld [vmem:[%s1857 + $0x48] sm:$0xff]
        %v1865 = vld [vmem:[%s1857 + $0x50] sm:$0xff]
        %v1866 = vld [vmem:[%s1857 + $0x60] sm:$0xff]
        %v1867 = vld [vmem:[%s1857 + $0x68] sm:$0xff]
        %v1868 = vld [vmem:[%s1857 + $0x78] sm:$0xff]
        %v1869 = vld [vmem:[%s1857 + $0x80] sm:$0xff]
        %v1870 = vld [vmem:[%s1857 + $0x90] sm:$0xff]
        %v1871 = vld [vmem:[%s1857 + $0x98] sm:$0xff]
        %v1872 = vld [vmem:[%s1857 + $0xa8] sm:$0xff]
        %v1873 = vld [vmem:[%s1857 + $0xb0] sm:$0xff]
        %v1874 = vunpack.c.l.bf16 %v1858
        %v1875 = vunpack.c.h.bf16 %v1858
        %v1876 = vunpack.c.l.bf16 %v1859
        %v1877 = vunpack.c.h.bf16 %v1859
        %v1878 = vunpack.c.l.bf16 %v1860
        %v1879 = vunpack.c.h.bf16 %v1860
        %v1880 = vunpack.c.l.bf16 %v1861
        %v1881 = vunpack.c.h.bf16 %v1861
        %v1882 = vunpack.c.l.bf16 %v1862
        %v1883 = vunpack.c.h.bf16 %v1862
        %v1884 = vunpack.c.l.bf16 %v1863
        %v1885 = vunpack.c.h.bf16 %v1863
        %v1886 = vunpack.c.l.bf16 %v1864
        %v1887 = vunpack.c.h.bf16 %v1864
        %v1888 = vunpack.c.l.bf16 %v1865
        %v1889 = vunpack.c.h.bf16 %v1865
        %v1890 = vunpack.c.l.bf16 %v1866
        %v1891 = vunpack.c.h.bf16 %v1866
        %v1892 = vunpack.c.l.bf16 %v1867
        %v1893 = vunpack.c.h.bf16 %v1867
        %v1894 = vunpack.c.l.bf16 %v1868
        %v1895 = vunpack.c.h.bf16 %v1868
        %v1896 = vunpack.c.l.bf16 %v1869
        %v1897 = vunpack.c.h.bf16 %v1869
        %v1898 = vunpack.c.l.bf16 %v1870
        %v1899 = vunpack.c.h.bf16 %v1870
        %v1900 = vunpack.c.l.bf16 %v1871
        %v1901 = vunpack.c.h.bf16 %v1871
        %v1902 = vunpack.c.l.bf16 %v1872
        %v1903 = vunpack.c.h.bf16 %v1872
        %v1904 = vunpack.c.l.bf16 %v1873
        %v1905 = vunpack.c.h.bf16 %v1873
        %v1906 = vlaneseq
        %v1907 = vshrl.u32 %v1906, 7
        %v1908 = vsub.s32 3, %v1907
        %v1909 = vrot.slane %v1186, %v1908
        %v1910 = vlaneseq
        %v1911 = vshrl.u32 %v1910, 7
        %v1912 = vsub.s32 3, %v1911
        %v1913 = vrot.slane %v1187, %v1912
        %v1914 = vmul.f32 %v1874, %v1909
        %v1915 = vmul.f32 %v1875, %v1913
        %v1916 = vmul.f32 %v1876, %v1909
        %v1917 = vmul.f32 %v1877, %v1913
        %v1918 = vmul.f32 %v1878, %v1909
        %v1919 = vmul.f32 %v1879, %v1913
        %v1920 = vmul.f32 %v1880, %v1909
        %v1921 = vmul.f32 %v1881, %v1913
        %v1922 = vmul.f32 %v1882, %v1909
        %v1923 = vmul.f32 %v1883, %v1913
        %v1924 = vmul.f32 %v1884, %v1909
        %v1925 = vmul.f32 %v1885, %v1913
        %v1926 = vmul.f32 %v1886, %v1909
        %v1927 = vmul.f32 %v1887, %v1913
        %v1928 = vmul.f32 %v1888, %v1909
        %v1929 = vmul.f32 %v1889, %v1913
        %v1930 = vmul.f32 %v1890, %v1909
        %v1931 = vmul.f32 %v1891, %v1913
        %v1932 = vmul.f32 %v1892, %v1909
        %v1933 = vmul.f32 %v1893, %v1913
        %v1934 = vmul.f32 %v1894, %v1909
        %v1935 = vmul.f32 %v1895, %v1913
        %v1936 = vmul.f32 %v1896, %v1909
        %v1937 = vmul.f32 %v1897, %v1913
        %v1938 = vmul.f32 %v1898, %v1909
        %v1939 = vmul.f32 %v1899, %v1913
        %v1940 = vmul.f32 %v1900, %v1909
        %v1941 = vmul.f32 %v1901, %v1913
        %v1942 = vmul.f32 %v1902, %v1909
        %v1943 = vmul.f32 %v1903, %v1913
        %v1944 = vmul.f32 %v1904, %v1909
        %v1945 = vmul.f32 %v1905, %v1913
        %v1946 = vadd.f32 %v1825, %v1914
        %v1947 = vadd.f32 %v1826, %v1915
        %v1948 = vadd.f32 %v1827, %v1916
        %v1949 = vadd.f32 %v1828, %v1917
        %v1950 = vadd.f32 %v1829, %v1918
        %v1951 = vadd.f32 %v1830, %v1919
        %v1952 = vadd.f32 %v1831, %v1920
        %v1953 = vadd.f32 %v1832, %v1921
        %v1954 = vadd.f32 %v1833, %v1922
        %v1955 = vadd.f32 %v1834, %v1923
        %v1956 = vadd.f32 %v1835, %v1924
        %v1957 = vadd.f32 %v1836, %v1925
        %v1958 = vadd.f32 %v1837, %v1926
        %v1959 = vadd.f32 %v1838, %v1927
        %v1960 = vadd.f32 %v1839, %v1928
        %v1961 = vadd.f32 %v1840, %v1929
        %v1962 = vadd.f32 %v1841, %v1930
        %v1963 = vadd.f32 %v1842, %v1931
        %v1964 = vadd.f32 %v1843, %v1932
        %v1965 = vadd.f32 %v1844, %v1933
        %v1966 = vadd.f32 %v1845, %v1934
        %v1967 = vadd.f32 %v1846, %v1935
        %v1968 = vadd.f32 %v1847, %v1936
        %v1969 = vadd.f32 %v1848, %v1937
        %v1970 = vadd.f32 %v1849, %v1938
        %v1971 = vadd.f32 %v1850, %v1939
        %v1972 = vadd.f32 %v1851, %v1940
        %v1973 = vadd.f32 %v1852, %v1941
        %v1974 = vadd.f32 %v1853, %v1942
        %v1975 = vadd.f32 %v1854, %v1943
        %v1976 = vadd.f32 %v1855, %v1944
        %v1977 = vadd.f32 %v1856, %v1945
        %v1978 = vld [vmem:[%s1857 + $0x10] sm:$0x11]
        %v1979 = vld [vmem:[%s1857 + $0x28] sm:$0x11]
        %v1980 = vld [vmem:[%s1857 + $0x40] sm:$0x11]
        %v1981 = vld [vmem:[%s1857 + $0x58] sm:$0x11]
        %v1982 = vld [vmem:[%s1857 + $0x70] sm:$0x11]
        %v1983 = vld [vmem:[%s1857 + $0x88] sm:$0x11]
        %v1984 = vld [vmem:[%s1857 + $0xa0] sm:$0x11]
        %v1985 = vld [vmem:[%s1857 + $0xb8] sm:$0x11]
        %v1986 = vunpack.c.l.bf16 %v1978
        %v1987 = vunpack.c.h.bf16 %v1978
        %v1988 = vunpack.c.l.bf16 %v1979
        %v1989 = vunpack.c.h.bf16 %v1979
        %v1990 = vunpack.c.l.bf16 %v1980
        %v1991 = vunpack.c.h.bf16 %v1980
        %v1992 = vunpack.c.l.bf16 %v1981
        %v1993 = vunpack.c.h.bf16 %v1981
        %v1994 = vunpack.c.l.bf16 %v1982
        %v1995 = vunpack.c.h.bf16 %v1982
        %v1996 = vunpack.c.l.bf16 %v1983
        %v1997 = vunpack.c.h.bf16 %v1983
        %v1998 = vunpack.c.l.bf16 %v1984
        %v1999 = vunpack.c.h.bf16 %v1984
        %v2000 = vunpack.c.l.bf16 %v1985
        %v2001 = vunpack.c.h.bf16 %v1985
        %v2002 = vlaneseq
        %v2003 = vshrl.u32 %v2002, 7
        %v2004 = vsub.s32 4, %v2003
        %v2005 = vrot.slane %v1186, %v2004
        %v2006 = vlaneseq
        %v2007 = vshrl.u32 %v2006, 7
        %v2008 = vsub.s32 4, %v2007
        %v2009 = vrot.slane %v1187, %v2008
        %v2010 = vmul.f32 %v1874, %v2005
        %v2011 = vmul.f32 %v1875, %v2009
        %v2012 = vmul.f32 %v1876, %v2005
        %v2013 = vmul.f32 %v1877, %v2009
        %v2014 = vmul.f32 %v1986, %v2005
        %v2015 = vmul.f32 %v1987, %v2009
        %v2016 = vmul.f32 %v1878, %v2005
        %v2017 = vmul.f32 %v1879, %v2009
        %v2018 = vmul.f32 %v1880, %v2005
        %v2019 = vmul.f32 %v1881, %v2009
        %v2020 = vmul.f32 %v1988, %v2005
        %v2021 = vmul.f32 %v1989, %v2009
        %v2022 = vmul.f32 %v1882, %v2005
        %v2023 = vmul.f32 %v1883, %v2009
        %v2024 = vmul.f32 %v1884, %v2005
        %v2025 = vmul.f32 %v1885, %v2009
        %v2026 = vmul.f32 %v1990, %v2005
        %v2027 = vmul.f32 %v1991, %v2009
        %v2028 = vmul.f32 %v1886, %v2005
        %v2029 = vmul.f32 %v1887, %v2009
        %v2030 = vmul.f32 %v1888, %v2005
        %v2031 = vmul.f32 %v1889, %v2009
        %v2032 = vmul.f32 %v1992, %v2005
        %v2033 = vmul.f32 %v1993, %v2009
        %v2034 = vmul.f32 %v1890, %v2005
        %v2035 = vmul.f32 %v1891, %v2009
        %v2036 = vmul.f32 %v1892, %v2005
        %v2037 = vmul.f32 %v1893, %v2009
        %v2038 = vmul.f32 %v1994, %v2005
        %v2039 = vmul.f32 %v1995, %v2009
        %v2040 = vmul.f32 %v1894, %v2005
        %v2041 = vmul.f32 %v1895, %v2009
        %v2042 = vmul.f32 %v1896, %v2005
        %v2043 = vmul.f32 %v1897, %v2009
        %v2044 = vmul.f32 %v1996, %v2005
        %v2045 = vmul.f32 %v1997, %v2009
        %v2046 = vmul.f32 %v1898, %v2005
        %v2047 = vmul.f32 %v1899, %v2009
        %v2048 = vmul.f32 %v1900, %v2005
        %v2049 = vmul.f32 %v1901, %v2009
        %v2050 = vmul.f32 %v1998, %v2005
        %v2051 = vmul.f32 %v1999, %v2009
        %v2052 = vmul.f32 %v1902, %v2005
        %v2053 = vmul.f32 %v1903, %v2009
        %v2054 = vmul.f32 %v1904, %v2005
        %v2055 = vmul.f32 %v1905, %v2009
        %v2056 = vmul.f32 %v2000, %v2005
        %v2057 = vmul.f32 %v2001, %v2009
        %v2106 = vrot.slane %v2010, 1
        %v2107 = vrot.slane %v2012, 1
        %v2108 = vsel %vm1439, %v2106, %v2107
        %v2109 = vrot.slane %v2011, 1
        %v2110 = vrot.slane %v2013, 1
        %v2111 = vsel %vm1439, %v2109, %v2110
        %v2112 = vrot.slane %v2014, 1
        %v2113 = vsel %vm1439, %v2107, %v2112
        %v2114 = vrot.slane %v2015, 1
        %v2115 = vsel %vm1439, %v2110, %v2114
        %v2116 = vrot.slane %v2016, 1
        %v2117 = vrot.slane %v2018, 1
        %v2118 = vsel %vm1439, %v2116, %v2117
        %v2119 = vrot.slane %v2017, 1
        %v2120 = vrot.slane %v2019, 1
        %v2121 = vsel %vm1439, %v2119, %v2120
        %v2122 = vrot.slane %v2020, 1
        %v2123 = vsel %vm1439, %v2117, %v2122
        %v2124 = vrot.slane %v2021, 1
        %v2125 = vsel %vm1439, %v2120, %v2124
        %v2126 = vrot.slane %v2022, 1
        %v2127 = vrot.slane %v2024, 1
        %v2128 = vsel %vm1439, %v2126, %v2127
        %v2129 = vrot.slane %v2023, 1
        %v2130 = vrot.slane %v2025, 1
        %v2131 = vsel %vm1439, %v2129, %v2130
        %v2132 = vrot.slane %v2026, 1
        %v2133 = vsel %vm1439, %v2127, %v2132
        %v2134 = vrot.slane %v2027, 1
        %v2135 = vsel %vm1439, %v2130, %v2134
        %v2136 = vrot.slane %v2028, 1
        %v2137 = vrot.slane %v2030, 1
        %v2138 = vsel %vm1439, %v2136, %v2137
        %v2139 = vrot.slane %v2029, 1
        %v2140 = vrot.slane %v2031, 1
        %v2141 = vsel %vm1439, %v2139, %v2140
        %v2142 = vrot.slane %v2032, 1
        %v2143 = vsel %vm1439, %v2137, %v2142
        %v2144 = vrot.slane %v2033, 1
        %v2145 = vsel %vm1439, %v2140, %v2144
        %v2146 = vrot.slane %v2034, 1
        %v2147 = vrot.slane %v2036, 1
        %v2148 = vsel %vm1439, %v2146, %v2147
        %v2149 = vrot.slane %v2035, 1
        %v2150 = vrot.slane %v2037, 1
        %v2151 = vsel %vm1439, %v2149, %v2150
        %v2152 = vrot.slane %v2038, 1
        %v2153 = vsel %vm1439, %v2147, %v2152
        %v2154 = vrot.slane %v2039, 1
        %v2155 = vsel %vm1439, %v2150, %v2154
        %v2156 = vrot.slane %v2040, 1
        %v2157 = vrot.slane %v2042, 1
        %v2158 = vsel %vm1439, %v2156, %v2157
        %v2159 = vrot.slane %v2041, 1
        %v2160 = vrot.slane %v2043, 1
        %v2161 = vsel %vm1439, %v2159, %v2160
        %v2162 = vrot.slane %v2044, 1
        %v2163 = vsel %vm1439, %v2157, %v2162
        %v2164 = vrot.slane %v2045, 1
        %v2165 = vsel %vm1439, %v2160, %v2164
        %v2166 = vrot.slane %v2046, 1
        %v2167 = vrot.slane %v2048, 1
        %v2168 = vsel %vm1439, %v2166, %v2167
        %v2169 = vrot.slane %v2047, 1
        %v2170 = vrot.slane %v2049, 1
        %v2171 = vsel %vm1439, %v2169, %v2170
        %v2172 = vrot.slane %v2050, 1
        %v2173 = vsel %vm1439, %v2167, %v2172
        %v2174 = vrot.slane %v2051, 1
        %v2175 = vsel %vm1439, %v2170, %v2174
        %v2176 = vrot.slane %v2052, 1
        %v2177 = vrot.slane %v2054, 1
        %v2178 = vsel %vm1439, %v2176, %v2177
        %v2179 = vrot.slane %v2053, 1
        %v2180 = vrot.slane %v2055, 1
        %v2181 = vsel %vm1439, %v2179, %v2180
        %v2182 = vrot.slane %v2056, 1
        %v2183 = vsel %vm1439, %v2177, %v2182
        %v2184 = vrot.slane %v2057, 1
        %v2185 = vsel %vm1439, %v2180, %v2184
        %v2218 = vadd.f32 %v1946, %v2108
        %v2219 = vadd.f32 %v1947, %v2111
        %v2220 = vadd.f32 %v1948, %v2113
        %v2221 = vadd.f32 %v1949, %v2115
        %v2222 = vadd.f32 %v1950, %v2118
        %v2223 = vadd.f32 %v1951, %v2121
        %v2224 = vadd.f32 %v1952, %v2123
        %v2225 = vadd.f32 %v1953, %v2125
        %v2226 = vadd.f32 %v1954, %v2128
        %v2227 = vadd.f32 %v1955, %v2131
        %v2228 = vadd.f32 %v1956, %v2133
        %v2229 = vadd.f32 %v1957, %v2135
        %v2230 = vadd.f32 %v1958, %v2138
        %v2231 = vadd.f32 %v1959, %v2141
        %v2232 = vadd.f32 %v1960, %v2143
        %v2233 = vadd.f32 %v1961, %v2145
        %v2234 = vadd.f32 %v1962, %v2148
        %v2235 = vadd.f32 %v1963, %v2151
        %v2236 = vadd.f32 %v1964, %v2153
        %v2237 = vadd.f32 %v1965, %v2155
        %v2238 = vadd.f32 %v1966, %v2158
        %v2239 = vadd.f32 %v1967, %v2161
        %v2240 = vadd.f32 %v1968, %v2163
        %v2241 = vadd.f32 %v1969, %v2165
        %v2242 = vadd.f32 %v1970, %v2168
        %v2243 = vadd.f32 %v1971, %v2171
        %v2244 = vadd.f32 %v1972, %v2173
        %v2245 = vadd.f32 %v1973, %v2175
        %v2246 = vadd.f32 %v1974, %v2178
        %v2247 = vadd.f32 %v1975, %v2181
        %v2248 = vadd.f32 %v1976, %v2183
        %v2249 = vadd.f32 %v1977, %v2185
        %v2250 = vld [vmem:[%s1857] sm:$0xee]
        %v2251 = vld [vmem:[%s1857 + $0x18] sm:$0xee]
        %v2252 = vld [vmem:[%s1857 + $0x30] sm:$0xee]
        %v2253 = vld [vmem:[%s1857 + $0x48] sm:$0xee]
        %v2254 = vld [vmem:[%s1857 + $0x60] sm:$0xee]
        %v2255 = vld [vmem:[%s1857 + $0x78] sm:$0xee]
        %v2256 = vld [vmem:[%s1857 + $0x90] sm:$0xee]
        %v2257 = vld [vmem:[%s1857 + $0xa8] sm:$0xee]
        %v2258 = vunpack.c.l.bf16 %v2250
        %v2259 = vunpack.c.h.bf16 %v2250
        %v2260 = vunpack.c.l.bf16 %v2251
        %v2261 = vunpack.c.h.bf16 %v2251
        %v2262 = vunpack.c.l.bf16 %v2252
        %v2263 = vunpack.c.h.bf16 %v2252
        %v2264 = vunpack.c.l.bf16 %v2253
        %v2265 = vunpack.c.h.bf16 %v2253
        %v2266 = vunpack.c.l.bf16 %v2254
        %v2267 = vunpack.c.h.bf16 %v2254
        %v2268 = vunpack.c.l.bf16 %v2255
        %v2269 = vunpack.c.h.bf16 %v2255
        %v2270 = vunpack.c.l.bf16 %v2256
        %v2271 = vunpack.c.h.bf16 %v2256
        %v2272 = vunpack.c.l.bf16 %v2257
        %v2273 = vunpack.c.h.bf16 %v2257
        %v2274 = vlaneseq
        %v2275 = vshrl.u32 %v2274, 7
        %v2276 = vsub.s32 5, %v2275
        %v2277 = vrot.slane %v1186, %v2276
        %v2278 = vlaneseq
        %v2279 = vshrl.u32 %v2278, 7
        %v2280 = vsub.s32 5, %v2279
        %v2281 = vrot.slane %v1187, %v2280
        %v2282 = vmul.f32 %v2258, %v2277
        %v2283 = vmul.f32 %v2259, %v2281
        %v2284 = vmul.f32 %v1876, %v2277
        %v2285 = vmul.f32 %v1877, %v2281
        %v2286 = vmul.f32 %v1986, %v2277
        %v2287 = vmul.f32 %v1987, %v2281
        %v2288 = vmul.f32 %v2260, %v2277
        %v2289 = vmul.f32 %v2261, %v2281
        %v2290 = vmul.f32 %v1880, %v2277
        %v2291 = vmul.f32 %v1881, %v2281
        %v2292 = vmul.f32 %v1988, %v2277
        %v2293 = vmul.f32 %v1989, %v2281
        %v2294 = vmul.f32 %v2262, %v2277
        %v2295 = vmul.f32 %v2263, %v2281
        %v2296 = vmul.f32 %v1884, %v2277
        %v2297 = vmul.f32 %v1885, %v2281
        %v2298 = vmul.f32 %v1990, %v2277
        %v2299 = vmul.f32 %v1991, %v2281
        %v2300 = vmul.f32 %v2264, %v2277
        %v2301 = vmul.f32 %v2265, %v2281
        %v2302 = vmul.f32 %v1888, %v2277
        %v2303 = vmul.f32 %v1889, %v2281
        %v2304 = vmul.f32 %v1992, %v2277
        %v2305 = vmul.f32 %v1993, %v2281
        %v2306 = vmul.f32 %v2266, %v2277
        %v2307 = vmul.f32 %v2267, %v2281
        %v2308 = vmul.f32 %v1892, %v2277
        %v2309 = vmul.f32 %v1893, %v2281
        %v2310 = vmul.f32 %v1994, %v2277
        %v2311 = vmul.f32 %v1995, %v2281
        %v2312 = vmul.f32 %v2268, %v2277
        %v2313 = vmul.f32 %v2269, %v2281
        %v2314 = vmul.f32 %v1896, %v2277
        %v2315 = vmul.f32 %v1897, %v2281
        %v2316 = vmul.f32 %v1996, %v2277
        %v2317 = vmul.f32 %v1997, %v2281
        %v2318 = vmul.f32 %v2270, %v2277
        %v2319 = vmul.f32 %v2271, %v2281
        %v2320 = vmul.f32 %v1900, %v2277
        %v2321 = vmul.f32 %v1901, %v2281
        %v2322 = vmul.f32 %v1998, %v2277
        %v2323 = vmul.f32 %v1999, %v2281
        %v2324 = vmul.f32 %v2272, %v2277
        %v2325 = vmul.f32 %v2273, %v2281
        %v2326 = vmul.f32 %v1904, %v2277
        %v2327 = vmul.f32 %v1905, %v2281
        %v2328 = vmul.f32 %v2000, %v2277
        %v2329 = vmul.f32 %v2001, %v2281
        %v2378 = vrot.slane %v2282, 2
        %v2379 = vrot.slane %v2284, 2
        %v2380 = vsel %vm1712, %v2378, %v2379
        %v2381 = vrot.slane %v2283, 2
        %v2382 = vrot.slane %v2285, 2
        %v2383 = vsel %vm1712, %v2381, %v2382
        %v2384 = vrot.slane %v2286, 2
        %v2385 = vsel %vm1712, %v2379, %v2384
        %v2386 = vrot.slane %v2287, 2
        %v2387 = vsel %vm1712, %v2382, %v2386
        %v2388 = vrot.slane %v2288, 2
        %v2389 = vrot.slane %v2290, 2
        %v2390 = vsel %vm1712, %v2388, %v2389
        %v2391 = vrot.slane %v2289, 2
        %v2392 = vrot.slane %v2291, 2
        %v2393 = vsel %vm1712, %v2391, %v2392
        %v2394 = vrot.slane %v2292, 2
        %v2395 = vsel %vm1712, %v2389, %v2394
        %v2396 = vrot.slane %v2293, 2
        %v2397 = vsel %vm1712, %v2392, %v2396
        %v2398 = vrot.slane %v2294, 2
        %v2399 = vrot.slane %v2296, 2
        %v2400 = vsel %vm1712, %v2398, %v2399
        %v2401 = vrot.slane %v2295, 2
        %v2402 = vrot.slane %v2297, 2
        %v2403 = vsel %vm1712, %v2401, %v2402
        %v2404 = vrot.slane %v2298, 2
        %v2405 = vsel %vm1712, %v2399, %v2404
        %v2406 = vrot.slane %v2299, 2
        %v2407 = vsel %vm1712, %v2402, %v2406
        %v2408 = vrot.slane %v2300, 2
        %v2409 = vrot.slane %v2302, 2
        %v2410 = vsel %vm1712, %v2408, %v2409
        %v2411 = vrot.slane %v2301, 2
        %v2412 = vrot.slane %v2303, 2
        %v2413 = vsel %vm1712, %v2411, %v2412
        %v2414 = vrot.slane %v2304, 2
        %v2415 = vsel %vm1712, %v2409, %v2414
        %v2416 = vrot.slane %v2305, 2
        %v2417 = vsel %vm1712, %v2412, %v2416
        %v2418 = vrot.slane %v2306, 2
        %v2419 = vrot.slane %v2308, 2
        %v2420 = vsel %vm1712, %v2418, %v2419
        %v2421 = vrot.slane %v2307, 2
        %v2422 = vrot.slane %v2309, 2
        %v2423 = vsel %vm1712, %v2421, %v2422
        %v2424 = vrot.slane %v2310, 2
        %v2425 = vsel %vm1712, %v2419, %v2424
        %v2426 = vrot.slane %v2311, 2
        %v2427 = vsel %vm1712, %v2422, %v2426
        %v2428 = vrot.slane %v2312, 2
        %v2429 = vrot.slane %v2314, 2
        %v2430 = vsel %vm1712, %v2428, %v2429
        %v2431 = vrot.slane %v2313, 2
        %v2432 = vrot.slane %v2315, 2
        %v2433 = vsel %vm1712, %v2431, %v2432
        %v2434 = vrot.slane %v2316, 2
        %v2435 = vsel %vm1712, %v2429, %v2434
        %v2436 = vrot.slane %v2317, 2
        %v2437 = vsel %vm1712, %v2432, %v2436
        %v2438 = vrot.slane %v2318, 2
        %v2439 = vrot.slane %v2320, 2
        %v2440 = vsel %vm1712, %v2438, %v2439
        %v2441 = vrot.slane %v2319, 2
        %v2442 = vrot.slane %v2321, 2
        %v2443 = vsel %vm1712, %v2441, %v2442
        %v2444 = vrot.slane %v2322, 2
        %v2445 = vsel %vm1712, %v2439, %v2444
        %v2446 = vrot.slane %v2323, 2
        %v2447 = vsel %vm1712, %v2442, %v2446
        %v2448 = vrot.slane %v2324, 2
        %v2449 = vrot.slane %v2326, 2
        %v2450 = vsel %vm1712, %v2448, %v2449
        %v2451 = vrot.slane %v2325, 2
        %v2452 = vrot.slane %v2327, 2
        %v2453 = vsel %vm1712, %v2451, %v2452
        %v2454 = vrot.slane %v2328, 2
        %v2455 = vsel %vm1712, %v2449, %v2454
        %v2456 = vrot.slane %v2329, 2
        %v2457 = vsel %vm1712, %v2452, %v2456
        %v2490 = vadd.f32 %v2218, %v2380
        %v2491 = vadd.f32 %v2219, %v2383
        %v2492 = vadd.f32 %v2220, %v2385
        %v2493 = vadd.f32 %v2221, %v2387
        %v2494 = vadd.f32 %v2222, %v2390
        %v2495 = vadd.f32 %v2223, %v2393
        %v2496 = vadd.f32 %v2224, %v2395
        %v2497 = vadd.f32 %v2225, %v2397
        %v2498 = vadd.f32 %v2226, %v2400
        %v2499 = vadd.f32 %v2227, %v2403
        %v2500 = vadd.f32 %v2228, %v2405
        %v2501 = vadd.f32 %v2229, %v2407
        %v2502 = vadd.f32 %v2230, %v2410
        %v2503 = vadd.f32 %v2231, %v2413
        %v2504 = vadd.f32 %v2232, %v2415
        %v2505 = vadd.f32 %v2233, %v2417
        %v2506 = vadd.f32 %v2234, %v2420
        %v2507 = vadd.f32 %v2235, %v2423
        %v2508 = vadd.f32 %v2236, %v2425
        %v2509 = vadd.f32 %v2237, %v2427
        %v2510 = vadd.f32 %v2238, %v2430
        %v2511 = vadd.f32 %v2239, %v2433
        %v2512 = vadd.f32 %v2240, %v2435
        %v2513 = vadd.f32 %v2241, %v2437
        %v2514 = vadd.f32 %v2242, %v2440
        %v2515 = vadd.f32 %v2243, %v2443
        %v2516 = vadd.f32 %v2244, %v2445
        %v2517 = vadd.f32 %v2245, %v2447
        %v2518 = vadd.f32 %v2246, %v2450
        %v2519 = vadd.f32 %v2247, %v2453
        %v2520 = vadd.f32 %v2248, %v2455
        %v2521 = vadd.f32 %v2249, %v2457
        %s2522 = scalar_lea.vmem [#allocation2], 48
        %v2523 = vld [vmem:[%s2522] sm:$0xff]
        %v2524 = vld [vmem:[%s2522 + $0x8] sm:$0xff]
        %v2525 = vld [vmem:[%s2522 + $0x18] sm:$0xff]
        %v2526 = vld [vmem:[%s2522 + $0x20] sm:$0xff]
        %v2527 = vld [vmem:[%s2522 + $0x30] sm:$0xff]
        %v2528 = vld [vmem:[%s2522 + $0x38] sm:$0xff]
        %v2529 = vld [vmem:[%s2522 + $0x48] sm:$0xff]
        %v2530 = vld [vmem:[%s2522 + $0x50] sm:$0xff]
        %v2531 = vld [vmem:[%s2522 + $0x60] sm:$0xff]
        %v2532 = vld [vmem:[%s2522 + $0x68] sm:$0xff]
        %v2533 = vld [vmem:[%s2522 + $0x78] sm:$0xff]
        %v2534 = vld [vmem:[%s2522 + $0x80] sm:$0xff]
        %v2535 = vld [vmem:[%s2522 + $0x90] sm:$0xff]
        %v2536 = vld [vmem:[%s2522 + $0x98] sm:$0xff]
        %v2537 = vld [vmem:[%s2522 + $0xa8] sm:$0xff]
        %v2538 = vld [vmem:[%s2522 + $0xb0] sm:$0xff]
        %v2539 = vunpack.c.l.bf16 %v2523
        %v2540 = vunpack.c.h.bf16 %v2523
        %v2541 = vunpack.c.l.bf16 %v2524
        %v2542 = vunpack.c.h.bf16 %v2524
        %v2543 = vunpack.c.l.bf16 %v2525
        %v2544 = vunpack.c.h.bf16 %v2525
        %v2545 = vunpack.c.l.bf16 %v2526
        %v2546 = vunpack.c.h.bf16 %v2526
        %v2547 = vunpack.c.l.bf16 %v2527
        %v2548 = vunpack.c.h.bf16 %v2527
        %v2549 = vunpack.c.l.bf16 %v2528
        %v2550 = vunpack.c.h.bf16 %v2528
        %v2551 = vunpack.c.l.bf16 %v2529
        %v2552 = vunpack.c.h.bf16 %v2529
        %v2553 = vunpack.c.l.bf16 %v2530
        %v2554 = vunpack.c.h.bf16 %v2530
        %v2555 = vunpack.c.l.bf16 %v2531
        %v2556 = vunpack.c.h.bf16 %v2531
        %v2557 = vunpack.c.l.bf16 %v2532
        %v2558 = vunpack.c.h.bf16 %v2532
        %v2559 = vunpack.c.l.bf16 %v2533
        %v2560 = vunpack.c.h.bf16 %v2533
        %v2561 = vunpack.c.l.bf16 %v2534
        %v2562 = vunpack.c.h.bf16 %v2534
        %v2563 = vunpack.c.l.bf16 %v2535
        %v2564 = vunpack.c.h.bf16 %v2535
        %v2565 = vunpack.c.l.bf16 %v2536
        %v2566 = vunpack.c.h.bf16 %v2536
        %v2567 = vunpack.c.l.bf16 %v2537
        %v2568 = vunpack.c.h.bf16 %v2537
        %v2569 = vunpack.c.l.bf16 %v2538
        %v2570 = vunpack.c.h.bf16 %v2538
        %v2571 = vlaneseq
        %v2572 = vshrl.u32 %v2571, 7
        %v2573 = vsub.s32 6, %v2572
        %v2574 = vrot.slane %v1186, %v2573
        %v2575 = vlaneseq
        %v2576 = vshrl.u32 %v2575, 7
        %v2577 = vsub.s32 6, %v2576
        %v2578 = vrot.slane %v1187, %v2577
        %v2579 = vmul.f32 %v2539, %v2574
        %v2580 = vmul.f32 %v2540, %v2578
        %v2581 = vmul.f32 %v2541, %v2574
        %v2582 = vmul.f32 %v2542, %v2578
        %v2583 = vmul.f32 %v2543, %v2574
        %v2584 = vmul.f32 %v2544, %v2578
        %v2585 = vmul.f32 %v2545, %v2574
        %v2586 = vmul.f32 %v2546, %v2578
        %v2587 = vmul.f32 %v2547, %v2574
        %v2588 = vmul.f32 %v2548, %v2578
        %v2589 = vmul.f32 %v2549, %v2574
        %v2590 = vmul.f32 %v2550, %v2578
        %v2591 = vmul.f32 %v2551, %v2574
        %v2592 = vmul.f32 %v2552, %v2578
        %v2593 = vmul.f32 %v2553, %v2574
        %v2594 = vmul.f32 %v2554, %v2578
        %v2595 = vmul.f32 %v2555, %v2574
        %v2596 = vmul.f32 %v2556, %v2578
        %v2597 = vmul.f32 %v2557, %v2574
        %v2598 = vmul.f32 %v2558, %v2578
        %v2599 = vmul.f32 %v2559, %v2574
        %v2600 = vmul.f32 %v2560, %v2578
        %v2601 = vmul.f32 %v2561, %v2574
        %v2602 = vmul.f32 %v2562, %v2578
        %v2603 = vmul.f32 %v2563, %v2574
        %v2604 = vmul.f32 %v2564, %v2578
        %v2605 = vmul.f32 %v2565, %v2574
        %v2606 = vmul.f32 %v2566, %v2578
        %v2607 = vmul.f32 %v2567, %v2574
        %v2608 = vmul.f32 %v2568, %v2578
        %v2609 = vmul.f32 %v2569, %v2574
        %v2610 = vmul.f32 %v2570, %v2578
        %v2611 = vadd.f32 %v2490, %v2579
        %v2612 = vadd.f32 %v2491, %v2580
        %v2613 = vadd.f32 %v2492, %v2581
        %v2614 = vadd.f32 %v2493, %v2582
        %v2615 = vadd.f32 %v2494, %v2583
        %v2616 = vadd.f32 %v2495, %v2584
        %v2617 = vadd.f32 %v2496, %v2585
        %v2618 = vadd.f32 %v2497, %v2586
        %v2619 = vadd.f32 %v2498, %v2587
        %v2620 = vadd.f32 %v2499, %v2588
        %v2621 = vadd.f32 %v2500, %v2589
        %v2622 = vadd.f32 %v2501, %v2590
        %v2623 = vadd.f32 %v2502, %v2591
        %v2624 = vadd.f32 %v2503, %v2592
        %v2625 = vadd.f32 %v2504, %v2593
        %v2626 = vadd.f32 %v2505, %v2594
        %v2627 = vadd.f32 %v2506, %v2595
        %v2628 = vadd.f32 %v2507, %v2596
        %v2629 = vadd.f32 %v2508, %v2597
        %v2630 = vadd.f32 %v2509, %v2598
        %v2631 = vadd.f32 %v2510, %v2599
        %v2632 = vadd.f32 %v2511, %v2600
        %v2633 = vadd.f32 %v2512, %v2601
        %v2634 = vadd.f32 %v2513, %v2602
        %v2635 = vadd.f32 %v2514, %v2603
        %v2636 = vadd.f32 %v2515, %v2604
        %v2637 = vadd.f32 %v2516, %v2605
        %v2638 = vadd.f32 %v2517, %v2606
        %v2639 = vadd.f32 %v2518, %v2607
        %v2640 = vadd.f32 %v2519, %v2608
        %v2641 = vadd.f32 %v2520, %v2609
        %v2642 = vadd.f32 %v2521, %v2610
        %v2643 = vld [vmem:[%s2522 + $0x10] sm:$0x11]
        %v2644 = vld [vmem:[%s2522 + $0x28] sm:$0x11]
        %v2645 = vld [vmem:[%s2522 + $0x40] sm:$0x11]
        %v2646 = vld [vmem:[%s2522 + $0x58] sm:$0x11]
        %v2647 = vld [vmem:[%s2522 + $0x70] sm:$0x11]
        %v2648 = vld [vmem:[%s2522 + $0x88] sm:$0x11]
        %v2649 = vld [vmem:[%s2522 + $0xa0] sm:$0x11]
        %v2650 = vld [vmem:[%s2522 + $0xb8] sm:$0x11]
        %v2651 = vunpack.c.l.bf16 %v2643
        %v2652 = vunpack.c.h.bf16 %v2643
        %v2653 = vunpack.c.l.bf16 %v2644
        %v2654 = vunpack.c.h.bf16 %v2644
        %v2655 = vunpack.c.l.bf16 %v2645
        %v2656 = vunpack.c.h.bf16 %v2645
        %v2657 = vunpack.c.l.bf16 %v2646
        %v2658 = vunpack.c.h.bf16 %v2646
        %v2659 = vunpack.c.l.bf16 %v2647
        %v2660 = vunpack.c.h.bf16 %v2647
        %v2661 = vunpack.c.l.bf16 %v2648
        %v2662 = vunpack.c.h.bf16 %v2648
        %v2663 = vunpack.c.l.bf16 %v2649
        %v2664 = vunpack.c.h.bf16 %v2649
        %v2665 = vunpack.c.l.bf16 %v2650
        %v2666 = vunpack.c.h.bf16 %v2650
        %v2667 = vlaneseq
        %v2668 = vshrl.u32 %v2667, 7
        %v2669 = vsub.s32 7, %v2668
        %v2670 = vrot.slane %v1186, %v2669
        %v2671 = vlaneseq
        %v2672 = vshrl.u32 %v2671, 7
        %v2673 = vsub.s32 7, %v2672
        %v2674 = vrot.slane %v1187, %v2673
        %v2675 = vmul.f32 %v2539, %v2670
        %v2676 = vmul.f32 %v2540, %v2674
        %v2677 = vmul.f32 %v2541, %v2670
        %v2678 = vmul.f32 %v2542, %v2674
        %v2679 = vmul.f32 %v2651, %v2670
        %v2680 = vmul.f32 %v2652, %v2674
        %v2681 = vmul.f32 %v2543, %v2670
        %v2682 = vmul.f32 %v2544, %v2674
        %v2683 = vmul.f32 %v2545, %v2670
        %v2684 = vmul.f32 %v2546, %v2674
        %v2685 = vmul.f32 %v2653, %v2670
        %v2686 = vmul.f32 %v2654, %v2674
        %v2687 = vmul.f32 %v2547, %v2670
        %v2688 = vmul.f32 %v2548, %v2674
        %v2689 = vmul.f32 %v2549, %v2670
        %v2690 = vmul.f32 %v2550, %v2674
        %v2691 = vmul.f32 %v2655, %v2670
        %v2692 = vmul.f32 %v2656, %v2674
        %v2693 = vmul.f32 %v2551, %v2670
        %v2694 = vmul.f32 %v2552, %v2674
        %v2695 = vmul.f32 %v2553, %v2670
        %v2696 = vmul.f32 %v2554, %v2674
        %v2697 = vmul.f32 %v2657, %v2670
        %v2698 = vmul.f32 %v2658, %v2674
        %v2699 = vmul.f32 %v2555, %v2670
        %v2700 = vmul.f32 %v2556, %v2674
        %v2701 = vmul.f32 %v2557, %v2670
        %v2702 = vmul.f32 %v2558, %v2674
        %v2703 = vmul.f32 %v2659, %v2670
        %v2704 = vmul.f32 %v2660, %v2674
        %v2705 = vmul.f32 %v2559, %v2670
        %v2706 = vmul.f32 %v2560, %v2674
        %v2707 = vmul.f32 %v2561, %v2670
        %v2708 = vmul.f32 %v2562, %v2674
        %v2709 = vmul.f32 %v2661, %v2670
        %v2710 = vmul.f32 %v2662, %v2674
        %v2711 = vmul.f32 %v2563, %v2670
        %v2712 = vmul.f32 %v2564, %v2674
        %v2713 = vmul.f32 %v2565, %v2670
        %v2714 = vmul.f32 %v2566, %v2674
        %v2715 = vmul.f32 %v2663, %v2670
        %v2716 = vmul.f32 %v2664, %v2674
        %v2717 = vmul.f32 %v2567, %v2670
        %v2718 = vmul.f32 %v2568, %v2674
        %v2719 = vmul.f32 %v2569, %v2670
        %v2720 = vmul.f32 %v2570, %v2674
        %v2721 = vmul.f32 %v2665, %v2670
        %v2722 = vmul.f32 %v2666, %v2674
        %v2771 = vrot.slane %v2675, 1
        %v2772 = vrot.slane %v2677, 1
        %v2773 = vsel %vm1439, %v2771, %v2772
        %v2774 = vrot.slane %v2676, 1
        %v2775 = vrot.slane %v2678, 1
        %v2776 = vsel %vm1439, %v2774, %v2775
        %v2777 = vrot.slane %v2679, 1
        %v2778 = vsel %vm1439, %v2772, %v2777
        %v2779 = vrot.slane %v2680, 1
        %v2780 = vsel %vm1439, %v2775, %v2779
        %v2781 = vrot.slane %v2681, 1
        %v2782 = vrot.slane %v2683, 1
        %v2783 = vsel %vm1439, %v2781, %v2782
        %v2784 = vrot.slane %v2682, 1
        %v2785 = vrot.slane %v2684, 1
        %v2786 = vsel %vm1439, %v2784, %v2785
        %v2787 = vrot.slane %v2685, 1
        %v2788 = vsel %vm1439, %v2782, %v2787
        %v2789 = vrot.slane %v2686, 1
        %v2790 = vsel %vm1439, %v2785, %v2789
        %v2791 = vrot.slane %v2687, 1
        %v2792 = vrot.slane %v2689, 1
        %v2793 = vsel %vm1439, %v2791, %v2792
        %v2794 = vrot.slane %v2688, 1
        %v2795 = vrot.slane %v2690, 1
        %v2796 = vsel %vm1439, %v2794, %v2795
        %v2797 = vrot.slane %v2691, 1
        %v2798 = vsel %vm1439, %v2792, %v2797
        %v2799 = vrot.slane %v2692, 1
        %v2800 = vsel %vm1439, %v2795, %v2799
        %v2801 = vrot.slane %v2693, 1
        %v2802 = vrot.slane %v2695, 1
        %v2803 = vsel %vm1439, %v2801, %v2802
        %v2804 = vrot.slane %v2694, 1
        %v2805 = vrot.slane %v2696, 1
        %v2806 = vsel %vm1439, %v2804, %v2805
        %v2807 = vrot.slane %v2697, 1
        %v2808 = vsel %vm1439, %v2802, %v2807
        %v2809 = vrot.slane %v2698, 1
        %v2810 = vsel %vm1439, %v2805, %v2809
        %v2811 = vrot.slane %v2699, 1
        %v2812 = vrot.slane %v2701, 1
        %v2813 = vsel %vm1439, %v2811, %v2812
        %v2814 = vrot.slane %v2700, 1
        %v2815 = vrot.slane %v2702, 1
        %v2816 = vsel %vm1439, %v2814, %v2815
        %v2817 = vrot.slane %v2703, 1
        %v2818 = vsel %vm1439, %v2812, %v2817
        %v2819 = vrot.slane %v2704, 1
        %v2820 = vsel %vm1439, %v2815, %v2819
        %v2821 = vrot.slane %v2705, 1
        %v2822 = vrot.slane %v2707, 1
        %v2823 = vsel %vm1439, %v2821, %v2822
        %v2824 = vrot.slane %v2706, 1
        %v2825 = vrot.slane %v2708, 1
        %v2826 = vsel %vm1439, %v2824, %v2825
        %v2827 = vrot.slane %v2709, 1
        %v2828 = vsel %vm1439, %v2822, %v2827
        %v2829 = vrot.slane %v2710, 1
        %v2830 = vsel %vm1439, %v2825, %v2829
        %v2831 = vrot.slane %v2711, 1
        %v2832 = vrot.slane %v2713, 1
        %v2833 = vsel %vm1439, %v2831, %v2832
        %v2834 = vrot.slane %v2712, 1
        %v2835 = vrot.slane %v2714, 1
        %v2836 = vsel %vm1439, %v2834, %v2835
        %v2837 = vrot.slane %v2715, 1
        %v2838 = vsel %vm1439, %v2832, %v2837
        %v2839 = vrot.slane %v2716, 1
        %v2840 = vsel %vm1439, %v2835, %v2839
        %v2841 = vrot.slane %v2717, 1
        %v2842 = vrot.slane %v2719, 1
        %v2843 = vsel %vm1439, %v2841, %v2842
        %v2844 = vrot.slane %v2718, 1
        %v2845 = vrot.slane %v2720, 1
        %v2846 = vsel %vm1439, %v2844, %v2845
        %v2847 = vrot.slane %v2721, 1
        %v2848 = vsel %vm1439, %v2842, %v2847
        %v2849 = vrot.slane %v2722, 1
        %v2850 = vsel %vm1439, %v2845, %v2849
        %v2883 = vadd.f32 %v2611, %v2773
        %v2884 = vadd.f32 %v2612, %v2776
        %v2885 = vadd.f32 %v2613, %v2778
        %v2886 = vadd.f32 %v2614, %v2780
        %v2887 = vadd.f32 %v2615, %v2783
        %v2888 = vadd.f32 %v2616, %v2786
        %v2889 = vadd.f32 %v2617, %v2788
        %v2890 = vadd.f32 %v2618, %v2790
        %v2891 = vadd.f32 %v2619, %v2793
        %v2892 = vadd.f32 %v2620, %v2796
        %v2893 = vadd.f32 %v2621, %v2798
        %v2894 = vadd.f32 %v2622, %v2800
        %v2895 = vadd.f32 %v2623, %v2803
        %v2896 = vadd.f32 %v2624, %v2806
        %v2897 = vadd.f32 %v2625, %v2808
        %v2898 = vadd.f32 %v2626, %v2810
        %v2899 = vadd.f32 %v2627, %v2813
        %v2900 = vadd.f32 %v2628, %v2816
        %v2901 = vadd.f32 %v2629, %v2818
        %v2902 = vadd.f32 %v2630, %v2820
        %v2903 = vadd.f32 %v2631, %v2823
        %v2904 = vadd.f32 %v2632, %v2826
        %v2905 = vadd.f32 %v2633, %v2828
        %v2906 = vadd.f32 %v2634, %v2830
        %v2907 = vadd.f32 %v2635, %v2833
        %v2908 = vadd.f32 %v2636, %v2836
        %v2909 = vadd.f32 %v2637, %v2838
        %v2910 = vadd.f32 %v2638, %v2840
        %v2911 = vadd.f32 %v2639, %v2843
        %v2912 = vadd.f32 %v2640, %v2846
        %v2913 = vadd.f32 %v2641, %v2848
        %v2914 = vadd.f32 %v2642, %v2850
        %v2915 = vld [vmem:[%s2522] sm:$0xee]
        %v2916 = vld [vmem:[%s2522 + $0x18] sm:$0xee]
        %v2917 = vld [vmem:[%s2522 + $0x30] sm:$0xee]
        %v2918 = vld [vmem:[%s2522 + $0x48] sm:$0xee]
        %v2919 = vld [vmem:[%s2522 + $0x60] sm:$0xee]
        %v2920 = vld [vmem:[%s2522 + $0x78] sm:$0xee]
        %v2921 = vld [vmem:[%s2522 + $0x90] sm:$0xee]
        %v2922 = vld [vmem:[%s2522 + $0xa8] sm:$0xee]
        %v2923 = vunpack.c.l.bf16 %v2915
        %v2924 = vunpack.c.h.bf16 %v2915
        %v2925 = vunpack.c.l.bf16 %v2916
        %v2926 = vunpack.c.h.bf16 %v2916
        %v2927 = vunpack.c.l.bf16 %v2917
        %v2928 = vunpack.c.h.bf16 %v2917
        %v2929 = vunpack.c.l.bf16 %v2918
        %v2930 = vunpack.c.h.bf16 %v2918
        %v2931 = vunpack.c.l.bf16 %v2919
        %v2932 = vunpack.c.h.bf16 %v2919
        %v2933 = vunpack.c.l.bf16 %v2920
        %v2934 = vunpack.c.h.bf16 %v2920
        %v2935 = vunpack.c.l.bf16 %v2921
        %v2936 = vunpack.c.h.bf16 %v2921
        %v2937 = vunpack.c.l.bf16 %v2922
        %v2938 = vunpack.c.h.bf16 %v2922
        %v2939 = vlaneseq
        %v2940 = vshrl.u32 %v2939, 7
        %v2941 = vsub.s32 0, %v2940
        %v2942 = vrot.slane %v1188, %v2941
        %v2943 = vlaneseq
        %v2944 = vshrl.u32 %v2943, 7
        %v2945 = vsub.s32 0, %v2944
        %v2946 = vrot.slane %v1189, %v2945
        %v2947 = vmul.f32 %v2923, %v2942
        %v2948 = vmul.f32 %v2924, %v2946
        %v2949 = vmul.f32 %v2541, %v2942
        %v2950 = vmul.f32 %v2542, %v2946
        %v2951 = vmul.f32 %v2651, %v2942
        %v2952 = vmul.f32 %v2652, %v2946
        %v2953 = vmul.f32 %v2925, %v2942
        %v2954 = vmul.f32 %v2926, %v2946
        %v2955 = vmul.f32 %v2545, %v2942
        %v2956 = vmul.f32 %v2546, %v2946
        %v2957 = vmul.f32 %v2653, %v2942
        %v2958 = vmul.f32 %v2654, %v2946
        %v2959 = vmul.f32 %v2927, %v2942
        %v2960 = vmul.f32 %v2928, %v2946
        %v2961 = vmul.f32 %v2549, %v2942
        %v2962 = vmul.f32 %v2550, %v2946
        %v2963 = vmul.f32 %v2655, %v2942
        %v2964 = vmul.f32 %v2656, %v2946
        %v2965 = vmul.f32 %v2929, %v2942
        %v2966 = vmul.f32 %v2930, %v2946
        %v2967 = vmul.f32 %v2553, %v2942
        %v2968 = vmul.f32 %v2554, %v2946
        %v2969 = vmul.f32 %v2657, %v2942
        %v2970 = vmul.f32 %v2658, %v2946
        %v2971 = vmul.f32 %v2931, %v2942
        %v2972 = vmul.f32 %v2932, %v2946
        %v2973 = vmul.f32 %v2557, %v2942
        %v2974 = vmul.f32 %v2558, %v2946
        %v2975 = vmul.f32 %v2659, %v2942
        %v2976 = vmul.f32 %v2660, %v2946
        %v2977 = vmul.f32 %v2933, %v2942
        %v2978 = vmul.f32 %v2934, %v2946
        %v2979 = vmul.f32 %v2561, %v2942
        %v2980 = vmul.f32 %v2562, %v2946
        %v2981 = vmul.f32 %v2661, %v2942
        %v2982 = vmul.f32 %v2662, %v2946
        %v2983 = vmul.f32 %v2935, %v2942
        %v2984 = vmul.f32 %v2936, %v2946
        %v2985 = vmul.f32 %v2565, %v2942
        %v2986 = vmul.f32 %v2566, %v2946
        %v2987 = vmul.f32 %v2663, %v2942
        %v2988 = vmul.f32 %v2664, %v2946
        %v2989 = vmul.f32 %v2937, %v2942
        %v2990 = vmul.f32 %v2938, %v2946
        %v2991 = vmul.f32 %v2569, %v2942
        %v2992 = vmul.f32 %v2570, %v2946
        %v2993 = vmul.f32 %v2665, %v2942
        %v2994 = vmul.f32 %v2666, %v2946
        %v3043 = vrot.slane %v2947, 2
        %v3044 = vrot.slane %v2949, 2
        %v3045 = vsel %vm1712, %v3043, %v3044
        %v3046 = vrot.slane %v2948, 2
        %v3047 = vrot.slane %v2950, 2
        %v3048 = vsel %vm1712, %v3046, %v3047
        %v3049 = vrot.slane %v2951, 2
        %v3050 = vsel %vm1712, %v3044, %v3049
        %v3051 = vrot.slane %v2952, 2
        %v3052 = vsel %vm1712, %v3047, %v3051
        %v3053 = vrot.slane %v2953, 2
        %v3054 = vrot.slane %v2955, 2
        %v3055 = vsel %vm1712, %v3053, %v3054
        %v3056 = vrot.slane %v2954, 2
        %v3057 = vrot.slane %v2956, 2
        %v3058 = vsel %vm1712, %v3056, %v3057
        %v3059 = vrot.slane %v2957, 2
        %v3060 = vsel %vm1712, %v3054, %v3059
        %v3061 = vrot.slane %v2958, 2
        %v3062 = vsel %vm1712, %v3057, %v3061
        %v3063 = vrot.slane %v2959, 2
        %v3064 = vrot.slane %v2961, 2
        %v3065 = vsel %vm1712, %v3063, %v3064
        %v3066 = vrot.slane %v2960, 2
        %v3067 = vrot.slane %v2962, 2
        %v3068 = vsel %vm1712, %v3066, %v3067
        %v3069 = vrot.slane %v2963, 2
        %v3070 = vsel %vm1712, %v3064, %v3069
        %v3071 = vrot.slane %v2964, 2
        %v3072 = vsel %vm1712, %v3067, %v3071
        %v3073 = vrot.slane %v2965, 2
        %v3074 = vrot.slane %v2967, 2
        %v3075 = vsel %vm1712, %v3073, %v3074
        %v3076 = vrot.slane %v2966, 2
        %v3077 = vrot.slane %v2968, 2
        %v3078 = vsel %vm1712, %v3076, %v3077
        %v3079 = vrot.slane %v2969, 2
        %v3080 = vsel %vm1712, %v3074, %v3079
        %v3081 = vrot.slane %v2970, 2
        %v3082 = vsel %vm1712, %v3077, %v3081
        %v3083 = vrot.slane %v2971, 2
        %v3084 = vrot.slane %v2973, 2
        %v3085 = vsel %vm1712, %v3083, %v3084
        %v3086 = vrot.slane %v2972, 2
        %v3087 = vrot.slane %v2974, 2
        %v3088 = vsel %vm1712, %v3086, %v3087
        %v3089 = vrot.slane %v2975, 2
        %v3090 = vsel %vm1712, %v3084, %v3089
        %v3091 = vrot.slane %v2976, 2
        %v3092 = vsel %vm1712, %v3087, %v3091
        %v3093 = vrot.slane %v2977, 2
        %v3094 = vrot.slane %v2979, 2
        %v3095 = vsel %vm1712, %v3093, %v3094
        %v3096 = vrot.slane %v2978, 2
        %v3097 = vrot.slane %v2980, 2
        %v3098 = vsel %vm1712, %v3096, %v3097
        %v3099 = vrot.slane %v2981, 2
        %v3100 = vsel %vm1712, %v3094, %v3099
        %v3101 = vrot.slane %v2982, 2
        %v3102 = vsel %vm1712, %v3097, %v3101
        %v3103 = vrot.slane %v2983, 2
        %v3104 = vrot.slane %v2985, 2
        %v3105 = vsel %vm1712, %v3103, %v3104
        %v3106 = vrot.slane %v2984, 2
        %v3107 = vrot.slane %v2986, 2
        %v3108 = vsel %vm1712, %v3106, %v3107
        %v3109 = vrot.slane %v2987, 2
        %v3110 = vsel %vm1712, %v3104, %v3109
        %v3111 = vrot.slane %v2988, 2
        %v3112 = vsel %vm1712, %v3107, %v3111
        %v3113 = vrot.slane %v2989, 2
        %v3114 = vrot.slane %v2991, 2
        %v3115 = vsel %vm1712, %v3113, %v3114
        %v3116 = vrot.slane %v2990, 2
        %v3117 = vrot.slane %v2992, 2
        %v3118 = vsel %vm1712, %v3116, %v3117
        %v3119 = vrot.slane %v2993, 2
        %v3120 = vsel %vm1712, %v3114, %v3119
        %v3121 = vrot.slane %v2994, 2
        %v3122 = vsel %vm1712, %v3117, %v3121
        %v3155 = vadd.f32 %v2883, %v3045
        %v3156 = vadd.f32 %v2884, %v3048
        %v3157 = vadd.f32 %v2885, %v3050
        %v3158 = vadd.f32 %v2886, %v3052
        %v3159 = vadd.f32 %v2887, %v3055
        %v3160 = vadd.f32 %v2888, %v3058
        %v3161 = vadd.f32 %v2889, %v3060
        %v3162 = vadd.f32 %v2890, %v3062
        %v3163 = vadd.f32 %v2891, %v3065
        %v3164 = vadd.f32 %v2892, %v3068
        %v3165 = vadd.f32 %v2893, %v3070
        %v3166 = vadd.f32 %v2894, %v3072
        %v3167 = vadd.f32 %v2895, %v3075
        %v3168 = vadd.f32 %v2896, %v3078
        %v3169 = vadd.f32 %v2897, %v3080
        %v3170 = vadd.f32 %v2898, %v3082
        %v3171 = vadd.f32 %v2899, %v3085
        %v3172 = vadd.f32 %v2900, %v3088
        %v3173 = vadd.f32 %v2901, %v3090
        %v3174 = vadd.f32 %v2902, %v3092
        %v3175 = vadd.f32 %v2903, %v3095
        %v3176 = vadd.f32 %v2904, %v3098
        %v3177 = vadd.f32 %v2905, %v3100
        %v3178 = vadd.f32 %v2906, %v3102
        %v3179 = vadd.f32 %v2907, %v3105
        %v3180 = vadd.f32 %v2908, %v3108
        %v3181 = vadd.f32 %v2909, %v3110
        %v3182 = vadd.f32 %v2910, %v3112
        %v3183 = vadd.f32 %v2911, %v3115
        %v3184 = vadd.f32 %v2912, %v3118
        %v3185 = vadd.f32 %v2913, %v3120
        %v3186 = vadd.f32 %v2914, %v3122
        %v3188 = vlaneseq
        %v3189 = vshrl.u32 %v3188, 7
        %v3190 = vsub.s32 0, %v3189
        %v3191 = vrot.slane %v1190, %v3190
        %v3192 = vlaneseq
        %v3193 = vshrl.u32 %v3192, 7
        %v3194 = vsub.s32 1, %v3193
        %v3195 = vrot.slane %v1190, %v3194
        %v3198 = vadd.f32 %v3155, %v3191
        %v3199 = vadd.f32 %v3156, %v3195
        %v3200 = vadd.f32 %v3157, %v3191
        %v3201 = vadd.f32 %v3158, %v3195
        %v3202 = vadd.f32 %v3159, %v3191
        %v3203 = vadd.f32 %v3160, %v3195
        %v3204 = vadd.f32 %v3161, %v3191
        %v3205 = vadd.f32 %v3162, %v3195
        %v3206 = vadd.f32 %v3163, %v3191
        %v3207 = vadd.f32 %v3164, %v3195
        %v3208 = vadd.f32 %v3165, %v3191
        %v3209 = vadd.f32 %v3166, %v3195
        %v3210 = vadd.f32 %v3167, %v3191
        %v3211 = vadd.f32 %v3168, %v3195
        %v3212 = vadd.f32 %v3169, %v3191
        %v3213 = vadd.f32 %v3170, %v3195
        %v3214 = vadd.f32 %v3171, %v3191
        %v3215 = vadd.f32 %v3172, %v3195
        %v3216 = vadd.f32 %v3173, %v3191
        %v3217 = vadd.f32 %v3174, %v3195
        %v3218 = vadd.f32 %v3175, %v3191
        %v3219 = vadd.f32 %v3176, %v3195
        %v3220 = vadd.f32 %v3177, %v3191
        %v3221 = vadd.f32 %v3178, %v3195
        %v3222 = vadd.f32 %v3179, %v3191
        %v3223 = vadd.f32 %v3180, %v3195
        %v3224 = vadd.f32 %v3181, %v3191
        %v3225 = vadd.f32 %v3182, %v3195
        %v3226 = vadd.f32 %v3183, %v3191
        %v3227 = vadd.f32 %v3184, %v3195
        %v3228 = vadd.f32 %v3185, %v3191
        %v3229 = vadd.f32 %v3186, %v3195
        %v3230 = vmax.f32 %v3198, 0.0
        %v3231 = vmax.f32 %v3199, 0.0
        %v3232 = vmax.f32 %v3200, 0.0
        %v3233 = vmax.f32 %v3201, 0.0
        %v3234 = vmax.f32 %v3202, 0.0
        %v3235 = vmax.f32 %v3203, 0.0
        %v3236 = vmax.f32 %v3204, 0.0
        %v3237 = vmax.f32 %v3205, 0.0
        %v3238 = vmax.f32 %v3206, 0.0
        %v3239 = vmax.f32 %v3207, 0.0
        %v3240 = vmax.f32 %v3208, 0.0
        %v3241 = vmax.f32 %v3209, 0.0
        %v3242 = vmax.f32 %v3210, 0.0
        %v3243 = vmax.f32 %v3211, 0.0
        %v3244 = vmax.f32 %v3212, 0.0
        %v3245 = vmax.f32 %v3213, 0.0
        %v3246 = vmax.f32 %v3214, 0.0
        %v3247 = vmax.f32 %v3215, 0.0
        %v3248 = vmax.f32 %v3216, 0.0
        %v3249 = vmax.f32 %v3217, 0.0
        %v3250 = vmax.f32 %v3218, 0.0
        %v3251 = vmax.f32 %v3219, 0.0
        %v3252 = vmax.f32 %v3220, 0.0
        %v3253 = vmax.f32 %v3221, 0.0
        %v3254 = vmax.f32 %v3222, 0.0
        %v3255 = vmax.f32 %v3223, 0.0
        %v3256 = vmax.f32 %v3224, 0.0
        %v3257 = vmax.f32 %v3225, 0.0
        %v3258 = vmax.f32 %v3226, 0.0
        %v3259 = vmax.f32 %v3227, 0.0
        %v3260 = vmax.f32 %v3228, 0.0
        %v3261 = vmax.f32 %v3229, 0.0
        %v3262 = vmin.f32 %v3230, 6.0
        %v3263 = vmin.f32 %v3231, 6.0
        %v3264 = vmin.f32 %v3232, 6.0
        %v3265 = vmin.f32 %v3233, 6.0
        %v3266 = vmin.f32 %v3234, 6.0
        %v3267 = vmin.f32 %v3235, 6.0
        %v3268 = vmin.f32 %v3236, 6.0
        %v3269 = vmin.f32 %v3237, 6.0
        %v3270 = vmin.f32 %v3238, 6.0
        %v3271 = vmin.f32 %v3239, 6.0
        %v3272 = vmin.f32 %v3240, 6.0
        %v3273 = vmin.f32 %v3241, 6.0
        %v3274 = vmin.f32 %v3242, 6.0
        %v3275 = vmin.f32 %v3243, 6.0
        %v3276 = vmin.f32 %v3244, 6.0
        %v3277 = vmin.f32 %v3245, 6.0
        %v3278 = vmin.f32 %v3246, 6.0
        %v3279 = vmin.f32 %v3247, 6.0
        %v3280 = vmin.f32 %v3248, 6.0
        %v3281 = vmin.f32 %v3249, 6.0
        %v3282 = vmin.f32 %v3250, 6.0
        %v3283 = vmin.f32 %v3251, 6.0
        %v3284 = vmin.f32 %v3252, 6.0
        %v3285 = vmin.f32 %v3253, 6.0
        %v3286 = vmin.f32 %v3254, 6.0
        %v3287 = vmin.f32 %v3255, 6.0
        %v3288 = vmin.f32 %v3256, 6.0
        %v3289 = vmin.f32 %v3257, 6.0
        %v3290 = vmin.f32 %v3258, 6.0
        %v3291 = vmin.f32 %v3259, 6.0
        %v3292 = vmin.f32 %v3260, 6.0
        %v3293 = vmin.f32 %v3261, 6.0
        %v3294 = vpack.c.bf16 %v3264, %v3262
        %v3295 = vpack.c.bf16 %v3265, %v3263
        %v3296 = vpack.c.bf16 %v3268, %v3266
        %v3297 = vpack.c.bf16 %v3269, %v3267
        %v3298 = vpack.c.bf16 %v3272, %v3270
        %v3299 = vpack.c.bf16 %v3273, %v3271
        %v3300 = vpack.c.bf16 %v3276, %v3274
        %v3301 = vpack.c.bf16 %v3277, %v3275
        %v3302 = vpack.c.bf16 %v3280, %v3278
        %v3303 = vpack.c.bf16 %v3281, %v3279
        %v3304 = vpack.c.bf16 %v3284, %v3282
        %v3305 = vpack.c.bf16 %v3285, %v3283
        %v3306 = vpack.c.bf16 %v3288, %v3286
        %v3307 = vpack.c.bf16 %v3289, %v3287
        %v3308 = vpack.c.bf16 %v3292, %v3290
        %v3309 = vpack.c.bf16 %v3293, %v3291
        %v3310 = vld [vmem:[%s5] sm:$0xf]
        %v3311 = vld [vmem:[%s5 + $0x4] sm:$0xf]
        %v3312 = vld [vmem:[%s5 + $0x8] sm:$0xf]
        %v3313 = vld [vmem:[%s5 + $0xc] sm:$0xf]
        %v3314 = vld [vmem:[%s5 + $0x10] sm:$0xf]
        %v3315 = vld [vmem:[%s5 + $0x14] sm:$0xf]
        %v3316 = vld [vmem:[%s5 + $0x18] sm:$0xf]
        %v3317 = vld [vmem:[%s5 + $0x1c] sm:$0xf]
        %v3318 = vld [vmem:[%s5 + $0x20] sm:$0xf]
        %v3319 = vld [vmem:[%s5 + $0x24] sm:$0xf]
        %v3320 = vld [vmem:[%s5 + $0x28] sm:$0xf]
        %v3321 = vld [vmem:[%s5 + $0x2c] sm:$0xf]
        %v3322 = vld [vmem:[%s5 + $0x30] sm:$0xf]
        %v3323 = vld [vmem:[%s5 + $0x34] sm:$0xf]
        %v3324 = vld [vmem:[%s5 + $0x38] sm:$0xf]
        %v3325 = vld [vmem:[%s5 + $0x3c] sm:$0xf]
        %v3326 = vld [vmem:[%s5 + $0x40] sm:$0xf]
        %v3327 = vld [vmem:[%s5 + $0x44] sm:$0xf]
        %v3328 = vld [vmem:[%s5 + $0x48] sm:$0xf]
        %v3329 = vld [vmem:[%s5 + $0x4c] sm:$0xf]
        %v3330 = vld [vmem:[%s5 + $0x50] sm:$0xf]
        %v3331 = vld [vmem:[%s5 + $0x54] sm:$0xf]
        %v3332 = vld [vmem:[%s5 + $0x58] sm:$0xf]
        %v3333 = vld [vmem:[%s5 + $0x5c] sm:$0xf]
        %v3334 = vld [vmem:[%s6] sm:$0x1]
        %v3336 = vlaneseq
        %v3337 = vshrl.u32 %v3336, 7
        %v3338 = vsub.s32 0, %v3337
        %v3339 = vrot.slane %v3334, %v3338
        %v3365 = vunpack.c.l.b16 %v3310
        %v3366 = vunpack.c.l.b16 %v3311
        %v3367 = vunpack.c.l.b16 %v3312
        %v3368 = vunpack.c.l.b16 %v3313
        %v3369 = vunpack.c.l.b16 %v3314
        %v3370 = vunpack.c.l.b16 %v3315
        %v3371 = vunpack.c.l.b16 %v3316
        %v3372 = vunpack.c.l.b16 %v3317
        %v3373 = vunpack.c.l.b16 %v3318
        %v3374 = vunpack.c.l.b16 %v3319
        %v3375 = vunpack.c.l.b16 %v3320
        %v3376 = vunpack.c.l.b16 %v3321
        %v3377 = vunpack.c.l.b16 %v3322
        %v3378 = vunpack.c.l.b16 %v3323
        %v3379 = vunpack.c.l.b16 %v3324
        %v3380 = vunpack.c.l.b16 %v3325
        %v3381 = vunpack.c.l.b16 %v3326
        %v3382 = vunpack.c.l.b16 %v3327
        %v3383 = vunpack.c.l.b16 %v3328
        %v3384 = vunpack.c.l.b16 %v3329
        %v3385 = vunpack.c.l.b16 %v3330
        %v3386 = vunpack.c.l.b16 %v3331
        %v3387 = vunpack.c.l.b16 %v3332
        %v3388 = vunpack.c.l.b16 %v3333
        %v3389 = vpack.c.b16 %v3366, %v3365
        %v3390 = vpack.c.b16 %v3368, %v3367
        %v3391 = vpack.c.b16 %v3370, %v3369
        %v3392 = vpack.c.b16 %v3372, %v3371
        %v3393 = vpack.c.b16 %v3374, %v3373
        %v3394 = vpack.c.b16 %v3376, %v3375
        %v3395 = vpack.c.b16 %v3378, %v3377
        %v3396 = vpack.c.b16 %v3380, %v3379
        %v3397 = vpack.c.b16 %v3382, %v3381
        %v3398 = vpack.c.b16 %v3384, %v3383
        %v3399 = vpack.c.b16 %v3386, %v3385
        %v3400 = vpack.c.b16 %v3388, %v3387
        %vm3413 = vcmask 523264
        %v3415 = vsel %vm3413, %v3295, 0
        %v3418 = vsel %vm3413, %v3297, 0
        %v3421 = vsel %vm3413, %v3299, 0
        %v3424 = vsel %vm3413, %v3301, 0
        %v3427 = vsel %vm3413, %v3303, 0
        %v3430 = vsel %vm3413, %v3305, 0
        %v3433 = vsel %vm3413, %v3307, 0
        %v3436 = vsel %vm3413, %v3309, 0
        %3438 = vmatprep.subr.bf16.mxu0 0
        %3439 = vmatpush1.bf16.msra.mxu0 %v3396
        %3440 = vmatprep.subr.bf16.mxu0 0
        %3441 = vmatpush1.bf16.msra.mxu0 %v3395
        %3442 = vmatprep.subr.bf16.mxu0 0
        %3443 = vmatpush1.bf16.msra.mxu0 %v3394
        %3444 = vmatprep.subr.bf16.mxu0 0
        %3445 = vmatpush1.bf16.msra.mxu0 %v3393
        %3446 = vmatprep.subr.bf16.mxu0 0
        %3447 = vmatpush1.bf16.msra.mxu0 %v3392
        %3448 = vmatprep.subr.bf16.mxu0 0
        %3449 = vmatpush1.bf16.msra.mxu0 %v3391
        %3450 = vmatprep.subr.bf16.mxu0 0
        %3451 = vmatpush1.bf16.msra.mxu0 %v3390
        %3452 = vmatprep.subr.bf16.mxu0 0
        %3453 = vmatpush1.bf16.msra.mxu0 %v3389
        %3454 = vmatprep.subr.bf16.mxu0 0
        %3455 = vmatpush2.bf16.msra.mxu0 0
        %3456 = vmatprep.subr.bf16.mxu0 0
        %3457 = vmatpush2.bf16.msra.mxu0 0
        %3458 = vmatprep.subr.bf16.mxu0 0
        %3459 = vmatpush2.bf16.msra.mxu0 0
        %3460 = vmatprep.subr.bf16.mxu0 0
        %3461 = vmatpush2.bf16.msra.mxu0 0
        %3462 = vmatprep.subr.bf16.mxu0 0
        %3463 = vmatpush2.bf16.msra.mxu0 %v3400
        %3464 = vmatprep.subr.bf16.mxu0 0
        %3465 = vmatpush2.bf16.msra.mxu0 %v3399
        %3466 = vmatprep.subr.bf16.mxu0 0
        %3467 = vmatpush2.bf16.msra.mxu0 %v3398
        %3468 = vmatprep.subr.bf16.mxu0 0
        %3469 = vmatpush2.bf16.msra.mxu0 %v3397
        %3470 = vmatprep.mubr.bf16.mxu0 %v3415
        %3471 = vmatmul.mubr.bf16.gmra.mxu0 %v3294
        %v3472 = vpop.f32.mrf.mxu0
        %v3473 = vadd.f32 %v3339, %v3472
        %v3474 = vpop.f32.mrf.mxu0
        %v3475 = vpop.f32.mrf.mxu0
        %v3476 = vadd.f32 %v3339, %v3475
        %v3477 = vpop.f32.mrf.mxu0
        %3478 = vmatprep.mubr.bf16.mxu0 %v3418
        %3479 = vmatmul.mubr.bf16.gmra.mxu0 %v3296
        %v3480 = vpop.f32.mrf.mxu0
        %v3481 = vadd.f32 %v3339, %v3480
        %v3482 = vpop.f32.mrf.mxu0
        %v3483 = vpop.f32.mrf.mxu0
        %v3484 = vadd.f32 %v3339, %v3483
        %v3485 = vpop.f32.mrf.mxu0
        %3486 = vmatprep.mubr.bf16.mxu0 %v3421
        %3487 = vmatmul.mubr.bf16.gmra.mxu0 %v3298
        %v3488 = vpop.f32.mrf.mxu0
        %v3489 = vadd.f32 %v3339, %v3488
        %v3490 = vpop.f32.mrf.mxu0
        %v3491 = vpop.f32.mrf.mxu0
        %v3492 = vadd.f32 %v3339, %v3491
        %v3493 = vpop.f32.mrf.mxu0
        %3494 = vmatprep.mubr.bf16.mxu0 %v3424
        %3495 = vmatmul.mubr.bf16.gmra.mxu0 %v3300
        %v3496 = vpop.f32.mrf.mxu0
        %v3497 = vadd.f32 %v3339, %v3496
        %v3498 = vpop.f32.mrf.mxu0
        %v3499 = vpop.f32.mrf.mxu0
        %v3500 = vadd.f32 %v3339, %v3499
        %v3501 = vpop.f32.mrf.mxu0
        %3502 = vmatprep.mubr.bf16.mxu0 %v3427
        %3503 = vmatmul.mubr.bf16.gmra.mxu0 %v3302
        %v3504 = vpop.f32.mrf.mxu0
        %v3505 = vadd.f32 %v3339, %v3504
        %v3506 = vpop.f32.mrf.mxu0
        %v3507 = vpop.f32.mrf.mxu0
        %v3508 = vadd.f32 %v3339, %v3507
        %v3509 = vpop.f32.mrf.mxu0
        %3510 = vmatprep.mubr.bf16.mxu0 %v3430
        %3511 = vmatmul.mubr.bf16.gmra.mxu0 %v3304
        %v3512 = vpop.f32.mrf.mxu0
        %v3513 = vadd.f32 %v3339, %v3512
        %v3514 = vpop.f32.mrf.mxu0
        %v3515 = vpop.f32.mrf.mxu0
        %v3516 = vadd.f32 %v3339, %v3515
        %v3517 = vpop.f32.mrf.mxu0
        %3518 = vmatprep.mubr.bf16.mxu0 %v3433
        %3519 = vmatmul.mubr.bf16.gmra.mxu0 %v3306
        %v3520 = vpop.f32.mrf.mxu0
        %v3521 = vadd.f32 %v3339, %v3520
        %v3522 = vpop.f32.mrf.mxu0
        %v3523 = vpop.f32.mrf.mxu0
        %v3524 = vadd.f32 %v3339, %v3523
        %v3525 = vpop.f32.mrf.mxu0
        %3526 = vmatprep.mubr.bf16.mxu0 %v3436
        %3527 = vmatmul.mubr.bf16.gmra.mxu0 %v3308
        %v3528 = vpop.f32.mrf.mxu0
        %v3529 = vadd.f32 %v3339, %v3528
        %v3530 = vpop.f32.mrf.mxu0
        %v3531 = vpop.f32.mrf.mxu0
        %v3532 = vadd.f32 %v3339, %v3531
        %v3533 = vpop.f32.mrf.mxu0
        %3534 = vdwg.mxu0
        %s3535 = sadd.s32 %s293, 1
        %s3536 = smul.u32 %s3535, 2
        %s3537 = smul.addr %s3536, 4
        %s3538 = scalar_lea.vmem %s290, %s3537
        %v3539 = vld [vmem:[%s3538] sm:$0xf]
        %v3540 = vld [vmem:[%s3538 + $0x4] sm:$0xf]
        %v3541 = vld [vmem:[%s3538 + $0x8] sm:$0xf]
        %v3542 = vld [vmem:[%s3538 + $0xc] sm:$0xf]
        %v3543 = vld [vmem:[%s3538 + $0x10] sm:$0xf]
        %v3544 = vld [vmem:[%s3538 + $0x14] sm:$0xf]
        %v3545 = vld [vmem:[%s3538 + $0x18] sm:$0xf]
        %v3546 = vld [vmem:[%s3538 + $0x1c] sm:$0xf]
        %v3547 = vld [vmem:[%s3538 + $0x20] sm:$0xf]
        %v3548 = vld [vmem:[%s3538 + $0x24] sm:$0xf]
        %v3549 = vld [vmem:[%s3538 + $0x28] sm:$0xf]
        %v3550 = vld [vmem:[%s3538 + $0x2c] sm:$0xf]
        %v3551 = vld [vmem:[%s3538 + $0x30] sm:$0xf]
        %v3552 = vld [vmem:[%s3538 + $0x34] sm:$0xf]
        %v3553 = vld [vmem:[%s3538 + $0x38] sm:$0xf]
        %v3554 = vld [vmem:[%s3538 + $0x3c] sm:$0xf]
        %v3555 = vunpack.c.l.bf16 %v3539
        %v3556 = vunpack.c.l.bf16 %v3540
        %v3557 = vunpack.c.l.bf16 %v3541
        %v3558 = vunpack.c.l.bf16 %v3542
        %v3559 = vunpack.c.l.bf16 %v3543
        %v3560 = vunpack.c.l.bf16 %v3544
        %v3561 = vunpack.c.l.bf16 %v3545
        %v3562 = vunpack.c.l.bf16 %v3546
        %v3563 = vunpack.c.l.bf16 %v3547
        %v3564 = vunpack.c.l.bf16 %v3548
        %v3565 = vunpack.c.l.bf16 %v3549
        %v3566 = vunpack.c.l.bf16 %v3550
        %v3567 = vunpack.c.l.bf16 %v3551
        %v3568 = vunpack.c.l.bf16 %v3552
        %v3569 = vunpack.c.l.bf16 %v3553
        %v3570 = vunpack.c.l.bf16 %v3554
        %v3571 = vadd.f32 %v3473, %v3555
        %v3572 = vadd.f32 %v3476, %v3556
        %v3573 = vadd.f32 %v3481, %v3557
        %v3574 = vadd.f32 %v3484, %v3558
        %v3575 = vadd.f32 %v3489, %v3559
        %v3576 = vadd.f32 %v3492, %v3560
        %v3577 = vadd.f32 %v3497, %v3561
        %v3578 = vadd.f32 %v3500, %v3562
        %v3579 = vadd.f32 %v3505, %v3563
        %v3580 = vadd.f32 %v3508, %v3564
        %v3581 = vadd.f32 %v3513, %v3565
        %v3582 = vadd.f32 %v3516, %v3566
        %v3583 = vadd.f32 %v3521, %v3567
        %v3584 = vadd.f32 %v3524, %v3568
        %v3585 = vadd.f32 %v3529, %v3569
        %v3586 = vadd.f32 %v3532, %v3570
        %3587 = vst.msk [vmem:[%s285] sm:$0xff] %vm403, %v3571
        %3588 = vst.msk [vmem:[%s285 + $0x8] sm:$0xff] %vm403, %v3572
        %3589 = vst.msk [vmem:[%s285 + $0x10] sm:$0xff] %vm403, %v3573
        %3590 = vst.msk [vmem:[%s285 + $0x18] sm:$0xff] %vm403, %v3574
        %3591 = vst.msk [vmem:[%s285 + $0x20] sm:$0xff] %vm403, %v3575
        %3592 = vst.msk [vmem:[%s285 + $0x28] sm:$0xff] %vm403, %v3576
        %3593 = vst.msk [vmem:[%s285 + $0x30] sm:$0xff] %vm403, %v3577
        %3594 = vst.msk [vmem:[%s285 + $0x38] sm:$0xff] %vm403, %v3578
        %3595 = vst.msk [vmem:[%s285 + $0x40] sm:$0xff] %vm403, %v3579
        %3596 = vst.msk [vmem:[%s285 + $0x48] sm:$0xff] %vm403, %v3580
        %3597 = vst.msk [vmem:[%s285 + $0x50] sm:$0xff] %vm403, %v3581
        %3598 = vst.msk [vmem:[%s285 + $0x58] sm:$0xff] %vm403, %v3582
        %3599 = vst.msk [vmem:[%s285 + $0x60] sm:$0xff] %vm403, %v3583
        %3600 = vst.msk [vmem:[%s285 + $0x68] sm:$0xff] %vm403, %v3584
        %3601 = vst.msk [vmem:[%s285 + $0x70] sm:$0xff] %vm403, %v3585
        %3602 = vst.msk [vmem:[%s285 + $0x78] sm:$0xff] %vm403, %v3586
        %s3603 = sand.u32 %s195, 1
        %s3604 = scalar_lea.sflag [#allocation4], %s3603
        %s3605 = sand.u32 %s195, 1
        %s3606 = smul.addr %s3605, 128
        %s3607 = scalar_lea.vmem [#allocation3], %s3606
        // Predicated region
        $region49: #{inverted_residual_forward.1} parent=47 // pred_check
          %p3608 = pneg %p205
        $region50: #{inverted_residual_forward.1} parent=47 // pred_check_branch
          %3610 = sbr.rel (%p3608) target = $region52
        $region51: #{inverted_residual_forward.1} parent=47 // pred_region
          %s3611 = smul.u32 8, %s26
          %s3613 = ssub.s32 2048, 2048
          %3614 = vsyncadd %s3604, %s3613
          %s3615 = smul.addr %s3611, 2
          %s3616 = smul.addr %s25, 32
          %s3617 = sadd.s32 %s3615, %s3616
          %s3618 = smul.addr %s3617, 128
          %s3619 = scalar_lea.hbm %s7, %s3618
          %s3620 = sshll.u32 %s3607, 4
          %s3621 = int_to_ptr.vmem [resolvable:$true] %s3620
          %3626 = dma.vmem_to_hbm [thread:$0]  %s3621, 2048, %s3619, %s3604, 128, 128, 8
        $region52: #{inverted_residual_forward.1} parent=47 // pred_fallthru
          _
      $region48: #{inverted_residual_forward.1} parent=5 // pred_fallthru
        _
      %p3627 = scmp.le.s32.totalorder 2, %s16
      // Predicated region
      $region53: #{inverted_residual_forward.1} parent=5 // pred_check
        %p3628 = pneg %p3627
      $region54: #{inverted_residual_forward.1} parent=5 // pred_check_branch
        %3630 = sbr.rel (%p3628) target = $region56
      $region55: #{inverted_residual_forward.1} parent=5 // pred_region
        %s3631 = ssub.s32 %s16, 2
        // Predicated region
        $region57: #{inverted_residual_forward.1} parent=55 // pred_check
          %p3632 = pneg %p211
        $region58: #{inverted_residual_forward.1} parent=55 // pred_check_branch
          %3634 = sbr.rel (%p3632) target = $region60
        $region59: #{inverted_residual_forward.1} parent=55 // pred_region
          %s3635 = sand.u32 %s196, 1
          %s3636 = scalar_lea.sflag [#allocation4], %s3635
          %s3637 = sand.u32 %s196, 1
          %s3638 = smul.addr %s3637, 128
          %s3639 = scalar_lea.vmem [#allocation3], %s3638
          %3640 = dma.done %s3636, 2048
        $region60: #{inverted_residual_forward.1} parent=55 // pred_fallthru
          _
      $region56: #{inverted_residual_forward.1} parent=5 // pred_fallthru
        _
    $region6: #{inverted_residual_forward.1} parent=1 // loop_footer
      %s20 = sadd.s32 1, %s16
    $region7: #{inverted_residual_forward.1} parent=1 // loop_footer_branch
      %15 = sbr.rel target = $region3
    $region8: #{inverted_residual_forward.1} parent=1 // loop_exit
      _
    %3641 = vsyncpa [#allocation4], 1
    %s3642 = scalar_lea.sflag [#allocation4], 1
    %3643 = vsyncpa %s3642, 1

</llo_original>
